<compile_context>
chip_gen: v5e
topology: v5e:2x2
jax: 0.10.0
libtpu: 0.0.40
codegen_flags: <defaults>
</compile_context>

<pallas_src>
import functools
import math

import jax
import jax.numpy as jnp
from jax.experimental import pallas as pl
from jax.experimental.pallas import tpu as pltpu

# ----------------------------- config -------------------------------------
NUM_LAYERS = 2
D_MODEL = 32
NUM_HEADS = 4
DFF = 64
VOCAB_SIZE = 50
BATCH = 2
SEQ = 8
LN_EPS = 1e-5  # PyTorch nn.LayerNorm default


# ----------------------------- kernel --------------------------------------
def _encoder_kernel(tok_ref, emb_ref, pe_ref,
                    wqkv_ref, bqkv_ref, wo_ref, w1_ref, w2_ref, vec_ref,
                    o_ref, *, num_layers, num_heads, d_model, dff, batch, seq):
    D = d_model
    H = num_heads
    dh = D // H
    N = batch * seq
    Vp = emb_ref.shape[0]

    # ---- embedding gather: single 2-D one-hot matmul (vocab padded) --------
    tok = tok_ref[...]                                           # (N, 1) i32
    vocab_iota = jax.lax.broadcasted_iota(jnp.int32, (N, Vp), 1)
    onehot = (tok == vocab_iota).astype(jnp.float32)             # (N, Vp)
    x = jnp.dot(onehot, emb_ref[...],
                preferred_element_type=jnp.float32)              # (N, D)
    # x = embedding * sqrt(d_model) + positional_encoding (pre-tiled to N rows)
    x = x * math.sqrt(D) + pe_ref[...]
    # Encoder.dropout / MHA / FFN dropouts: identity at inference.

    inv_sqrt_dh = 1.0 / math.sqrt(dh)

    def mdot(a, w):
        # bf16 weights, bf16 MXU push, f32 accumulation; activations stay f32.
        return jnp.dot(a.astype(w.dtype), w,
                       preferred_element_type=jnp.float32)

    def layernorm(t, g, b):
        mu = jnp.mean(t, axis=-1, keepdims=True)
        var = jnp.mean((t - mu) ** 2, axis=-1, keepdims=True)
        return (t - mu) * jax.lax.rsqrt(var + LN_EPS) * g + b

    # Static unroll over layers; all stacked weights stay resident in VMEM.
    for l in range(num_layers):
        # per-layer packed (1, .) vectors (static loads from the ref)
        b_o = vec_ref[l, 0:1, 0:D]
        ln1_g = vec_ref[l, 1:2, 0:D]
        ln1_b = vec_ref[l, 2:3, 0:D]
        b_ff1 = vec_ref[l, 3:4, 0:dff]
        b_ff2 = vec_ref[l, 4:5, 0:D]
        ln2_g = vec_ref[l, 5:6, 0:D]
        ln2_b = vec_ref[l, 6:7, 0:D]

        # ---- multi-head self-attention: head-major weights, per-head
        # output-projection accumulation (no concat, no lane slicing) --------
        attn = jnp.zeros((N, D), jnp.float32)
        for h in range(H):                               # static unroll
            qh = mdot(x, wqkv_ref[l, 0, h]) + bqkv_ref[l, 0, h]   # (N, dh)
            kh = mdot(x, wqkv_ref[l, 1, h]) + bqkv_ref[l, 1, h]
            vh = mdot(x, wqkv_ref[l, 2, h]) + bqkv_ref[l, 2, h]
            # attention only mixes positions within a sequence: split rows
            # back into (B, S, dh) — leading-dim-only reshape (no lane moves).
            qb = qh.reshape(batch, seq, dh)
            kb = kh.reshape(batch, seq, dh)
            vb = vh.reshape(batch, seq, dh)
            s = jnp.einsum('bqd,bkd->bqk', qb, kb,
                           preferred_element_type=jnp.float32) * inv_sqrt_dh
            s = s - jnp.max(s, axis=-1, keepdims=True)
            p = jnp.exp(s)
            p = p * pl.reciprocal(jnp.sum(p, axis=-1, keepdims=True),
                                  approx=True)
            ctx = jnp.einsum('bqk,bkd->bqd', p, vb,
                             preferred_element_type=jnp.float32
                             ).reshape(N, dh)
            attn = attn + mdot(ctx, wo_ref[l, h])                 # (N, D)
        x = layernorm(x + attn + b_o, ln1_g, ln1_b)

        # ---- feed-forward ---------------------------------------------------
        h1 = jnp.maximum(mdot(x, w1_ref[l]) + b_ff1, 0.0)         # (N, DFF)
        x = layernorm(x + mdot(h1, w2_ref[l]) + b_ff2, ln2_g, ln2_b)

    o_ref[...] = x.astype(o_ref.dtype)


# ----------------------------- host-side packing ----------------------------
def pack_encoder_params(layer_params, d_model, num_heads, dff):
    """Transpose PyTorch (out,in) weights to (in,out), split heads onto
    leading axes, stack layers, cast weights to bf16, and pack all per-layer
    vectors into one (L, 8, W) f32 array (8 rows = one (8,128) VMEM tile)."""
    D, H = d_model, num_heads
    dh = D // H
    W = max(D, dff)

    def row(v):
        v = jnp.asarray(v).reshape(-1).astype(jnp.float32)
        return jnp.pad(v, (0, W - v.shape[0]))

    def head_major(w_torch):                # (out=D, in=D) -> (H, D, dh)
        return jnp.transpose(w_torch.T.reshape(D, H, dh), (1, 0, 2))

    wqkv, bqkv, wo, w1, w2, vecs = [], [], [], [], [], []
    for p in layer_params:
        wqkv.append(jnp.stack([head_major(p['wq']), head_major(p['wk']),
                               head_major(p['wv'])], axis=0))     # (3,H,D,dh)
        bqkv.append(jnp.stack([p['bq'].reshape(H, 1, dh),
                               p['bk'].reshape(H, 1, dh),
                               p['bv'].reshape(H, 1, dh)], axis=0))  # (3,H,1,dh)
        wo.append(p['wo'].T.reshape(H, dh, D))                    # (H,dh,D)
        w1.append(p['w1'].T)                                      # (D,DFF)
        w2.append(p['w2'].T)                                      # (DFF,D)
        vecs.append(jnp.stack([
            row(p['bo']), row(p['ln1_g']), row(p['ln1_b']),
            row(p['b1']), row(p['b2']), row(p['ln2_g']), row(p['ln2_b']),
            row(jnp.zeros((W,), jnp.float32)),
        ], axis=0))
    return (jnp.stack(wqkv).astype(jnp.bfloat16),
            jnp.stack(bqkv).astype(jnp.float32),
            jnp.stack(wo).astype(jnp.bfloat16),
            jnp.stack(w1).astype(jnp.bfloat16),
            jnp.stack(w2).astype(jnp.bfloat16),
            jnp.stack(vecs).astype(jnp.float32))


# ----------------------------- wrapper --------------------------------------
def encoder_forward(tokens, emb_pad, pe_rows, packed, *,
                    d_model, num_heads, dff):
    wqkv, bqkv, wo, w1, w2, vecs = packed
    B, S = tokens.shape
    N = B * S
    L = wqkv.shape[0]
    tok2 = tokens.reshape(N, 1).astype(jnp.int32)     # tiny (N,1) i32 column

    args = [tok2, emb_pad, pe_rows, wqkv, bqkv, wo, w1, w2, vecs]
    kernel = functools.partial(_encoder_kernel, num_layers=L,
                               num_heads=num_heads, d_model=d_model, dff=dff,
                               batch=B, seq=S)

    # No grid: single invocation, every operand fully resident in VMEM
    # (no pipeline prologue, no implicit double-buffer allocation).
    # TODO(synk): when scaling D/S/L (esp. v7x's 64 MiB VMEM), move layers
    # onto a streamed grid axis and add a "parallel" row-tile axis over B*S.
    out2d = pl.pallas_call(
        kernel,
        out_shape=jax.ShapeDtypeStruct((N, d_model), jnp.float32),
        in_specs=[pl.BlockSpec(memory_space=pltpu.MemorySpace.VMEM)
                  for _ in args],
        out_specs=pl.BlockSpec(memory_space=pltpu.MemorySpace.VMEM),
    )(*args)
    return out2d.reshape(B, S, d_model)


# ----------------------------- params / init --------------------------------
def sinusoidal_pos_encoding(length, depth):
    # Standard transformer-tutorial positional encoding (sin || cos concat).
    positions = jnp.arange(length, dtype=jnp.float32)[:, None]
    depths = jnp.arange(depth // 2, dtype=jnp.float32)[None, :] / (depth / 2)
    angle_rads = positions * (1.0 / (10000.0 ** depths))
    return jnp.concatenate([jnp.sin(angle_rads), jnp.cos(angle_rads)],
                           axis=-1).astype(jnp.float32)       # (length, depth)


def init_encoder_params(key, *, num_layers, d_model, dff, vocab_size):
    k_emb, k_layers = jax.random.split(key)
    emb_table = (jax.random.normal(k_emb, (vocab_size, d_model)) * 0.02
                 ).astype(jnp.float32)
    layers = []
    for l in range(num_layers):
        ks = jax.random.split(jax.random.fold_in(k_layers, l), 6)
        s = 0.02
        p = dict(   # weights in PyTorch nn.Linear (out, in) convention
            wq=jax.random.normal(ks[0], (d_model, d_model)) * s,
            wk=jax.random.normal(ks[1], (d_model, d_model)) * s,
            wv=jax.random.normal(ks[2], (d_model, d_model)) * s,
            wo=jax.random.normal(ks[3], (d_model, d_model)) * s,
            bq=jnp.zeros((1, d_model)), bk=jnp.zeros((1, d_model)),
            bv=jnp.zeros((1, d_model)), bo=jnp.zeros((1, d_model)),
            ln1_g=jnp.ones((1, d_model)), ln1_b=jnp.zeros((1, d_model)),
            w1=jax.random.normal(ks[4], (dff, d_model)) * s,
            b1=jnp.zeros((1, dff)),
            w2=jax.random.normal(ks[5], (d_model, dff)) * s,
            b2=jnp.zeros((1, d_model)),
            ln2_g=jnp.ones((1, d_model)), ln2_b=jnp.zeros((1, d_model)),
        )
        layers.append({k: v.astype(jnp.float32) for k, v in p.items()})
    return emb_table, layers


# ----------------------------- main -----------------------------------------
if __name__ == "__main__":
    key = jax.random.PRNGKey(0)
    k_tok, k_par = jax.random.split(key)

    tokens = jax.random.randint(k_tok, (BATCH, SEQ), 0, VOCAB_SIZE,
                                dtype=jnp.int32)
    emb_table, layer_params = init_encoder_params(
        k_par, num_layers=NUM_LAYERS, d_model=D_MODEL, dff=DFF,
        vocab_size=VOCAB_SIZE)

    # Vocab padded to a lane-friendly multiple of 64 with exact-zero rows
    # (tokens are always < VOCAB_SIZE, so padded rows are never selected).
    V_PAD = ((VOCAB_SIZE + 63) // 64) * 64
    emb_pad = jnp.zeros((V_PAD, D_MODEL), jnp.float32).at[:VOCAB_SIZE].set(
        emb_table)

    # Positional encoding pre-tiled to the flattened (B*S, D) row layout.
    pe = sinusoidal_pos_encoding(SEQ, D_MODEL)
    pe_rows = jnp.tile(pe, (BATCH, 1))

    packed = pack_encoder_params(layer_params, D_MODEL, NUM_HEADS, DFF)

    out = encoder_forward(tokens, emb_pad, pe_rows, packed,
                          d_model=D_MODEL, num_heads=NUM_HEADS, dff=DFF)
    out = jax.block_until_ready(out)
    assert out.shape == (BATCH, SEQ, D_MODEL) and out.dtype == jnp.float32
    print("KERNEL_OK")
</pallas_src>

<mosaic_0001>
module attributes {stable_mosaic.version = 11 : i64} {
  func.func @_encoder_kernel(%arg0: memref<16x1xi32, #tpu.memory_space<vmem>>, %arg1: memref<64x32xf32, #tpu.memory_space<vmem>>, %arg2: memref<16x32xf32, #tpu.memory_space<vmem>>, %arg3: memref<2x3x4x32x8xbf16, #tpu.memory_space<vmem>>, %arg4: memref<2x3x4x1x8xf32, #tpu.memory_space<vmem>>, %arg5: memref<2x4x8x32xbf16, #tpu.memory_space<vmem>>, %arg6: memref<2x32x64xbf16, #tpu.memory_space<vmem>>, %arg7: memref<2x64x32xbf16, #tpu.memory_space<vmem>>, %arg8: memref<2x8x64xf32, #tpu.memory_space<vmem>>, %arg9: memref<16x32xf32, #tpu.memory_space<vmem>>) attributes {dimension_semantics = [], scalar_prefetch = 0 : i64, scratch_operands = 0 : i64, tpu.core_type = #tpu.core_type<tc>} {
    %c0 = arith.constant 0 : index
    %c0_0 = arith.constant 0 : index
    %0 = vector.load %arg0[%c0, %c0_0] : memref<16x1xi32, #tpu.memory_space<vmem>>, vector<16x1xi32>
    %1 = tpu.iota {dimensions = array<i32: 1>} : vector<16x64xi32>
    %2 = vector.broadcast %0 : vector<16x1xi32> to vector<16x64xi32>
    %3 = arith.cmpi eq, %2, %1 : vector<16x64xi32>
    %4 = arith.extui %3 : vector<16x64xi1> to vector<16x64xi32>
    %5 = arith.sitofp %4 : vector<16x64xi32> to vector<16x64xf32>
    %c0_1 = arith.constant 0 : index
    %c0_2 = arith.constant 0 : index
    %6 = vector.load %arg1[%c0_1, %c0_2] : memref<64x32xf32, #tpu.memory_space<vmem>>, vector<64x32xf32>
    %cst = arith.constant dense<0.000000e+00> : vector<16x32xf32>
    %7 = tpu.matmul %5, %6, %cst {dimension_numbers = #tpu.dot_dimension_numbers<[1], [0], [0], [1], [0, 0, 1, 1], [], []>} : vector<16x64xf32>, vector<64x32xf32>, vector<16x32xf32> -> vector<16x32xf32>
    %cst_3 = arith.constant 5.65685415 : f32
    %8 = vector.broadcast %cst_3 : f32 to vector<16x32xf32>
    %9 = arith.mulf %7, %8 : vector<16x32xf32>
    %c0_4 = arith.constant 0 : index
    %c0_5 = arith.constant 0 : index
    %10 = vector.load %arg2[%c0_4, %c0_5] : memref<16x32xf32, #tpu.memory_space<vmem>>, vector<16x32xf32>
    %11 = arith.addf %9, %10 : vector<16x32xf32>
    %c0_6 = arith.constant 0 : index
    %c0_7 = arith.constant 0 : index
    %c0_8 = arith.constant 0 : index
    %12 = vector.load %arg8[%c0_6, %c0_7, %c0_8] : memref<2x8x64xf32, #tpu.memory_space<vmem>>, vector<1x1x32xf32>
    %13 = vector.shape_cast %12 : vector<1x1x32xf32> to vector<1x32xf32>
    %c0_9 = arith.constant 0 : index
    %c1 = arith.constant 1 : index
    %c0_10 = arith.constant 0 : index
    %14 = vector.load %arg8[%c0_9, %c1, %c0_10] : memref<2x8x64xf32, #tpu.memory_space<vmem>>, vector<1x1x32xf32>
    %15 = vector.shape_cast %14 : vector<1x1x32xf32> to vector<1x32xf32>
    %c0_11 = arith.constant 0 : index
    %c2 = arith.constant 2 : index
    %c0_12 = arith.constant 0 : index
    %16 = vector.load %arg8[%c0_11, %c2, %c0_12] : memref<2x8x64xf32, #tpu.memory_space<vmem>>, vector<1x1x32xf32>
    %17 = vector.shape_cast %16 : vector<1x1x32xf32> to vector<1x32xf32>
    %c0_13 = arith.constant 0 : index
    %c3 = arith.constant 3 : index
    %c0_14 = arith.constant 0 : index
    %18 = vector.load %arg8[%c0_13, %c3, %c0_14] : memref<2x8x64xf32, #tpu.memory_space<vmem>>, vector<1x1x64xf32>
    %19 = vector.shape_cast %18 : vector<1x1x64xf32> to vector<1x64xf32>
    %c0_15 = arith.constant 0 : index
    %c4 = arith.constant 4 : index
    %c0_16 = arith.constant 0 : index
    %20 = vector.load %arg8[%c0_15, %c4, %c0_16] : memref<2x8x64xf32, #tpu.memory_space<vmem>>, vector<1x1x32xf32>
    %21 = vector.shape_cast %20 : vector<1x1x32xf32> to vector<1x32xf32>
    %c0_17 = arith.constant 0 : index
    %c5 = arith.constant 5 : index
    %c0_18 = arith.constant 0 : index
    %22 = vector.load %arg8[%c0_17, %c5, %c0_18] : memref<2x8x64xf32, #tpu.memory_space<vmem>>, vector<1x1x32xf32>
    %23 = vector.shape_cast %22 : vector<1x1x32xf32> to vector<1x32xf32>
    %c0_19 = arith.constant 0 : index
    %c6 = arith.constant 6 : index
    %c0_20 = arith.constant 0 : index
    %24 = vector.load %arg8[%c0_19, %c6, %c0_20] : memref<2x8x64xf32, #tpu.memory_space<vmem>>, vector<1x1x32xf32>
    %25 = vector.shape_cast %24 : vector<1x1x32xf32> to vector<1x32xf32>
    %cst_21 = arith.constant 0.000000e+00 : f32
    %26 = vector.broadcast %cst_21 : f32 to vector<16x32xf32>
    %c0_22 = arith.constant 0 : index
    %c0_23 = arith.constant 0 : index
    %c0_24 = arith.constant 0 : index
    %c0_25 = arith.constant 0 : index
    %c0_26 = arith.constant 0 : index
    %27 = vector.load %arg3[%c0_22, %c0_23, %c0_24, %c0_25, %c0_26] : memref<2x3x4x32x8xbf16, #tpu.memory_space<vmem>>, vector<1x1x1x32x8xbf16>
    %28 = vector.shape_cast %27 : vector<1x1x1x32x8xbf16> to vector<32x8xbf16>
    %29 = arith.truncf %11 : vector<16x32xf32> to vector<16x32xbf16>
    %cst_27 = arith.constant dense<0.000000e+00> : vector<16x8xf32>
    %30 = tpu.matmul %29, %28, %cst_27 {dimension_numbers = #tpu.dot_dimension_numbers<[1], [0], [0], [1], [0, 0, 1, 1], [], []>} : vector<16x32xbf16>, vector<32x8xbf16>, vector<16x8xf32> -> vector<16x8xf32>
    %c0_28 = arith.constant 0 : index
    %c0_29 = arith.constant 0 : index
    %c0_30 = arith.constant 0 : index
    %c0_31 = arith.constant 0 : index
    %c0_32 = arith.constant 0 : index
    %31 = vector.load %arg4[%c0_28, %c0_29, %c0_30, %c0_31, %c0_32] : memref<2x3x4x1x8xf32, #tpu.memory_space<vmem>>, vector<1x1x1x1x8xf32>
    %32 = vector.shape_cast %31 : vector<1x1x1x1x8xf32> to vector<1x8xf32>
    %33 = vector.broadcast %32 : vector<1x8xf32> to vector<16x8xf32>
    %34 = arith.addf %30, %33 : vector<16x8xf32>
    %c0_33 = arith.constant 0 : index
    %c1_34 = arith.constant 1 : index
    %c0_35 = arith.constant 0 : index
    %c0_36 = arith.constant 0 : index
    %c0_37 = arith.constant 0 : index
    %35 = vector.load %arg3[%c0_33, %c1_34, %c0_35, %c0_36, %c0_37] : memref<2x3x4x32x8xbf16, #tpu.memory_space<vmem>>, vector<1x1x1x32x8xbf16>
    %36 = vector.shape_cast %35 : vector<1x1x1x32x8xbf16> to vector<32x8xbf16>
    %37 = arith.truncf %11 : vector<16x32xf32> to vector<16x32xbf16>
    %cst_38 = arith.constant dense<0.000000e+00> : vector<16x8xf32>
    %38 = tpu.matmul %37, %36, %cst_38 {dimension_numbers = #tpu.dot_dimension_numbers<[1], [0], [0], [1], [0, 0, 1, 1], [], []>} : vector<16x32xbf16>, vector<32x8xbf16>, vector<16x8xf32> -> vector<16x8xf32>
    %c0_39 = arith.constant 0 : index
    %c1_40 = arith.constant 1 : index
    %c0_41 = arith.constant 0 : index
    %c0_42 = arith.constant 0 : index
    %c0_43 = arith.constant 0 : index
    %39 = vector.load %arg4[%c0_39, %c1_40, %c0_41, %c0_42, %c0_43] : memref<2x3x4x1x8xf32, #tpu.memory_space<vmem>>, vector<1x1x1x1x8xf32>
    %40 = vector.shape_cast %39 : vector<1x1x1x1x8xf32> to vector<1x8xf32>
    %41 = vector.broadcast %40 : vector<1x8xf32> to vector<16x8xf32>
    %42 = arith.addf %38, %41 : vector<16x8xf32>
    %c0_44 = arith.constant 0 : index
    %c2_45 = arith.constant 2 : index
    %c0_46 = arith.constant 0 : index
    %c0_47 = arith.constant 0 : index
    %c0_48 = arith.constant 0 : index
    %43 = vector.load %arg3[%c0_44, %c2_45, %c0_46, %c0_47, %c0_48] : memref<2x3x4x32x8xbf16, #tpu.memory_space<vmem>>, vector<1x1x1x32x8xbf16>
    %44 = vector.shape_cast %43 : vector<1x1x1x32x8xbf16> to vector<32x8xbf16>
    %45 = arith.truncf %11 : vector<16x32xf32> to vector<16x32xbf16>
    %cst_49 = arith.constant dense<0.000000e+00> : vector<16x8xf32>
    %46 = tpu.matmul %45, %44, %cst_49 {dimension_numbers = #tpu.dot_dimension_numbers<[1], [0], [0], [1], [0, 0, 1, 1], [], []>} : vector<16x32xbf16>, vector<32x8xbf16>, vector<16x8xf32> -> vector<16x8xf32>
    %c0_50 = arith.constant 0 : index
    %c2_51 = arith.constant 2 : index
    %c0_52 = arith.constant 0 : index
    %c0_53 = arith.constant 0 : index
    %c0_54 = arith.constant 0 : index
    %47 = vector.load %arg4[%c0_50, %c2_51, %c0_52, %c0_53, %c0_54] : memref<2x3x4x1x8xf32, #tpu.memory_space<vmem>>, vector<1x1x1x1x8xf32>
    %48 = vector.shape_cast %47 : vector<1x1x1x1x8xf32> to vector<1x8xf32>
    %49 = vector.broadcast %48 : vector<1x8xf32> to vector<16x8xf32>
    %50 = arith.addf %46, %49 : vector<16x8xf32>
    %51 = vector.shape_cast %34 : vector<16x8xf32> to vector<2x8x8xf32>
    %52 = vector.shape_cast %42 : vector<16x8xf32> to vector<2x8x8xf32>
    %53 = vector.shape_cast %50 : vector<16x8xf32> to vector<2x8x8xf32>
    "tpu.trace_start"() <{level = 10 : i32, message = "bqd,bkd->bqk"}> : () -> ()
    %cst_55 = arith.constant dense<0.000000e+00> : vector<2x8x8xf32>
    %54 = tpu.matmul %51, %52, %cst_55 {dimension_numbers = #tpu.dot_dimension_numbers<[2], [2], [1], [1], [0, 0, 0, 1, 1, 1], [0], [0]>} : vector<2x8x8xf32>, vector<2x8x8xf32>, vector<2x8x8xf32> -> vector<2x8x8xf32>
    "tpu.trace_stop"() : () -> ()
    %cst_56 = arith.constant 0.353553385 : f32
    %55 = vector.broadcast %cst_56 : f32 to vector<2x8x8xf32>
    %56 = arith.mulf %54, %55 : vector<2x8x8xf32>
    %cst_57 = arith.constant dense<0xFF800000> : vector<2x8xf32>
    %57 = vector.multi_reduction <maximumf>, %56, %cst_57 [2] : vector<2x8x8xf32> to vector<2x8xf32>
    %58 = vector.shape_cast %57 : vector<2x8xf32> to vector<2x8x1xf32>
    %59 = vector.broadcast %58 : vector<2x8x1xf32> to vector<2x8x8xf32>
    %60 = arith.subf %56, %59 : vector<2x8x8xf32>
    %61 = math.exp %60 : vector<2x8x8xf32>
    %cst_58 = arith.constant dense<0.000000e+00> : vector<2x8xf32>
    %62 = vector.multi_reduction <add>, %61, %cst_58 [2] : vector<2x8x8xf32> to vector<2x8xf32>
    %63 = vector.shape_cast %62 : vector<2x8xf32> to vector<2x8x1xf32>
    %64 = tpu.reciprocal %63 {approx = true} : vector<2x8x1xf32> -> vector<2x8x1xf32>
    %65 = vector.broadcast %64 : vector<2x8x1xf32> to vector<2x8x8xf32>
    %66 = arith.mulf %61, %65 : vector<2x8x8xf32>
    "tpu.trace_start"() <{level = 10 : i32, message = "bqk,bkd->bqd"}> : () -> ()
    %cst_59 = arith.constant dense<0.000000e+00> : vector<2x8x8xf32>
    %67 = tpu.matmul %66, %53, %cst_59 {dimension_numbers = #tpu.dot_dimension_numbers<[2], [1], [1], [2], [0, 0, 0, 1, 1, 2], [0], [0]>} : vector<2x8x8xf32>, vector<2x8x8xf32>, vector<2x8x8xf32> -> vector<2x8x8xf32>
    "tpu.trace_stop"() : () -> ()
    %68 = vector.shape_cast %67 : vector<2x8x8xf32> to vector<16x8xf32>
    %c0_60 = arith.constant 0 : index
    %c0_61 = arith.constant 0 : index
    %c0_62 = arith.constant 0 : index
    %c0_63 = arith.constant 0 : index
    %69 = vector.load %arg5[%c0_60, %c0_61, %c0_62, %c0_63] : memref<2x4x8x32xbf16, #tpu.memory_space<vmem>>, vector<1x1x8x32xbf16>
    %70 = vector.shape_cast %69 : vector<1x1x8x32xbf16> to vector<8x32xbf16>
    %71 = arith.truncf %68 : vector<16x8xf32> to vector<16x8xbf16>
    %cst_64 = arith.constant dense<0.000000e+00> : vector<16x32xf32>
    %72 = tpu.matmul %71, %70, %cst_64 {dimension_numbers = #tpu.dot_dimension_numbers<[1], [0], [0], [1], [0, 0, 1, 1], [], []>} : vector<16x8xbf16>, vector<8x32xbf16>, vector<16x32xf32> -> vector<16x32xf32>
    %73 = arith.addf %26, %72 : vector<16x32xf32>
    %c0_65 = arith.constant 0 : index
    %c0_66 = arith.constant 0 : index
    %c1_67 = arith.constant 1 : index
    %c0_68 = arith.constant 0 : index
    %c0_69 = arith.constant 0 : index
    %74 = vector.load %arg3[%c0_65, %c0_66, %c1_67, %c0_68, %c0_69] : memref<2x3x4x32x8xbf16, #tpu.memory_space<vmem>>, vector<1x1x1x32x8xbf16>
    %75 = vector.shape_cast %74 : vector<1x1x1x32x8xbf16> to vector<32x8xbf16>
    %76 = arith.truncf %11 : vector<16x32xf32> to vector<16x32xbf16>
    %cst_70 = arith.constant dense<0.000000e+00> : vector<16x8xf32>
    %77 = tpu.matmul %76, %75, %cst_70 {dimension_numbers = #tpu.dot_dimension_numbers<[1], [0], [0], [1], [0, 0, 1, 1], [], []>} : vector<16x32xbf16>, vector<32x8xbf16>, vector<16x8xf32> -> vector<16x8xf32>
    %c0_71 = arith.constant 0 : index
    %c0_72 = arith.constant 0 : index
    %c1_73 = arith.constant 1 : index
    %c0_74 = arith.constant 0 : index
    %c0_75 = arith.constant 0 : index
    %78 = vector.load %arg4[%c0_71, %c0_72, %c1_73, %c0_74, %c0_75] : memref<2x3x4x1x8xf32, #tpu.memory_space<vmem>>, vector<1x1x1x1x8xf32>
    %79 = vector.shape_cast %78 : vector<1x1x1x1x8xf32> to vector<1x8xf32>
    %80 = vector.broadcast %79 : vector<1x8xf32> to vector<16x8xf32>
    %81 = arith.addf %77, %80 : vector<16x8xf32>
    %c0_76 = arith.constant 0 : index
    %c1_77 = arith.constant 1 : index
    %c1_78 = arith.constant 1 : index
    %c0_79 = arith.constant 0 : index
    %c0_80 = arith.constant 0 : index
    %82 = vector.load %arg3[%c0_76, %c1_77, %c1_78, %c0_79, %c0_80] : memref<2x3x4x32x8xbf16, #tpu.memory_space<vmem>>, vector<1x1x1x32x8xbf16>
    %83 = vector.shape_cast %82 : vector<1x1x1x32x8xbf16> to vector<32x8xbf16>
    %84 = arith.truncf %11 : vector<16x32xf32> to vector<16x32xbf16>
    %cst_81 = arith.constant dense<0.000000e+00> : vector<16x8xf32>
    %85 = tpu.matmul %84, %83, %cst_81 {dimension_numbers = #tpu.dot_dimension_numbers<[1], [0], [0], [1], [0, 0, 1, 1], [], []>} : vector<16x32xbf16>, vector<32x8xbf16>, vector<16x8xf32> -> vector<16x8xf32>
    %c0_82 = arith.constant 0 : index
    %c1_83 = arith.constant 1 : index
    %c1_84 = arith.constant 1 : index
    %c0_85 = arith.constant 0 : index
    %c0_86 = arith.constant 0 : index
    %86 = vector.load %arg4[%c0_82, %c1_83, %c1_84, %c0_85, %c0_86] : memref<2x3x4x1x8xf32, #tpu.memory_space<vmem>>, vector<1x1x1x1x8xf32>
    %87 = vector.shape_cast %86 : vector<1x1x1x1x8xf32> to vector<1x8xf32>
    %88 = vector.broadcast %87 : vector<1x8xf32> to vector<16x8xf32>
    %89 = arith.addf %85, %88 : vector<16x8xf32>
    %c0_87 = arith.constant 0 : index
    %c2_88 = arith.constant 2 : index
    %c1_89 = arith.constant 1 : index
    %c0_90 = arith.constant 0 : index
    %c0_91 = arith.constant 0 : index
    %90 = vector.load %arg3[%c0_87, %c2_88, %c1_89, %c0_90, %c0_91] : memref<2x3x4x32x8xbf16, #tpu.memory_space<vmem>>, vector<1x1x1x32x8xbf16>
    %91 = vector.shape_cast %90 : vector<1x1x1x32x8xbf16> to vector<32x8xbf16>
    %92 = arith.truncf %11 : vector<16x32xf32> to vector<16x32xbf16>
    %cst_92 = arith.constant dense<0.000000e+00> : vector<16x8xf32>
    %93 = tpu.matmul %92, %91, %cst_92 {dimension_numbers = #tpu.dot_dimension_numbers<[1], [0], [0], [1], [0, 0, 1, 1], [], []>} : vector<16x32xbf16>, vector<32x8xbf16>, vector<16x8xf32> -> vector<16x8xf32>
    %c0_93 = arith.constant 0 : index
    %c2_94 = arith.constant 2 : index
    %c1_95 = arith.constant 1 : index
    %c0_96 = arith.constant 0 : index
    %c0_97 = arith.constant 0 : index
    %94 = vector.load %arg4[%c0_93, %c2_94, %c1_95, %c0_96, %c0_97] : memref<2x3x4x1x8xf32, #tpu.memory_space<vmem>>, vector<1x1x1x1x8xf32>
    %95 = vector.shape_cast %94 : vector<1x1x1x1x8xf32> to vector<1x8xf32>
    %96 = vector.broadcast %95 : vector<1x8xf32> to vector<16x8xf32>
    %97 = arith.addf %93, %96 : vector<16x8xf32>
    %98 = vector.shape_cast %81 : vector<16x8xf32> to vector<2x8x8xf32>
    %99 = vector.shape_cast %89 : vector<16x8xf32> to vector<2x8x8xf32>
    %100 = vector.shape_cast %97 : vector<16x8xf32> to vector<2x8x8xf32>
    "tpu.trace_start"() <{level = 10 : i32, message = "bqd,bkd->bqk"}> : () -> ()
    %cst_98 = arith.constant dense<0.000000e+00> : vector<2x8x8xf32>
    %101 = tpu.matmul %98, %99, %cst_98 {dimension_numbers = #tpu.dot_dimension_numbers<[2], [2], [1], [1], [0, 0, 0, 1, 1, 1], [0], [0]>} : vector<2x8x8xf32>, vector<2x8x8xf32>, vector<2x8x8xf32> -> vector<2x8x8xf32>
    "tpu.trace_stop"() : () -> ()
    %cst_99 = arith.constant 0.353553385 : f32
    %102 = vector.broadcast %cst_99 : f32 to vector<2x8x8xf32>
    %103 = arith.mulf %101, %102 : vector<2x8x8xf32>
    %cst_100 = arith.constant dense<0xFF800000> : vector<2x8xf32>
    %104 = vector.multi_reduction <maximumf>, %103, %cst_100 [2] : vector<2x8x8xf32> to vector<2x8xf32>
    %105 = vector.shape_cast %104 : vector<2x8xf32> to vector<2x8x1xf32>
    %106 = vector.broadcast %105 : vector<2x8x1xf32> to vector<2x8x8xf32>
    %107 = arith.subf %103, %106 : vector<2x8x8xf32>
    %108 = math.exp %107 : vector<2x8x8xf32>
    %cst_101 = arith.constant dense<0.000000e+00> : vector<2x8xf32>
    %109 = vector.multi_reduction <add>, %108, %cst_101 [2] : vector<2x8x8xf32> to vector<2x8xf32>
    %110 = vector.shape_cast %109 : vector<2x8xf32> to vector<2x8x1xf32>
    %111 = tpu.reciprocal %110 {approx = true} : vector<2x8x1xf32> -> vector<2x8x1xf32>
    %112 = vector.broadcast %111 : vector<2x8x1xf32> to vector<2x8x8xf32>
    %113 = arith.mulf %108, %112 : vector<2x8x8xf32>
    "tpu.trace_start"() <{level = 10 : i32, message = "bqk,bkd->bqd"}> : () -> ()
    %cst_102 = arith.constant dense<0.000000e+00> : vector<2x8x8xf32>
    %114 = tpu.matmul %113, %100, %cst_102 {dimension_numbers = #tpu.dot_dimension_numbers<[2], [1], [1], [2], [0, 0, 0, 1, 1, 2], [0], [0]>} : vector<2x8x8xf32>, vector<2x8x8xf32>, vector<2x8x8xf32> -> vector<2x8x8xf32>
    "tpu.trace_stop"() : () -> ()
    %115 = vector.shape_cast %114 : vector<2x8x8xf32> to vector<16x8xf32>
    %c0_103 = arith.constant 0 : index
    %c1_104 = arith.constant 1 : index
    %c0_105 = arith.constant 0 : index
    %c0_106 = arith.constant 0 : index
    %116 = vector.load %arg5[%c0_103, %c1_104, %c0_105, %c0_106] : memref<2x4x8x32xbf16, #tpu.memory_space<vmem>>, vector<1x1x8x32xbf16>
    %117 = vector.shape_cast %116 : vector<1x1x8x32xbf16> to vector<8x32xbf16>
    %118 = arith.truncf %115 : vector<16x8xf32> to vector<16x8xbf16>
    %cst_107 = arith.constant dense<0.000000e+00> : vector<16x32xf32>
    %119 = tpu.matmul %118, %117, %cst_107 {dimension_numbers = #tpu.dot_dimension_numbers<[1], [0], [0], [1], [0, 0, 1, 1], [], []>} : vector<16x8xbf16>, vector<8x32xbf16>, vector<16x32xf32> -> vector<16x32xf32>
    %120 = arith.addf %73, %119 : vector<16x32xf32>
    %c0_108 = arith.constant 0 : index
    %c0_109 = arith.constant 0 : index
    %c2_110 = arith.constant 2 : index
    %c0_111 = arith.constant 0 : index
    %c0_112 = arith.constant 0 : index
    %121 = vector.load %arg3[%c0_108, %c0_109, %c2_110, %c0_111, %c0_112] : memref<2x3x4x32x8xbf16, #tpu.memory_space<vmem>>, vector<1x1x1x32x8xbf16>
    %122 = vector.shape_cast %121 : vector<1x1x1x32x8xbf16> to vector<32x8xbf16>
    %123 = arith.truncf %11 : vector<16x32xf32> to vector<16x32xbf16>
    %cst_113 = arith.constant dense<0.000000e+00> : vector<16x8xf32>
    %124 = tpu.matmul %123, %122, %cst_113 {dimension_numbers = #tpu.dot_dimension_numbers<[1], [0], [0], [1], [0, 0, 1, 1], [], []>} : vector<16x32xbf16>, vector<32x8xbf16>, vector<16x8xf32> -> vector<16x8xf32>
    %c0_114 = arith.constant 0 : index
    %c0_115 = arith.constant 0 : index
    %c2_116 = arith.constant 2 : index
    %c0_117 = arith.constant 0 : index
    %c0_118 = arith.constant 0 : index
    %125 = vector.load %arg4[%c0_114, %c0_115, %c2_116, %c0_117, %c0_118] : memref<2x3x4x1x8xf32, #tpu.memory_space<vmem>>, vector<1x1x1x1x8xf32>
    %126 = vector.shape_cast %125 : vector<1x1x1x1x8xf32> to vector<1x8xf32>
    %127 = vector.broadcast %126 : vector<1x8xf32> to vector<16x8xf32>
    %128 = arith.addf %124, %127 : vector<16x8xf32>
    %c0_119 = arith.constant 0 : index
    %c1_120 = arith.constant 1 : index
    %c2_121 = arith.constant 2 : index
    %c0_122 = arith.constant 0 : index
    %c0_123 = arith.constant 0 : index
    %129 = vector.load %arg3[%c0_119, %c1_120, %c2_121, %c0_122, %c0_123] : memref<2x3x4x32x8xbf16, #tpu.memory_space<vmem>>, vector<1x1x1x32x8xbf16>
    %130 = vector.shape_cast %129 : vector<1x1x1x32x8xbf16> to vector<32x8xbf16>
    %131 = arith.truncf %11 : vector<16x32xf32> to vector<16x32xbf16>
    %cst_124 = arith.constant dense<0.000000e+00> : vector<16x8xf32>
    %132 = tpu.matmul %131, %130, %cst_124 {dimension_numbers = #tpu.dot_dimension_numbers<[1], [0], [0], [1], [0, 0, 1, 1], [], []>} : vector<16x32xbf16>, vector<32x8xbf16>, vector<16x8xf32> -> vector<16x8xf32>
    %c0_125 = arith.constant 0 : index
    %c1_126 = arith.constant 1 : index
    %c2_127 = arith.constant 2 : index
    %c0_128 = arith.constant 0 : index
    %c0_129 = arith.constant 0 : index
    %133 = vector.load %arg4[%c0_125, %c1_126, %c2_127, %c0_128, %c0_129] : memref<2x3x4x1x8xf32, #tpu.memory_space<vmem>>, vector<1x1x1x1x8xf32>
    %134 = vector.shape_cast %133 : vector<1x1x1x1x8xf32> to vector<1x8xf32>
    %135 = vector.broadcast %134 : vector<1x8xf32> to vector<16x8xf32>
    %136 = arith.addf %132, %135 : vector<16x8xf32>
    %c0_130 = arith.constant 0 : index
    %c2_131 = arith.constant 2 : index
    %c2_132 = arith.constant 2 : index
    %c0_133 = arith.constant 0 : index
    %c0_134 = arith.constant 0 : index
    %137 = vector.load %arg3[%c0_130, %c2_131, %c2_132, %c0_133, %c0_134] : memref<2x3x4x32x8xbf16, #tpu.memory_space<vmem>>, vector<1x1x1x32x8xbf16>
    %138 = vector.shape_cast %137 : vector<1x1x1x32x8xbf16> to vector<32x8xbf16>
    %139 = arith.truncf %11 : vector<16x32xf32> to vector<16x32xbf16>
    %cst_135 = arith.constant dense<0.000000e+00> : vector<16x8xf32>
    %140 = tpu.matmul %139, %138, %cst_135 {dimension_numbers = #tpu.dot_dimension_numbers<[1], [0], [0], [1], [0, 0, 1, 1], [], []>} : vector<16x32xbf16>, vector<32x8xbf16>, vector<16x8xf32> -> vector<16x8xf32>
    %c0_136 = arith.constant 0 : index
    %c2_137 = arith.constant 2 : index
    %c2_138 = arith.constant 2 : index
    %c0_139 = arith.constant 0 : index
    %c0_140 = arith.constant 0 : index
    %141 = vector.load %arg4[%c0_136, %c2_137, %c2_138, %c0_139, %c0_140] : memref<2x3x4x1x8xf32, #tpu.memory_space<vmem>>, vector<1x1x1x1x8xf32>
    %142 = vector.shape_cast %141 : vector<1x1x1x1x8xf32> to vector<1x8xf32>
    %143 = vector.broadcast %142 : vector<1x8xf32> to vector<16x8xf32>
    %144 = arith.addf %140, %143 : vector<16x8xf32>
    %145 = vector.shape_cast %128 : vector<16x8xf32> to vector<2x8x8xf32>
    %146 = vector.shape_cast %136 : vector<16x8xf32> to vector<2x8x8xf32>
    %147 = vector.shape_cast %144 : vector<16x8xf32> to vector<2x8x8xf32>
    "tpu.trace_start"() <{level = 10 : i32, message = "bqd,bkd->bqk"}> : () -> ()
    %cst_141 = arith.constant dense<0.000000e+00> : vector<2x8x8xf32>
    %148 = tpu.matmul %145, %146, %cst_141 {dimension_numbers = #tpu.dot_dimension_numbers<[2], [2], [1], [1], [0, 0, 0, 1, 1, 1], [0], [0]>} : vector<2x8x8xf32>, vector<2x8x8xf32>, vector<2x8x8xf32> -> vector<2x8x8xf32>
    "tpu.trace_stop"() : () -> ()
    %cst_142 = arith.constant 0.353553385 : f32
    %149 = vector.broadcast %cst_142 : f32 to vector<2x8x8xf32>
    %150 = arith.mulf %148, %149 : vector<2x8x8xf32>
    %cst_143 = arith.constant dense<0xFF800000> : vector<2x8xf32>
    %151 = vector.multi_reduction <maximumf>, %150, %cst_143 [2] : vector<2x8x8xf32> to vector<2x8xf32>
    %152 = vector.shape_cast %151 : vector<2x8xf32> to vector<2x8x1xf32>
    %153 = vector.broadcast %152 : vector<2x8x1xf32> to vector<2x8x8xf32>
    %154 = arith.subf %150, %153 : vector<2x8x8xf32>
    %155 = math.exp %154 : vector<2x8x8xf32>
    %cst_144 = arith.constant dense<0.000000e+00> : vector<2x8xf32>
    %156 = vector.multi_reduction <add>, %155, %cst_144 [2] : vector<2x8x8xf32> to vector<2x8xf32>
    %157 = vector.shape_cast %156 : vector<2x8xf32> to vector<2x8x1xf32>
    %158 = tpu.reciprocal %157 {approx = true} : vector<2x8x1xf32> -> vector<2x8x1xf32>
    %159 = vector.broadcast %158 : vector<2x8x1xf32> to vector<2x8x8xf32>
    %160 = arith.mulf %155, %159 : vector<2x8x8xf32>
    "tpu.trace_start"() <{level = 10 : i32, message = "bqk,bkd->bqd"}> : () -> ()
    %cst_145 = arith.constant dense<0.000000e+00> : vector<2x8x8xf32>
    %161 = tpu.matmul %160, %147, %cst_145 {dimension_numbers = #tpu.dot_dimension_numbers<[2], [1], [1], [2], [0, 0, 0, 1, 1, 2], [0], [0]>} : vector<2x8x8xf32>, vector<2x8x8xf32>, vector<2x8x8xf32> -> vector<2x8x8xf32>
    "tpu.trace_stop"() : () -> ()
    %162 = vector.shape_cast %161 : vector<2x8x8xf32> to vector<16x8xf32>
    %c0_146 = arith.constant 0 : index
    %c2_147 = arith.constant 2 : index
    %c0_148 = arith.constant 0 : index
    %c0_149 = arith.constant 0 : index
    %163 = vector.load %arg5[%c0_146, %c2_147, %c0_148, %c0_149] : memref<2x4x8x32xbf16, #tpu.memory_space<vmem>>, vector<1x1x8x32xbf16>
    %164 = vector.shape_cast %163 : vector<1x1x8x32xbf16> to vector<8x32xbf16>
    %165 = arith.truncf %162 : vector<16x8xf32> to vector<16x8xbf16>
    %cst_150 = arith.constant dense<0.000000e+00> : vector<16x32xf32>
    %166 = tpu.matmul %165, %164, %cst_150 {dimension_numbers = #tpu.dot_dimension_numbers<[1], [0], [0], [1], [0, 0, 1, 1], [], []>} : vector<16x8xbf16>, vector<8x32xbf16>, vector<16x32xf32> -> vector<16x32xf32>
    %167 = arith.addf %120, %166 : vector<16x32xf32>
    %c0_151 = arith.constant 0 : index
    %c0_152 = arith.constant 0 : index
    %c3_153 = arith.constant 3 : index
    %c0_154 = arith.constant 0 : index
    %c0_155 = arith.constant 0 : index
    %168 = vector.load %arg3[%c0_151, %c0_152, %c3_153, %c0_154, %c0_155] : memref<2x3x4x32x8xbf16, #tpu.memory_space<vmem>>, vector<1x1x1x32x8xbf16>
    %169 = vector.shape_cast %168 : vector<1x1x1x32x8xbf16> to vector<32x8xbf16>
    %170 = arith.truncf %11 : vector<16x32xf32> to vector<16x32xbf16>
    %cst_156 = arith.constant dense<0.000000e+00> : vector<16x8xf32>
    %171 = tpu.matmul %170, %169, %cst_156 {dimension_numbers = #tpu.dot_dimension_numbers<[1], [0], [0], [1], [0, 0, 1, 1], [], []>} : vector<16x32xbf16>, vector<32x8xbf16>, vector<16x8xf32> -> vector<16x8xf32>
    %c0_157 = arith.constant 0 : index
    %c0_158 = arith.constant 0 : index
    %c3_159 = arith.constant 3 : index
    %c0_160 = arith.constant 0 : index
    %c0_161 = arith.constant 0 : index
    %172 = vector.load %arg4[%c0_157, %c0_158, %c3_159, %c0_160, %c0_161] : memref<2x3x4x1x8xf32, #tpu.memory_space<vmem>>, vector<1x1x1x1x8xf32>
    %173 = vector.shape_cast %172 : vector<1x1x1x1x8xf32> to vector<1x8xf32>
    %174 = vector.broadcast %173 : vector<1x8xf32> to vector<16x8xf32>
    %175 = arith.addf %171, %174 : vector<16x8xf32>
    %c0_162 = arith.constant 0 : index
    %c1_163 = arith.constant 1 : index
    %c3_164 = arith.constant 3 : index
    %c0_165 = arith.constant 0 : index
    %c0_166 = arith.constant 0 : index
    %176 = vector.load %arg3[%c0_162, %c1_163, %c3_164, %c0_165, %c0_166] : memref<2x3x4x32x8xbf16, #tpu.memory_space<vmem>>, vector<1x1x1x32x8xbf16>
    %177 = vector.shape_cast %176 : vector<1x1x1x32x8xbf16> to vector<32x8xbf16>
    %178 = arith.truncf %11 : vector<16x32xf32> to vector<16x32xbf16>
    %cst_167 = arith.constant dense<0.000000e+00> : vector<16x8xf32>
    %179 = tpu.matmul %178, %177, %cst_167 {dimension_numbers = #tpu.dot_dimension_numbers<[1], [0], [0], [1], [0, 0, 1, 1], [], []>} : vector<16x32xbf16>, vector<32x8xbf16>, vector<16x8xf32> -> vector<16x8xf32>
    %c0_168 = arith.constant 0 : index
    %c1_169 = arith.constant 1 : index
    %c3_170 = arith.constant 3 : index
    %c0_171 = arith.constant 0 : index
    %c0_172 = arith.constant 0 : index
    %180 = vector.load %arg4[%c0_168, %c1_169, %c3_170, %c0_171, %c0_172] : memref<2x3x4x1x8xf32, #tpu.memory_space<vmem>>, vector<1x1x1x1x8xf32>
    %181 = vector.shape_cast %180 : vector<1x1x1x1x8xf32> to vector<1x8xf32>
    %182 = vector.broadcast %181 : vector<1x8xf32> to vector<16x8xf32>
    %183 = arith.addf %179, %182 : vector<16x8xf32>
    %c0_173 = arith.constant 0 : index
    %c2_174 = arith.constant 2 : index
    %c3_175 = arith.constant 3 : index
    %c0_176 = arith.constant 0 : index
    %c0_177 = arith.constant 0 : index
    %184 = vector.load %arg3[%c0_173, %c2_174, %c3_175, %c0_176, %c0_177] : memref<2x3x4x32x8xbf16, #tpu.memory_space<vmem>>, vector<1x1x1x32x8xbf16>
    %185 = vector.shape_cast %184 : vector<1x1x1x32x8xbf16> to vector<32x8xbf16>
    %186 = arith.truncf %11 : vector<16x32xf32> to vector<16x32xbf16>
    %cst_178 = arith.constant dense<0.000000e+00> : vector<16x8xf32>
    %187 = tpu.matmul %186, %185, %cst_178 {dimension_numbers = #tpu.dot_dimension_numbers<[1], [0], [0], [1], [0, 0, 1, 1], [], []>} : vector<16x32xbf16>, vector<32x8xbf16>, vector<16x8xf32> -> vector<16x8xf32>
    %c0_179 = arith.constant 0 : index
    %c2_180 = arith.constant 2 : index
    %c3_181 = arith.constant 3 : index
    %c0_182 = arith.constant 0 : index
    %c0_183 = arith.constant 0 : index
    %188 = vector.load %arg4[%c0_179, %c2_180, %c3_181, %c0_182, %c0_183] : memref<2x3x4x1x8xf32, #tpu.memory_space<vmem>>, vector<1x1x1x1x8xf32>
    %189 = vector.shape_cast %188 : vector<1x1x1x1x8xf32> to vector<1x8xf32>
    %190 = vector.broadcast %189 : vector<1x8xf32> to vector<16x8xf32>
    %191 = arith.addf %187, %190 : vector<16x8xf32>
    %192 = vector.shape_cast %175 : vector<16x8xf32> to vector<2x8x8xf32>
    %193 = vector.shape_cast %183 : vector<16x8xf32> to vector<2x8x8xf32>
    %194 = vector.shape_cast %191 : vector<16x8xf32> to vector<2x8x8xf32>
    "tpu.trace_start"() <{level = 10 : i32, message = "bqd,bkd->bqk"}> : () -> ()
    %cst_184 = arith.constant dense<0.000000e+00> : vector<2x8x8xf32>
    %195 = tpu.matmul %192, %193, %cst_184 {dimension_numbers = #tpu.dot_dimension_numbers<[2], [2], [1], [1], [0, 0, 0, 1, 1, 1], [0], [0]>} : vector<2x8x8xf32>, vector<2x8x8xf32>, vector<2x8x8xf32> -> vector<2x8x8xf32>
    "tpu.trace_stop"() : () -> ()
    %cst_185 = arith.constant 0.353553385 : f32
    %196 = vector.broadcast %cst_185 : f32 to vector<2x8x8xf32>
    %197 = arith.mulf %195, %196 : vector<2x8x8xf32>
    %cst_186 = arith.constant dense<0xFF800000> : vector<2x8xf32>
    %198 = vector.multi_reduction <maximumf>, %197, %cst_186 [2] : vector<2x8x8xf32> to vector<2x8xf32>
    %199 = vector.shape_cast %198 : vector<2x8xf32> to vector<2x8x1xf32>
    %200 = vector.broadcast %199 : vector<2x8x1xf32> to vector<2x8x8xf32>
    %201 = arith.subf %197, %200 : vector<2x8x8xf32>
    %202 = math.exp %201 : vector<2x8x8xf32>
    %cst_187 = arith.constant dense<0.000000e+00> : vector<2x8xf32>
    %203 = vector.multi_reduction <add>, %202, %cst_187 [2] : vector<2x8x8xf32> to vector<2x8xf32>
    %204 = vector.shape_cast %203 : vector<2x8xf32> to vector<2x8x1xf32>
    %205 = tpu.reciprocal %204 {approx = true} : vector<2x8x1xf32> -> vector<2x8x1xf32>
    %206 = vector.broadcast %205 : vector<2x8x1xf32> to vector<2x8x8xf32>
    %207 = arith.mulf %202, %206 : vector<2x8x8xf32>
    "tpu.trace_start"() <{level = 10 : i32, message = "bqk,bkd->bqd"}> : () -> ()
    %cst_188 = arith.constant dense<0.000000e+00> : vector<2x8x8xf32>
    %208 = tpu.matmul %207, %194, %cst_188 {dimension_numbers = #tpu.dot_dimension_numbers<[2], [1], [1], [2], [0, 0, 0, 1, 1, 2], [0], [0]>} : vector<2x8x8xf32>, vector<2x8x8xf32>, vector<2x8x8xf32> -> vector<2x8x8xf32>
    "tpu.trace_stop"() : () -> ()
    %209 = vector.shape_cast %208 : vector<2x8x8xf32> to vector<16x8xf32>
    %c0_189 = arith.constant 0 : index
    %c3_190 = arith.constant 3 : index
    %c0_191 = arith.constant 0 : index
    %c0_192 = arith.constant 0 : index
    %210 = vector.load %arg5[%c0_189, %c3_190, %c0_191, %c0_192] : memref<2x4x8x32xbf16, #tpu.memory_space<vmem>>, vector<1x1x8x32xbf16>
    %211 = vector.shape_cast %210 : vector<1x1x8x32xbf16> to vector<8x32xbf16>
    %212 = arith.truncf %209 : vector<16x8xf32> to vector<16x8xbf16>
    %cst_193 = arith.constant dense<0.000000e+00> : vector<16x32xf32>
    %213 = tpu.matmul %212, %211, %cst_193 {dimension_numbers = #tpu.dot_dimension_numbers<[1], [0], [0], [1], [0, 0, 1, 1], [], []>} : vector<16x8xbf16>, vector<8x32xbf16>, vector<16x32xf32> -> vector<16x32xf32>
    %214 = arith.addf %167, %213 : vector<16x32xf32>
    %215 = arith.addf %11, %214 : vector<16x32xf32>
    %216 = vector.broadcast %13 : vector<1x32xf32> to vector<16x32xf32>
    %217 = arith.addf %215, %216 : vector<16x32xf32>
    %cst_194 = arith.constant dense<0.000000e+00> : vector<16xf32>
    %218 = vector.multi_reduction <add>, %217, %cst_194 [1] : vector<16x32xf32> to vector<16xf32>
    %219 = vector.shape_cast %218 : vector<16xf32> to vector<16x1xf32>
    %cst_195 = arith.constant 3.200000e+01 : f32
    %220 = vector.broadcast %cst_195 : f32 to vector<16x1xf32>
    %221 = arith.divf %219, %220 : vector<16x1xf32>
    %222 = vector.broadcast %221 : vector<16x1xf32> to vector<16x32xf32>
    %223 = arith.subf %217, %222 : vector<16x32xf32>
    %224 = arith.mulf %223, %223 : vector<16x32xf32>
    %cst_196 = arith.constant dense<0.000000e+00> : vector<16xf32>
    %225 = vector.multi_reduction <add>, %224, %cst_196 [1] : vector<16x32xf32> to vector<16xf32>
    %226 = vector.shape_cast %225 : vector<16xf32> to vector<16x1xf32>
    %cst_197 = arith.constant 3.200000e+01 : f32
    %227 = vector.broadcast %cst_197 : f32 to vector<16x1xf32>
    %228 = arith.divf %226, %227 : vector<16x1xf32>
    %229 = vector.broadcast %221 : vector<16x1xf32> to vector<16x32xf32>
    %230 = arith.subf %217, %229 : vector<16x32xf32>
    %cst_198 = arith.constant 9.99999974E-6 : f32
    %231 = vector.broadcast %cst_198 : f32 to vector<16x1xf32>
    %232 = arith.addf %228, %231 : vector<16x1xf32>
    %233 = math.rsqrt %232 : vector<16x1xf32>
    %234 = vector.broadcast %233 : vector<16x1xf32> to vector<16x32xf32>
    %235 = arith.mulf %230, %234 : vector<16x32xf32>
    %236 = vector.broadcast %15 : vector<1x32xf32> to vector<16x32xf32>
    %237 = arith.mulf %235, %236 : vector<16x32xf32>
    %238 = vector.broadcast %17 : vector<1x32xf32> to vector<16x32xf32>
    %239 = arith.addf %237, %238 : vector<16x32xf32>
    %c0_199 = arith.constant 0 : index
    %c0_200 = arith.constant 0 : index
    %c0_201 = arith.constant 0 : index
    %240 = vector.load %arg6[%c0_199, %c0_200, %c0_201] : memref<2x32x64xbf16, #tpu.memory_space<vmem>>, vector<1x32x64xbf16>
    %241 = vector.shape_cast %240 : vector<1x32x64xbf16> to vector<32x64xbf16>
    %242 = arith.truncf %239 : vector<16x32xf32> to vector<16x32xbf16>
    %cst_202 = arith.constant dense<0.000000e+00> : vector<16x64xf32>
    %243 = tpu.matmul %242, %241, %cst_202 {dimension_numbers = #tpu.dot_dimension_numbers<[1], [0], [0], [1], [0, 0, 1, 1], [], []>} : vector<16x32xbf16>, vector<32x64xbf16>, vector<16x64xf32> -> vector<16x64xf32>
    %244 = vector.broadcast %19 : vector<1x64xf32> to vector<16x64xf32>
    %245 = arith.addf %243, %244 : vector<16x64xf32>
    %cst_203 = arith.constant 0.000000e+00 : f32
    %246 = vector.broadcast %cst_203 : f32 to vector<16x64xf32>
    %247 = arith.maximumf %245, %246 : vector<16x64xf32>
    %c0_204 = arith.constant 0 : index
    %c0_205 = arith.constant 0 : index
    %c0_206 = arith.constant 0 : index
    %248 = vector.load %arg7[%c0_204, %c0_205, %c0_206] : memref<2x64x32xbf16, #tpu.memory_space<vmem>>, vector<1x64x32xbf16>
    %249 = vector.shape_cast %248 : vector<1x64x32xbf16> to vector<64x32xbf16>
    %250 = arith.truncf %247 : vector<16x64xf32> to vector<16x64xbf16>
    %cst_207 = arith.constant dense<0.000000e+00> : vector<16x32xf32>
    %251 = tpu.matmul %250, %249, %cst_207 {dimension_numbers = #tpu.dot_dimension_numbers<[1], [0], [0], [1], [0, 0, 1, 1], [], []>} : vector<16x64xbf16>, vector<64x32xbf16>, vector<16x32xf32> -> vector<16x32xf32>
    %252 = arith.addf %239, %251 : vector<16x32xf32>
    %253 = vector.broadcast %21 : vector<1x32xf32> to vector<16x32xf32>
    %254 = arith.addf %252, %253 : vector<16x32xf32>
    %cst_208 = arith.constant dense<0.000000e+00> : vector<16xf32>
    %255 = vector.multi_reduction <add>, %254, %cst_208 [1] : vector<16x32xf32> to vector<16xf32>
    %256 = vector.shape_cast %255 : vector<16xf32> to vector<16x1xf32>
    %cst_209 = arith.constant 3.200000e+01 : f32
    %257 = vector.broadcast %cst_209 : f32 to vector<16x1xf32>
    %258 = arith.divf %256, %257 : vector<16x1xf32>
    %259 = vector.broadcast %258 : vector<16x1xf32> to vector<16x32xf32>
    %260 = arith.subf %254, %259 : vector<16x32xf32>
    %261 = arith.mulf %260, %260 : vector<16x32xf32>
    %cst_210 = arith.constant dense<0.000000e+00> : vector<16xf32>
    %262 = vector.multi_reduction <add>, %261, %cst_210 [1] : vector<16x32xf32> to vector<16xf32>
    %263 = vector.shape_cast %262 : vector<16xf32> to vector<16x1xf32>
    %cst_211 = arith.constant 3.200000e+01 : f32
    %264 = vector.broadcast %cst_211 : f32 to vector<16x1xf32>
    %265 = arith.divf %263, %264 : vector<16x1xf32>
    %266 = vector.broadcast %258 : vector<16x1xf32> to vector<16x32xf32>
    %267 = arith.subf %254, %266 : vector<16x32xf32>
    %cst_212 = arith.constant 9.99999974E-6 : f32
    %268 = vector.broadcast %cst_212 : f32 to vector<16x1xf32>
    %269 = arith.addf %265, %268 : vector<16x1xf32>
    %270 = math.rsqrt %269 : vector<16x1xf32>
    %271 = vector.broadcast %270 : vector<16x1xf32> to vector<16x32xf32>
    %272 = arith.mulf %267, %271 : vector<16x32xf32>
    %273 = vector.broadcast %23 : vector<1x32xf32> to vector<16x32xf32>
    %274 = arith.mulf %272, %273 : vector<16x32xf32>
    %275 = vector.broadcast %25 : vector<1x32xf32> to vector<16x32xf32>
    %276 = arith.addf %274, %275 : vector<16x32xf32>
    %c1_213 = arith.constant 1 : index
    %c0_214 = arith.constant 0 : index
    %c0_215 = arith.constant 0 : index
    %277 = vector.load %arg8[%c1_213, %c0_214, %c0_215] : memref<2x8x64xf32, #tpu.memory_space<vmem>>, vector<1x1x32xf32>
    %278 = vector.shape_cast %277 : vector<1x1x32xf32> to vector<1x32xf32>
    %c1_216 = arith.constant 1 : index
    %c1_217 = arith.constant 1 : index
    %c0_218 = arith.constant 0 : index
    %279 = vector.load %arg8[%c1_216, %c1_217, %c0_218] : memref<2x8x64xf32, #tpu.memory_space<vmem>>, vector<1x1x32xf32>
    %280 = vector.shape_cast %279 : vector<1x1x32xf32> to vector<1x32xf32>
    %c1_219 = arith.constant 1 : index
    %c2_220 = arith.constant 2 : index
    %c0_221 = arith.constant 0 : index
    %281 = vector.load %arg8[%c1_219, %c2_220, %c0_221] : memref<2x8x64xf32, #tpu.memory_space<vmem>>, vector<1x1x32xf32>
    %282 = vector.shape_cast %281 : vector<1x1x32xf32> to vector<1x32xf32>
    %c1_222 = arith.constant 1 : index
    %c3_223 = arith.constant 3 : index
    %c0_224 = arith.constant 0 : index
    %283 = vector.load %arg8[%c1_222, %c3_223, %c0_224] : memref<2x8x64xf32, #tpu.memory_space<vmem>>, vector<1x1x64xf32>
    %284 = vector.shape_cast %283 : vector<1x1x64xf32> to vector<1x64xf32>
    %c1_225 = arith.constant 1 : index
    %c4_226 = arith.constant 4 : index
    %c0_227 = arith.constant 0 : index
    %285 = vector.load %arg8[%c1_225, %c4_226, %c0_227] : memref<2x8x64xf32, #tpu.memory_space<vmem>>, vector<1x1x32xf32>
    %286 = vector.shape_cast %285 : vector<1x1x32xf32> to vector<1x32xf32>
    %c1_228 = arith.constant 1 : index
    %c5_229 = arith.constant 5 : index
    %c0_230 = arith.constant 0 : index
    %287 = vector.load %arg8[%c1_228, %c5_229, %c0_230] : memref<2x8x64xf32, #tpu.memory_space<vmem>>, vector<1x1x32xf32>
    %288 = vector.shape_cast %287 : vector<1x1x32xf32> to vector<1x32xf32>
    %c1_231 = arith.constant 1 : index
    %c6_232 = arith.constant 6 : index
    %c0_233 = arith.constant 0 : index
    %289 = vector.load %arg8[%c1_231, %c6_232, %c0_233] : memref<2x8x64xf32, #tpu.memory_space<vmem>>, vector<1x1x32xf32>
    %290 = vector.shape_cast %289 : vector<1x1x32xf32> to vector<1x32xf32>
    %cst_234 = arith.constant 0.000000e+00 : f32
    %291 = vector.broadcast %cst_234 : f32 to vector<16x32xf32>
    %c1_235 = arith.constant 1 : index
    %c0_236 = arith.constant 0 : index
    %c0_237 = arith.constant 0 : index
    %c0_238 = arith.constant 0 : index
    %c0_239 = arith.constant 0 : index
    %292 = vector.load %arg3[%c1_235, %c0_236, %c0_237, %c0_238, %c0_239] : memref<2x3x4x32x8xbf16, #tpu.memory_space<vmem>>, vector<1x1x1x32x8xbf16>
    %293 = vector.shape_cast %292 : vector<1x1x1x32x8xbf16> to vector<32x8xbf16>
    %294 = arith.truncf %276 : vector<16x32xf32> to vector<16x32xbf16>
    %cst_240 = arith.constant dense<0.000000e+00> : vector<16x8xf32>
    %295 = tpu.matmul %294, %293, %cst_240 {dimension_numbers = #tpu.dot_dimension_numbers<[1], [0], [0], [1], [0, 0, 1, 1], [], []>} : vector<16x32xbf16>, vector<32x8xbf16>, vector<16x8xf32> -> vector<16x8xf32>
    %c1_241 = arith.constant 1 : index
    %c0_242 = arith.constant 0 : index
    %c0_243 = arith.constant 0 : index
    %c0_244 = arith.constant 0 : index
    %c0_245 = arith.constant 0 : index
    %296 = vector.load %arg4[%c1_241, %c0_242, %c0_243, %c0_244, %c0_245] : memref<2x3x4x1x8xf32, #tpu.memory_space<vmem>>, vector<1x1x1x1x8xf32>
    %297 = vector.shape_cast %296 : vector<1x1x1x1x8xf32> to vector<1x8xf32>
    %298 = vector.broadcast %297 : vector<1x8xf32> to vector<16x8xf32>
    %299 = arith.addf %295, %298 : vector<16x8xf32>
    %c1_246 = arith.constant 1 : index
    %c1_247 = arith.constant 1 : index
    %c0_248 = arith.constant 0 : index
    %c0_249 = arith.constant 0 : index
    %c0_250 = arith.constant 0 : index
    %300 = vector.load %arg3[%c1_246, %c1_247, %c0_248, %c0_249, %c0_250] : memref<2x3x4x32x8xbf16, #tpu.memory_space<vmem>>, vector<1x1x1x32x8xbf16>
    %301 = vector.shape_cast %300 : vector<1x1x1x32x8xbf16> to vector<32x8xbf16>
    %302 = arith.truncf %276 : vector<16x32xf32> to vector<16x32xbf16>
    %cst_251 = arith.constant dense<0.000000e+00> : vector<16x8xf32>
    %303 = tpu.matmul %302, %301, %cst_251 {dimension_numbers = #tpu.dot_dimension_numbers<[1], [0], [0], [1], [0, 0, 1, 1], [], []>} : vector<16x32xbf16>, vector<32x8xbf16>, vector<16x8xf32> -> vector<16x8xf32>
    %c1_252 = arith.constant 1 : index
    %c1_253 = arith.constant 1 : index
    %c0_254 = arith.constant 0 : index
    %c0_255 = arith.constant 0 : index
    %c0_256 = arith.constant 0 : index
    %304 = vector.load %arg4[%c1_252, %c1_253, %c0_254, %c0_255, %c0_256] : memref<2x3x4x1x8xf32, #tpu.memory_space<vmem>>, vector<1x1x1x1x8xf32>
    %305 = vector.shape_cast %304 : vector<1x1x1x1x8xf32> to vector<1x8xf32>
    %306 = vector.broadcast %305 : vector<1x8xf32> to vector<16x8xf32>
    %307 = arith.addf %303, %306 : vector<16x8xf32>
    %c1_257 = arith.constant 1 : index
    %c2_258 = arith.constant 2 : index
    %c0_259 = arith.constant 0 : index
    %c0_260 = arith.constant 0 : index
    %c0_261 = arith.constant 0 : index
    %308 = vector.load %arg3[%c1_257, %c2_258, %c0_259, %c0_260, %c0_261] : memref<2x3x4x32x8xbf16, #tpu.memory_space<vmem>>, vector<1x1x1x32x8xbf16>
    %309 = vector.shape_cast %308 : vector<1x1x1x32x8xbf16> to vector<32x8xbf16>
    %310 = arith.truncf %276 : vector<16x32xf32> to vector<16x32xbf16>
    %cst_262 = arith.constant dense<0.000000e+00> : vector<16x8xf32>
    %311 = tpu.matmul %310, %309, %cst_262 {dimension_numbers = #tpu.dot_dimension_numbers<[1], [0], [0], [1], [0, 0, 1, 1], [], []>} : vector<16x32xbf16>, vector<32x8xbf16>, vector<16x8xf32> -> vector<16x8xf32>
    %c1_263 = arith.constant 1 : index
    %c2_264 = arith.constant 2 : index
    %c0_265 = arith.constant 0 : index
    %c0_266 = arith.constant 0 : index
    %c0_267 = arith.constant 0 : index
    %312 = vector.load %arg4[%c1_263, %c2_264, %c0_265, %c0_266, %c0_267] : memref<2x3x4x1x8xf32, #tpu.memory_space<vmem>>, vector<1x1x1x1x8xf32>
    %313 = vector.shape_cast %312 : vector<1x1x1x1x8xf32> to vector<1x8xf32>
    %314 = vector.broadcast %313 : vector<1x8xf32> to vector<16x8xf32>
    %315 = arith.addf %311, %314 : vector<16x8xf32>
    %316 = vector.shape_cast %299 : vector<16x8xf32> to vector<2x8x8xf32>
    %317 = vector.shape_cast %307 : vector<16x8xf32> to vector<2x8x8xf32>
    %318 = vector.shape_cast %315 : vector<16x8xf32> to vector<2x8x8xf32>
    "tpu.trace_start"() <{level = 10 : i32, message = "bqd,bkd->bqk"}> : () -> ()
    %cst_268 = arith.constant dense<0.000000e+00> : vector<2x8x8xf32>
    %319 = tpu.matmul %316, %317, %cst_268 {dimension_numbers = #tpu.dot_dimension_numbers<[2], [2], [1], [1], [0, 0, 0, 1, 1, 1], [0], [0]>} : vector<2x8x8xf32>, vector<2x8x8xf32>, vector<2x8x8xf32> -> vector<2x8x8xf32>
    "tpu.trace_stop"() : () -> ()
    %cst_269 = arith.constant 0.353553385 : f32
    %320 = vector.broadcast %cst_269 : f32 to vector<2x8x8xf32>
    %321 = arith.mulf %319, %320 : vector<2x8x8xf32>
    %cst_270 = arith.constant dense<0xFF800000> : vector<2x8xf32>
    %322 = vector.multi_reduction <maximumf>, %321, %cst_270 [2] : vector<2x8x8xf32> to vector<2x8xf32>
    %323 = vector.shape_cast %322 : vector<2x8xf32> to vector<2x8x1xf32>
    %324 = vector.broadcast %323 : vector<2x8x1xf32> to vector<2x8x8xf32>
    %325 = arith.subf %321, %324 : vector<2x8x8xf32>
    %326 = math.exp %325 : vector<2x8x8xf32>
    %cst_271 = arith.constant dense<0.000000e+00> : vector<2x8xf32>
    %327 = vector.multi_reduction <add>, %326, %cst_271 [2] : vector<2x8x8xf32> to vector<2x8xf32>
    %328 = vector.shape_cast %327 : vector<2x8xf32> to vector<2x8x1xf32>
    %329 = tpu.reciprocal %328 {approx = true} : vector<2x8x1xf32> -> vector<2x8x1xf32>
    %330 = vector.broadcast %329 : vector<2x8x1xf32> to vector<2x8x8xf32>
    %331 = arith.mulf %326, %330 : vector<2x8x8xf32>
    "tpu.trace_start"() <{level = 10 : i32, message = "bqk,bkd->bqd"}> : () -> ()
    %cst_272 = arith.constant dense<0.000000e+00> : vector<2x8x8xf32>
    %332 = tpu.matmul %331, %318, %cst_272 {dimension_numbers = #tpu.dot_dimension_numbers<[2], [1], [1], [2], [0, 0, 0, 1, 1, 2], [0], [0]>} : vector<2x8x8xf32>, vector<2x8x8xf32>, vector<2x8x8xf32> -> vector<2x8x8xf32>
    "tpu.trace_stop"() : () -> ()
    %333 = vector.shape_cast %332 : vector<2x8x8xf32> to vector<16x8xf32>
    %c1_273 = arith.constant 1 : index
    %c0_274 = arith.constant 0 : index
    %c0_275 = arith.constant 0 : index
    %c0_276 = arith.constant 0 : index
    %334 = vector.load %arg5[%c1_273, %c0_274, %c0_275, %c0_276] : memref<2x4x8x32xbf16, #tpu.memory_space<vmem>>, vector<1x1x8x32xbf16>
    %335 = vector.shape_cast %334 : vector<1x1x8x32xbf16> to vector<8x32xbf16>
    %336 = arith.truncf %333 : vector<16x8xf32> to vector<16x8xbf16>
    %cst_277 = arith.constant dense<0.000000e+00> : vector<16x32xf32>
    %337 = tpu.matmul %336, %335, %cst_277 {dimension_numbers = #tpu.dot_dimension_numbers<[1], [0], [0], [1], [0, 0, 1, 1], [], []>} : vector<16x8xbf16>, vector<8x32xbf16>, vector<16x32xf32> -> vector<16x32xf32>
    %338 = arith.addf %291, %337 : vector<16x32xf32>
    %c1_278 = arith.constant 1 : index
    %c0_279 = arith.constant 0 : index
    %c1_280 = arith.constant 1 : index
    %c0_281 = arith.constant 0 : index
    %c0_282 = arith.constant 0 : index
    %339 = vector.load %arg3[%c1_278, %c0_279, %c1_280, %c0_281, %c0_282] : memref<2x3x4x32x8xbf16, #tpu.memory_space<vmem>>, vector<1x1x1x32x8xbf16>
    %340 = vector.shape_cast %339 : vector<1x1x1x32x8xbf16> to vector<32x8xbf16>
    %341 = arith.truncf %276 : vector<16x32xf32> to vector<16x32xbf16>
    %cst_283 = arith.constant dense<0.000000e+00> : vector<16x8xf32>
    %342 = tpu.matmul %341, %340, %cst_283 {dimension_numbers = #tpu.dot_dimension_numbers<[1], [0], [0], [1], [0, 0, 1, 1], [], []>} : vector<16x32xbf16>, vector<32x8xbf16>, vector<16x8xf32> -> vector<16x8xf32>
    %c1_284 = arith.constant 1 : index
    %c0_285 = arith.constant 0 : index
    %c1_286 = arith.constant 1 : index
    %c0_287 = arith.constant 0 : index
    %c0_288 = arith.constant 0 : index
    %343 = vector.load %arg4[%c1_284, %c0_285, %c1_286, %c0_287, %c0_288] : memref<2x3x4x1x8xf32, #tpu.memory_space<vmem>>, vector<1x1x1x1x8xf32>
    %344 = vector.shape_cast %343 : vector<1x1x1x1x8xf32> to vector<1x8xf32>
    %345 = vector.broadcast %344 : vector<1x8xf32> to vector<16x8xf32>
    %346 = arith.addf %342, %345 : vector<16x8xf32>
    %c1_289 = arith.constant 1 : index
    %c1_290 = arith.constant 1 : index
    %c1_291 = arith.constant 1 : index
    %c0_292 = arith.constant 0 : index
    %c0_293 = arith.constant 0 : index
    %347 = vector.load %arg3[%c1_289, %c1_290, %c1_291, %c0_292, %c0_293] : memref<2x3x4x32x8xbf16, #tpu.memory_space<vmem>>, vector<1x1x1x32x8xbf16>
    %348 = vector.shape_cast %347 : vector<1x1x1x32x8xbf16> to vector<32x8xbf16>
    %349 = arith.truncf %276 : vector<16x32xf32> to vector<16x32xbf16>
    %cst_294 = arith.constant dense<0.000000e+00> : vector<16x8xf32>
    %350 = tpu.matmul %349, %348, %cst_294 {dimension_numbers = #tpu.dot_dimension_numbers<[1], [0], [0], [1], [0, 0, 1, 1], [], []>} : vector<16x32xbf16>, vector<32x8xbf16>, vector<16x8xf32> -> vector<16x8xf32>
    %c1_295 = arith.constant 1 : index
    %c1_296 = arith.constant 1 : index
    %c1_297 = arith.constant 1 : index
    %c0_298 = arith.constant 0 : index
    %c0_299 = arith.constant 0 : index
    %351 = vector.load %arg4[%c1_295, %c1_296, %c1_297, %c0_298, %c0_299] : memref<2x3x4x1x8xf32, #tpu.memory_space<vmem>>, vector<1x1x1x1x8xf32>
    %352 = vector.shape_cast %351 : vector<1x1x1x1x8xf32> to vector<1x8xf32>
    %353 = vector.broadcast %352 : vector<1x8xf32> to vector<16x8xf32>
    %354 = arith.addf %350, %353 : vector<16x8xf32>
    %c1_300 = arith.constant 1 : index
    %c2_301 = arith.constant 2 : index
    %c1_302 = arith.constant 1 : index
    %c0_303 = arith.constant 0 : index
    %c0_304 = arith.constant 0 : index
    %355 = vector.load %arg3[%c1_300, %c2_301, %c1_302, %c0_303, %c0_304] : memref<2x3x4x32x8xbf16, #tpu.memory_space<vmem>>, vector<1x1x1x32x8xbf16>
    %356 = vector.shape_cast %355 : vector<1x1x1x32x8xbf16> to vector<32x8xbf16>
    %357 = arith.truncf %276 : vector<16x32xf32> to vector<16x32xbf16>
    %cst_305 = arith.constant dense<0.000000e+00> : vector<16x8xf32>
    %358 = tpu.matmul %357, %356, %cst_305 {dimension_numbers = #tpu.dot_dimension_numbers<[1], [0], [0], [1], [0, 0, 1, 1], [], []>} : vector<16x32xbf16>, vector<32x8xbf16>, vector<16x8xf32> -> vector<16x8xf32>
    %c1_306 = arith.constant 1 : index
    %c2_307 = arith.constant 2 : index
    %c1_308 = arith.constant 1 : index
    %c0_309 = arith.constant 0 : index
    %c0_310 = arith.constant 0 : index
    %359 = vector.load %arg4[%c1_306, %c2_307, %c1_308, %c0_309, %c0_310] : memref<2x3x4x1x8xf32, #tpu.memory_space<vmem>>, vector<1x1x1x1x8xf32>
    %360 = vector.shape_cast %359 : vector<1x1x1x1x8xf32> to vector<1x8xf32>
    %361 = vector.broadcast %360 : vector<1x8xf32> to vector<16x8xf32>
    %362 = arith.addf %358, %361 : vector<16x8xf32>
    %363 = vector.shape_cast %346 : vector<16x8xf32> to vector<2x8x8xf32>
    %364 = vector.shape_cast %354 : vector<16x8xf32> to vector<2x8x8xf32>
    %365 = vector.shape_cast %362 : vector<16x8xf32> to vector<2x8x8xf32>
    "tpu.trace_start"() <{level = 10 : i32, message = "bqd,bkd->bqk"}> : () -> ()
    %cst_311 = arith.constant dense<0.000000e+00> : vector<2x8x8xf32>
    %366 = tpu.matmul %363, %364, %cst_311 {dimension_numbers = #tpu.dot_dimension_numbers<[2], [2], [1], [1], [0, 0, 0, 1, 1, 1], [0], [0]>} : vector<2x8x8xf32>, vector<2x8x8xf32>, vector<2x8x8xf32> -> vector<2x8x8xf32>
    "tpu.trace_stop"() : () -> ()
    %cst_312 = arith.constant 0.353553385 : f32
    %367 = vector.broadcast %cst_312 : f32 to vector<2x8x8xf32>
    %368 = arith.mulf %366, %367 : vector<2x8x8xf32>
    %cst_313 = arith.constant dense<0xFF800000> : vector<2x8xf32>
    %369 = vector.multi_reduction <maximumf>, %368, %cst_313 [2] : vector<2x8x8xf32> to vector<2x8xf32>
    %370 = vector.shape_cast %369 : vector<2x8xf32> to vector<2x8x1xf32>
    %371 = vector.broadcast %370 : vector<2x8x1xf32> to vector<2x8x8xf32>
    %372 = arith.subf %368, %371 : vector<2x8x8xf32>
    %373 = math.exp %372 : vector<2x8x8xf32>
    %cst_314 = arith.constant dense<0.000000e+00> : vector<2x8xf32>
    %374 = vector.multi_reduction <add>, %373, %cst_314 [2] : vector<2x8x8xf32> to vector<2x8xf32>
    %375 = vector.shape_cast %374 : vector<2x8xf32> to vector<2x8x1xf32>
    %376 = tpu.reciprocal %375 {approx = true} : vector<2x8x1xf32> -> vector<2x8x1xf32>
    %377 = vector.broadcast %376 : vector<2x8x1xf32> to vector<2x8x8xf32>
    %378 = arith.mulf %373, %377 : vector<2x8x8xf32>
    "tpu.trace_start"() <{level = 10 : i32, message = "bqk,bkd->bqd"}> : () -> ()
    %cst_315 = arith.constant dense<0.000000e+00> : vector<2x8x8xf32>
    %379 = tpu.matmul %378, %365, %cst_315 {dimension_numbers = #tpu.dot_dimension_numbers<[2], [1], [1], [2], [0, 0, 0, 1, 1, 2], [0], [0]>} : vector<2x8x8xf32>, vector<2x8x8xf32>, vector<2x8x8xf32> -> vector<2x8x8xf32>
    "tpu.trace_stop"() : () -> ()
    %380 = vector.shape_cast %379 : vector<2x8x8xf32> to vector<16x8xf32>
    %c1_316 = arith.constant 1 : index
    %c1_317 = arith.constant 1 : index
    %c0_318 = arith.constant 0 : index
    %c0_319 = arith.constant 0 : index
    %381 = vector.load %arg5[%c1_316, %c1_317, %c0_318, %c0_319] : memref<2x4x8x32xbf16, #tpu.memory_space<vmem>>, vector<1x1x8x32xbf16>
    %382 = vector.shape_cast %381 : vector<1x1x8x32xbf16> to vector<8x32xbf16>
    %383 = arith.truncf %380 : vector<16x8xf32> to vector<16x8xbf16>
    %cst_320 = arith.constant dense<0.000000e+00> : vector<16x32xf32>
    %384 = tpu.matmul %383, %382, %cst_320 {dimension_numbers = #tpu.dot_dimension_numbers<[1], [0], [0], [1], [0, 0, 1, 1], [], []>} : vector<16x8xbf16>, vector<8x32xbf16>, vector<16x32xf32> -> vector<16x32xf32>
    %385 = arith.addf %338, %384 : vector<16x32xf32>
    %c1_321 = arith.constant 1 : index
    %c0_322 = arith.constant 0 : index
    %c2_323 = arith.constant 2 : index
    %c0_324 = arith.constant 0 : index
    %c0_325 = arith.constant 0 : index
    %386 = vector.load %arg3[%c1_321, %c0_322, %c2_323, %c0_324, %c0_325] : memref<2x3x4x32x8xbf16, #tpu.memory_space<vmem>>, vector<1x1x1x32x8xbf16>
    %387 = vector.shape_cast %386 : vector<1x1x1x32x8xbf16> to vector<32x8xbf16>
    %388 = arith.truncf %276 : vector<16x32xf32> to vector<16x32xbf16>
    %cst_326 = arith.constant dense<0.000000e+00> : vector<16x8xf32>
    %389 = tpu.matmul %388, %387, %cst_326 {dimension_numbers = #tpu.dot_dimension_numbers<[1], [0], [0], [1], [0, 0, 1, 1], [], []>} : vector<16x32xbf16>, vector<32x8xbf16>, vector<16x8xf32> -> vector<16x8xf32>
    %c1_327 = arith.constant 1 : index
    %c0_328 = arith.constant 0 : index
    %c2_329 = arith.constant 2 : index
    %c0_330 = arith.constant 0 : index
    %c0_331 = arith.constant 0 : index
    %390 = vector.load %arg4[%c1_327, %c0_328, %c2_329, %c0_330, %c0_331] : memref<2x3x4x1x8xf32, #tpu.memory_space<vmem>>, vector<1x1x1x1x8xf32>
    %391 = vector.shape_cast %390 : vector<1x1x1x1x8xf32> to vector<1x8xf32>
    %392 = vector.broadcast %391 : vector<1x8xf32> to vector<16x8xf32>
    %393 = arith.addf %389, %392 : vector<16x8xf32>
    %c1_332 = arith.constant 1 : index
    %c1_333 = arith.constant 1 : index
    %c2_334 = arith.constant 2 : index
    %c0_335 = arith.constant 0 : index
    %c0_336 = arith.constant 0 : index
    %394 = vector.load %arg3[%c1_332, %c1_333, %c2_334, %c0_335, %c0_336] : memref<2x3x4x32x8xbf16, #tpu.memory_space<vmem>>, vector<1x1x1x32x8xbf16>
    %395 = vector.shape_cast %394 : vector<1x1x1x32x8xbf16> to vector<32x8xbf16>
    %396 = arith.truncf %276 : vector<16x32xf32> to vector<16x32xbf16>
    %cst_337 = arith.constant dense<0.000000e+00> : vector<16x8xf32>
    %397 = tpu.matmul %396, %395, %cst_337 {dimension_numbers = #tpu.dot_dimension_numbers<[1], [0], [0], [1], [0, 0, 1, 1], [], []>} : vector<16x32xbf16>, vector<32x8xbf16>, vector<16x8xf32> -> vector<16x8xf32>
    %c1_338 = arith.constant 1 : index
    %c1_339 = arith.constant 1 : index
    %c2_340 = arith.constant 2 : index
    %c0_341 = arith.constant 0 : index
    %c0_342 = arith.constant 0 : index
    %398 = vector.load %arg4[%c1_338, %c1_339, %c2_340, %c0_341, %c0_342] : memref<2x3x4x1x8xf32, #tpu.memory_space<vmem>>, vector<1x1x1x1x8xf32>
    %399 = vector.shape_cast %398 : vector<1x1x1x1x8xf32> to vector<1x8xf32>
    %400 = vector.broadcast %399 : vector<1x8xf32> to vector<16x8xf32>
    %401 = arith.addf %397, %400 : vector<16x8xf32>
    %c1_343 = arith.constant 1 : index
    %c2_344 = arith.constant 2 : index
    %c2_345 = arith.constant 2 : index
    %c0_346 = arith.constant 0 : index
    %c0_347 = arith.constant 0 : index
    %402 = vector.load %arg3[%c1_343, %c2_344, %c2_345, %c0_346, %c0_347] : memref<2x3x4x32x8xbf16, #tpu.memory_space<vmem>>, vector<1x1x1x32x8xbf16>
    %403 = vector.shape_cast %402 : vector<1x1x1x32x8xbf16> to vector<32x8xbf16>
    %404 = arith.truncf %276 : vector<16x32xf32> to vector<16x32xbf16>
    %cst_348 = arith.constant dense<0.000000e+00> : vector<16x8xf32>
    %405 = tpu.matmul %404, %403, %cst_348 {dimension_numbers = #tpu.dot_dimension_numbers<[1], [0], [0], [1], [0, 0, 1, 1], [], []>} : vector<16x32xbf16>, vector<32x8xbf16>, vector<16x8xf32> -> vector<16x8xf32>
    %c1_349 = arith.constant 1 : index
    %c2_350 = arith.constant 2 : index
    %c2_351 = arith.constant 2 : index
    %c0_352 = arith.constant 0 : index
    %c0_353 = arith.constant 0 : index
    %406 = vector.load %arg4[%c1_349, %c2_350, %c2_351, %c0_352, %c0_353] : memref<2x3x4x1x8xf32, #tpu.memory_space<vmem>>, vector<1x1x1x1x8xf32>
    %407 = vector.shape_cast %406 : vector<1x1x1x1x8xf32> to vector<1x8xf32>
    %408 = vector.broadcast %407 : vector<1x8xf32> to vector<16x8xf32>
    %409 = arith.addf %405, %408 : vector<16x8xf32>
    %410 = vector.shape_cast %393 : vector<16x8xf32> to vector<2x8x8xf32>
    %411 = vector.shape_cast %401 : vector<16x8xf32> to vector<2x8x8xf32>
    %412 = vector.shape_cast %409 : vector<16x8xf32> to vector<2x8x8xf32>
    "tpu.trace_start"() <{level = 10 : i32, message = "bqd,bkd->bqk"}> : () -> ()
    %cst_354 = arith.constant dense<0.000000e+00> : vector<2x8x8xf32>
    %413 = tpu.matmul %410, %411, %cst_354 {dimension_numbers = #tpu.dot_dimension_numbers<[2], [2], [1], [1], [0, 0, 0, 1, 1, 1], [0], [0]>} : vector<2x8x8xf32>, vector<2x8x8xf32>, vector<2x8x8xf32> -> vector<2x8x8xf32>
    "tpu.trace_stop"() : () -> ()
    %cst_355 = arith.constant 0.353553385 : f32
    %414 = vector.broadcast %cst_355 : f32 to vector<2x8x8xf32>
    %415 = arith.mulf %413, %414 : vector<2x8x8xf32>
    %cst_356 = arith.constant dense<0xFF800000> : vector<2x8xf32>
    %416 = vector.multi_reduction <maximumf>, %415, %cst_356 [2] : vector<2x8x8xf32> to vector<2x8xf32>
    %417 = vector.shape_cast %416 : vector<2x8xf32> to vector<2x8x1xf32>
    %418 = vector.broadcast %417 : vector<2x8x1xf32> to vector<2x8x8xf32>
    %419 = arith.subf %415, %418 : vector<2x8x8xf32>
    %420 = math.exp %419 : vector<2x8x8xf32>
    %cst_357 = arith.constant dense<0.000000e+00> : vector<2x8xf32>
    %421 = vector.multi_reduction <add>, %420, %cst_357 [2] : vector<2x8x8xf32> to vector<2x8xf32>
    %422 = vector.shape_cast %421 : vector<2x8xf32> to vector<2x8x1xf32>
    %423 = tpu.reciprocal %422 {approx = true} : vector<2x8x1xf32> -> vector<2x8x1xf32>
    %424 = vector.broadcast %423 : vector<2x8x1xf32> to vector<2x8x8xf32>
    %425 = arith.mulf %420, %424 : vector<2x8x8xf32>
    "tpu.trace_start"() <{level = 10 : i32, message = "bqk,bkd->bqd"}> : () -> ()
    %cst_358 = arith.constant dense<0.000000e+00> : vector<2x8x8xf32>
    %426 = tpu.matmul %425, %412, %cst_358 {dimension_numbers = #tpu.dot_dimension_numbers<[2], [1], [1], [2], [0, 0, 0, 1, 1, 2], [0], [0]>} : vector<2x8x8xf32>, vector<2x8x8xf32>, vector<2x8x8xf32> -> vector<2x8x8xf32>
    "tpu.trace_stop"() : () -> ()
    %427 = vector.shape_cast %426 : vector<2x8x8xf32> to vector<16x8xf32>
    %c1_359 = arith.constant 1 : index
    %c2_360 = arith.constant 2 : index
    %c0_361 = arith.constant 0 : index
    %c0_362 = arith.constant 0 : index
    %428 = vector.load %arg5[%c1_359, %c2_360, %c0_361, %c0_362] : memref<2x4x8x32xbf16, #tpu.memory_space<vmem>>, vector<1x1x8x32xbf16>
    %429 = vector.shape_cast %428 : vector<1x1x8x32xbf16> to vector<8x32xbf16>
    %430 = arith.truncf %427 : vector<16x8xf32> to vector<16x8xbf16>
    %cst_363 = arith.constant dense<0.000000e+00> : vector<16x32xf32>
    %431 = tpu.matmul %430, %429, %cst_363 {dimension_numbers = #tpu.dot_dimension_numbers<[1], [0], [0], [1], [0, 0, 1, 1], [], []>} : vector<16x8xbf16>, vector<8x32xbf16>, vector<16x32xf32> -> vector<16x32xf32>
    %432 = arith.addf %385, %431 : vector<16x32xf32>
    %c1_364 = arith.constant 1 : index
    %c0_365 = arith.constant 0 : index
    %c3_366 = arith.constant 3 : index
    %c0_367 = arith.constant 0 : index
    %c0_368 = arith.constant 0 : index
    %433 = vector.load %arg3[%c1_364, %c0_365, %c3_366, %c0_367, %c0_368] : memref<2x3x4x32x8xbf16, #tpu.memory_space<vmem>>, vector<1x1x1x32x8xbf16>
    %434 = vector.shape_cast %433 : vector<1x1x1x32x8xbf16> to vector<32x8xbf16>
    %435 = arith.truncf %276 : vector<16x32xf32> to vector<16x32xbf16>
    %cst_369 = arith.constant dense<0.000000e+00> : vector<16x8xf32>
    %436 = tpu.matmul %435, %434, %cst_369 {dimension_numbers = #tpu.dot_dimension_numbers<[1], [0], [0], [1], [0, 0, 1, 1], [], []>} : vector<16x32xbf16>, vector<32x8xbf16>, vector<16x8xf32> -> vector<16x8xf32>
    %c1_370 = arith.constant 1 : index
    %c0_371 = arith.constant 0 : index
    %c3_372 = arith.constant 3 : index
    %c0_373 = arith.constant 0 : index
    %c0_374 = arith.constant 0 : index
    %437 = vector.load %arg4[%c1_370, %c0_371, %c3_372, %c0_373, %c0_374] : memref<2x3x4x1x8xf32, #tpu.memory_space<vmem>>, vector<1x1x1x1x8xf32>
    %438 = vector.shape_cast %437 : vector<1x1x1x1x8xf32> to vector<1x8xf32>
    %439 = vector.broadcast %438 : vector<1x8xf32> to vector<16x8xf32>
    %440 = arith.addf %436, %439 : vector<16x8xf32>
    %c1_375 = arith.constant 1 : index
    %c1_376 = arith.constant 1 : index
    %c3_377 = arith.constant 3 : index
    %c0_378 = arith.constant 0 : index
    %c0_379 = arith.constant 0 : index
    %441 = vector.load %arg3[%c1_375, %c1_376, %c3_377, %c0_378, %c0_379] : memref<2x3x4x32x8xbf16, #tpu.memory_space<vmem>>, vector<1x1x1x32x8xbf16>
    %442 = vector.shape_cast %441 : vector<1x1x1x32x8xbf16> to vector<32x8xbf16>
    %443 = arith.truncf %276 : vector<16x32xf32> to vector<16x32xbf16>
    %cst_380 = arith.constant dense<0.000000e+00> : vector<16x8xf32>
    %444 = tpu.matmul %443, %442, %cst_380 {dimension_numbers = #tpu.dot_dimension_numbers<[1], [0], [0], [1], [0, 0, 1, 1], [], []>} : vector<16x32xbf16>, vector<32x8xbf16>, vector<16x8xf32> -> vector<16x8xf32>
    %c1_381 = arith.constant 1 : index
    %c1_382 = arith.constant 1 : index
    %c3_383 = arith.constant 3 : index
    %c0_384 = arith.constant 0 : index
    %c0_385 = arith.constant 0 : index
    %445 = vector.load %arg4[%c1_381, %c1_382, %c3_383, %c0_384, %c0_385] : memref<2x3x4x1x8xf32, #tpu.memory_space<vmem>>, vector<1x1x1x1x8xf32>
    %446 = vector.shape_cast %445 : vector<1x1x1x1x8xf32> to vector<1x8xf32>
    %447 = vector.broadcast %446 : vector<1x8xf32> to vector<16x8xf32>
    %448 = arith.addf %444, %447 : vector<16x8xf32>
    %c1_386 = arith.constant 1 : index
    %c2_387 = arith.constant 2 : index
    %c3_388 = arith.constant 3 : index
    %c0_389 = arith.constant 0 : index
    %c0_390 = arith.constant 0 : index
    %449 = vector.load %arg3[%c1_386, %c2_387, %c3_388, %c0_389, %c0_390] : memref<2x3x4x32x8xbf16, #tpu.memory_space<vmem>>, vector<1x1x1x32x8xbf16>
    %450 = vector.shape_cast %449 : vector<1x1x1x32x8xbf16> to vector<32x8xbf16>
    %451 = arith.truncf %276 : vector<16x32xf32> to vector<16x32xbf16>
    %cst_391 = arith.constant dense<0.000000e+00> : vector<16x8xf32>
    %452 = tpu.matmul %451, %450, %cst_391 {dimension_numbers = #tpu.dot_dimension_numbers<[1], [0], [0], [1], [0, 0, 1, 1], [], []>} : vector<16x32xbf16>, vector<32x8xbf16>, vector<16x8xf32> -> vector<16x8xf32>
    %c1_392 = arith.constant 1 : index
    %c2_393 = arith.constant 2 : index
    %c3_394 = arith.constant 3 : index
    %c0_395 = arith.constant 0 : index
    %c0_396 = arith.constant 0 : index
    %453 = vector.load %arg4[%c1_392, %c2_393, %c3_394, %c0_395, %c0_396] : memref<2x3x4x1x8xf32, #tpu.memory_space<vmem>>, vector<1x1x1x1x8xf32>
    %454 = vector.shape_cast %453 : vector<1x1x1x1x8xf32> to vector<1x8xf32>
    %455 = vector.broadcast %454 : vector<1x8xf32> to vector<16x8xf32>
    %456 = arith.addf %452, %455 : vector<16x8xf32>
    %457 = vector.shape_cast %440 : vector<16x8xf32> to vector<2x8x8xf32>
    %458 = vector.shape_cast %448 : vector<16x8xf32> to vector<2x8x8xf32>
    %459 = vector.shape_cast %456 : vector<16x8xf32> to vector<2x8x8xf32>
    "tpu.trace_start"() <{level = 10 : i32, message = "bqd,bkd->bqk"}> : () -> ()
    %cst_397 = arith.constant dense<0.000000e+00> : vector<2x8x8xf32>
    %460 = tpu.matmul %457, %458, %cst_397 {dimension_numbers = #tpu.dot_dimension_numbers<[2], [2], [1], [1], [0, 0, 0, 1, 1, 1], [0], [0]>} : vector<2x8x8xf32>, vector<2x8x8xf32>, vector<2x8x8xf32> -> vector<2x8x8xf32>
    "tpu.trace_stop"() : () -> ()
    %cst_398 = arith.constant 0.353553385 : f32
    %461 = vector.broadcast %cst_398 : f32 to vector<2x8x8xf32>
    %462 = arith.mulf %460, %461 : vector<2x8x8xf32>
    %cst_399 = arith.constant dense<0xFF800000> : vector<2x8xf32>
    %463 = vector.multi_reduction <maximumf>, %462, %cst_399 [2] : vector<2x8x8xf32> to vector<2x8xf32>
    %464 = vector.shape_cast %463 : vector<2x8xf32> to vector<2x8x1xf32>
    %465 = vector.broadcast %464 : vector<2x8x1xf32> to vector<2x8x8xf32>
    %466 = arith.subf %462, %465 : vector<2x8x8xf32>
    %467 = math.exp %466 : vector<2x8x8xf32>
    %cst_400 = arith.constant dense<0.000000e+00> : vector<2x8xf32>
    %468 = vector.multi_reduction <add>, %467, %cst_400 [2] : vector<2x8x8xf32> to vector<2x8xf32>
    %469 = vector.shape_cast %468 : vector<2x8xf32> to vector<2x8x1xf32>
    %470 = tpu.reciprocal %469 {approx = true} : vector<2x8x1xf32> -> vector<2x8x1xf32>
    %471 = vector.broadcast %470 : vector<2x8x1xf32> to vector<2x8x8xf32>
    %472 = arith.mulf %467, %471 : vector<2x8x8xf32>
    "tpu.trace_start"() <{level = 10 : i32, message = "bqk,bkd->bqd"}> : () -> ()
    %cst_401 = arith.constant dense<0.000000e+00> : vector<2x8x8xf32>
    %473 = tpu.matmul %472, %459, %cst_401 {dimension_numbers = #tpu.dot_dimension_numbers<[2], [1], [1], [2], [0, 0, 0, 1, 1, 2], [0], [0]>} : vector<2x8x8xf32>, vector<2x8x8xf32>, vector<2x8x8xf32> -> vector<2x8x8xf32>
    "tpu.trace_stop"() : () -> ()
    %474 = vector.shape_cast %473 : vector<2x8x8xf32> to vector<16x8xf32>
    %c1_402 = arith.constant 1 : index
    %c3_403 = arith.constant 3 : index
    %c0_404 = arith.constant 0 : index
    %c0_405 = arith.constant 0 : index
    %475 = vector.load %arg5[%c1_402, %c3_403, %c0_404, %c0_405] : memref<2x4x8x32xbf16, #tpu.memory_space<vmem>>, vector<1x1x8x32xbf16>
    %476 = vector.shape_cast %475 : vector<1x1x8x32xbf16> to vector<8x32xbf16>
    %477 = arith.truncf %474 : vector<16x8xf32> to vector<16x8xbf16>
    %cst_406 = arith.constant dense<0.000000e+00> : vector<16x32xf32>
    %478 = tpu.matmul %477, %476, %cst_406 {dimension_numbers = #tpu.dot_dimension_numbers<[1], [0], [0], [1], [0, 0, 1, 1], [], []>} : vector<16x8xbf16>, vector<8x32xbf16>, vector<16x32xf32> -> vector<16x32xf32>
    %479 = arith.addf %432, %478 : vector<16x32xf32>
    %480 = arith.addf %276, %479 : vector<16x32xf32>
    %481 = vector.broadcast %278 : vector<1x32xf32> to vector<16x32xf32>
    %482 = arith.addf %480, %481 : vector<16x32xf32>
    %cst_407 = arith.constant dense<0.000000e+00> : vector<16xf32>
    %483 = vector.multi_reduction <add>, %482, %cst_407 [1] : vector<16x32xf32> to vector<16xf32>
    %484 = vector.shape_cast %483 : vector<16xf32> to vector<16x1xf32>
    %cst_408 = arith.constant 3.200000e+01 : f32
    %485 = vector.broadcast %cst_408 : f32 to vector<16x1xf32>
    %486 = arith.divf %484, %485 : vector<16x1xf32>
    %487 = vector.broadcast %486 : vector<16x1xf32> to vector<16x32xf32>
    %488 = arith.subf %482, %487 : vector<16x32xf32>
    %489 = arith.mulf %488, %488 : vector<16x32xf32>
    %cst_409 = arith.constant dense<0.000000e+00> : vector<16xf32>
    %490 = vector.multi_reduction <add>, %489, %cst_409 [1] : vector<16x32xf32> to vector<16xf32>
    %491 = vector.shape_cast %490 : vector<16xf32> to vector<16x1xf32>
    %cst_410 = arith.constant 3.200000e+01 : f32
    %492 = vector.broadcast %cst_410 : f32 to vector<16x1xf32>
    %493 = arith.divf %491, %492 : vector<16x1xf32>
    %494 = vector.broadcast %486 : vector<16x1xf32> to vector<16x32xf32>
    %495 = arith.subf %482, %494 : vector<16x32xf32>
    %cst_411 = arith.constant 9.99999974E-6 : f32
    %496 = vector.broadcast %cst_411 : f32 to vector<16x1xf32>
    %497 = arith.addf %493, %496 : vector<16x1xf32>
    %498 = math.rsqrt %497 : vector<16x1xf32>
    %499 = vector.broadcast %498 : vector<16x1xf32> to vector<16x32xf32>
    %500 = arith.mulf %495, %499 : vector<16x32xf32>
    %501 = vector.broadcast %280 : vector<1x32xf32> to vector<16x32xf32>
    %502 = arith.mulf %500, %501 : vector<16x32xf32>
    %503 = vector.broadcast %282 : vector<1x32xf32> to vector<16x32xf32>
    %504 = arith.addf %502, %503 : vector<16x32xf32>
    %c1_412 = arith.constant 1 : index
    %c0_413 = arith.constant 0 : index
    %c0_414 = arith.constant 0 : index
    %505 = vector.load %arg6[%c1_412, %c0_413, %c0_414] : memref<2x32x64xbf16, #tpu.memory_space<vmem>>, vector<1x32x64xbf16>
    %506 = vector.shape_cast %505 : vector<1x32x64xbf16> to vector<32x64xbf16>
    %507 = arith.truncf %504 : vector<16x32xf32> to vector<16x32xbf16>
    %cst_415 = arith.constant dense<0.000000e+00> : vector<16x64xf32>
    %508 = tpu.matmul %507, %506, %cst_415 {dimension_numbers = #tpu.dot_dimension_numbers<[1], [0], [0], [1], [0, 0, 1, 1], [], []>} : vector<16x32xbf16>, vector<32x64xbf16>, vector<16x64xf32> -> vector<16x64xf32>
    %509 = vector.broadcast %284 : vector<1x64xf32> to vector<16x64xf32>
    %510 = arith.addf %508, %509 : vector<16x64xf32>
    %cst_416 = arith.constant 0.000000e+00 : f32
    %511 = vector.broadcast %cst_416 : f32 to vector<16x64xf32>
    %512 = arith.maximumf %510, %511 : vector<16x64xf32>
    %c1_417 = arith.constant 1 : index
    %c0_418 = arith.constant 0 : index
    %c0_419 = arith.constant 0 : index
    %513 = vector.load %arg7[%c1_417, %c0_418, %c0_419] : memref<2x64x32xbf16, #tpu.memory_space<vmem>>, vector<1x64x32xbf16>
    %514 = vector.shape_cast %513 : vector<1x64x32xbf16> to vector<64x32xbf16>
    %515 = arith.truncf %512 : vector<16x64xf32> to vector<16x64xbf16>
    %cst_420 = arith.constant dense<0.000000e+00> : vector<16x32xf32>
    %516 = tpu.matmul %515, %514, %cst_420 {dimension_numbers = #tpu.dot_dimension_numbers<[1], [0], [0], [1], [0, 0, 1, 1], [], []>} : vector<16x64xbf16>, vector<64x32xbf16>, vector<16x32xf32> -> vector<16x32xf32>
    %517 = arith.addf %504, %516 : vector<16x32xf32>
    %518 = vector.broadcast %286 : vector<1x32xf32> to vector<16x32xf32>
    %519 = arith.addf %517, %518 : vector<16x32xf32>
    %cst_421 = arith.constant dense<0.000000e+00> : vector<16xf32>
    %520 = vector.multi_reduction <add>, %519, %cst_421 [1] : vector<16x32xf32> to vector<16xf32>
    %521 = vector.shape_cast %520 : vector<16xf32> to vector<16x1xf32>
    %cst_422 = arith.constant 3.200000e+01 : f32
    %522 = vector.broadcast %cst_422 : f32 to vector<16x1xf32>
    %523 = arith.divf %521, %522 : vector<16x1xf32>
    %524 = vector.broadcast %523 : vector<16x1xf32> to vector<16x32xf32>
    %525 = arith.subf %519, %524 : vector<16x32xf32>
    %526 = arith.mulf %525, %525 : vector<16x32xf32>
    %cst_423 = arith.constant dense<0.000000e+00> : vector<16xf32>
    %527 = vector.multi_reduction <add>, %526, %cst_423 [1] : vector<16x32xf32> to vector<16xf32>
    %528 = vector.shape_cast %527 : vector<16xf32> to vector<16x1xf32>
    %cst_424 = arith.constant 3.200000e+01 : f32
    %529 = vector.broadcast %cst_424 : f32 to vector<16x1xf32>
    %530 = arith.divf %528, %529 : vector<16x1xf32>
    %531 = vector.broadcast %523 : vector<16x1xf32> to vector<16x32xf32>
    %532 = arith.subf %519, %531 : vector<16x32xf32>
    %cst_425 = arith.constant 9.99999974E-6 : f32
    %533 = vector.broadcast %cst_425 : f32 to vector<16x1xf32>
    %534 = arith.addf %530, %533 : vector<16x1xf32>
    %535 = math.rsqrt %534 : vector<16x1xf32>
    %536 = vector.broadcast %535 : vector<16x1xf32> to vector<16x32xf32>
    %537 = arith.mulf %532, %536 : vector<16x32xf32>
    %538 = vector.broadcast %288 : vector<1x32xf32> to vector<16x32xf32>
    %539 = arith.mulf %537, %538 : vector<16x32xf32>
    %540 = vector.broadcast %290 : vector<1x32xf32> to vector<16x32xf32>
    %541 = arith.addf %539, %540 : vector<16x32xf32>
    %c0_426 = arith.constant 0 : index
    %c0_427 = arith.constant 0 : index
    %542 = vector.load %arg9[%c0_426, %c0_427] : memref<16x32xf32, #tpu.memory_space<vmem>>, vector<16x32xf32>
    tpu.vector_store %arg9[%c0_426, %c0_427], %541 {strides = array<i32>} : memref<16x32xf32, #tpu.memory_space<vmem>>, vector<16x32xf32>,
    return
  }
}

</mosaic_0001>

<llo_original>
// kernel: tpu_custom_call.1
$region0: #{tpu_custom_call.1}
  #allocation0 [shape = 'u32[]', space=smem, size = 0x4, offset = 0x4, fixed_abs, tag = 'smem constant byte address 0x4 - core index']
  #allocation1 [shape = 'u32[72,128]{1,0:T(1,128)}', space=vmem, size = 0x9000, scoped, tag = 'internal scratch']
  %s0 = inlined_call_operand.vmem [shape: s32[16,1], index: 0, kind: input, shape index: {}]
  %s1 = inlined_call_operand.vmem [shape: f32[64,32], index: 1, kind: input, shape index: {}]
  %s2 = inlined_call_operand.vmem [shape: f32[16,32], index: 2, kind: input, shape index: {}]
  %s3 = inlined_call_operand.vmem [shape: bf16[2,3,4,32,8], index: 3, kind: input, shape index: {}]
  %s4 = inlined_call_operand.vmem [shape: f32[2,3,4,1,8], index: 4, kind: input, shape index: {}]
  %s5 = inlined_call_operand.vmem [shape: bf16[2,4,8,32], index: 5, kind: input, shape index: {}]
  %s6 = inlined_call_operand.vmem [shape: bf16[2,32,64], index: 6, kind: input, shape index: {}]
  %s7 = inlined_call_operand.vmem [shape: bf16[2,64,32], index: 7, kind: input, shape index: {}]
  %s8 = inlined_call_operand.vmem [shape: f32[2,8,64], index: 8, kind: input, shape index: {}]
  %s9 = inlined_call_operand.hbm [shape: f32[16,32], index: 9, kind: output, shape index: {}]
  %s10 = sld [smem:[#allocation0]]
  $region46: #{tpu_custom_call.1} parent=0
    _
  %s12 = ssub.s32 1, %s10
  %s13 = scalar_select 0, %s12, %s10
  $region1: #{tpu_custom_call.1} parent=0
    #allocation2 [shape = 'u8[8192]{0}', space=vmem, size = 0x2000, scoped, tag = 'output window, operand 0, single buffered']
    #allocation3 [shape = 's32[1]{0}', space=sflag, size = 0x4, scoped, tag = 'scoped memory for tpu_custom_call.1']
    %14 = vsyncpa [#allocation3], 0
    // Predicated region
    $region2: #{tpu_custom_call.1} parent=1 // pred_check
      _
    $region3: #{tpu_custom_call.1} parent=1 // pred_check_branch
      %16 = sbr.rel (0) target = $region5
    $region4: #{tpu_custom_call.1} parent=1 // pred_region
      _
    $region5: #{tpu_custom_call.1} parent=1 // pred_fallthru
      _
    // Predicated region
    $region6: #{tpu_custom_call.1} parent=1 // pred_check
      _
    $region7: #{tpu_custom_call.1} parent=1 // pred_check_branch
      %18 = sbr.rel (0) target = $region9
    $region8: #{tpu_custom_call.1} parent=1 // pred_region
      _
    $region9: #{tpu_custom_call.1} parent=1 // pred_fallthru
      _
    // Predicated region
    $region10: #{tpu_custom_call.1} parent=1 // pred_check
      _
    $region11: #{tpu_custom_call.1} parent=1 // pred_check_branch
      %20 = sbr.rel (0) target = $region13
    $region12: #{tpu_custom_call.1} parent=1 // pred_region
      _
    $region13: #{tpu_custom_call.1} parent=1 // pred_fallthru
      _
    // Predicated region
    $region14: #{tpu_custom_call.1} parent=1 // pred_check
      _
    $region15: #{tpu_custom_call.1} parent=1 // pred_check_branch
      %22 = sbr.rel (0) target = $region17
    $region16: #{tpu_custom_call.1} parent=1 // pred_region
      _
    $region17: #{tpu_custom_call.1} parent=1 // pred_fallthru
      _
    // Predicated region
    $region18: #{tpu_custom_call.1} parent=1 // pred_check
      _
    $region19: #{tpu_custom_call.1} parent=1 // pred_check_branch
      %24 = sbr.rel (0) target = $region21
    $region20: #{tpu_custom_call.1} parent=1 // pred_region
      _
    $region21: #{tpu_custom_call.1} parent=1 // pred_fallthru
      _
    // Predicated region
    $region22: #{tpu_custom_call.1} parent=1 // pred_check
      _
    $region23: #{tpu_custom_call.1} parent=1 // pred_check_branch
      %26 = sbr.rel (0) target = $region25
    $region24: #{tpu_custom_call.1} parent=1 // pred_region
      _
    $region25: #{tpu_custom_call.1} parent=1 // pred_fallthru
      _
    // Predicated region
    $region26: #{tpu_custom_call.1} parent=1 // pred_check
      _
    $region27: #{tpu_custom_call.1} parent=1 // pred_check_branch
      %28 = sbr.rel (0) target = $region29
    $region28: #{tpu_custom_call.1} parent=1 // pred_region
      _
    $region29: #{tpu_custom_call.1} parent=1 // pred_fallthru
      _
    // Predicated region
    $region30: #{tpu_custom_call.1} parent=1 // pred_check
      _
    $region31: #{tpu_custom_call.1} parent=1 // pred_check_branch
      %30 = sbr.rel (0) target = $region33
    $region32: #{tpu_custom_call.1} parent=1 // pred_region
      _
    $region33: #{tpu_custom_call.1} parent=1 // pred_fallthru
      _
    // Predicated region
    $region34: #{tpu_custom_call.1} parent=1 // pred_check
      _
    $region35: #{tpu_custom_call.1} parent=1 // pred_check_branch
      %32 = sbr.rel (0) target = $region37
    $region36: #{tpu_custom_call.1} parent=1 // pred_region
      _
    $region37: #{tpu_custom_call.1} parent=1 // pred_fallthru
      _
    %v34 = vld [vmem:[%s0] sm:$0xff]
    %v35 = vld [vmem:[%s0 + $0x8] sm:$0xff]
    %v36 = vlaneseq
    %v37 = vand.u32 %v36, 127
    %38 = vset.pattern.permute.xlu0 0
    %39 = vperm.xlu0 %38, %v34
    %v40 = vpop.permute.xlu0 %39
    %41 = vset.pattern.permute.xlu0 0
    %42 = vperm.xlu0 %41, %v35
    %v43 = vpop.permute.xlu0 %42
    %vm44 = vcmp.eq.s32.totalorder %v40, %v37
    %vm45 = vcmp.eq.s32.totalorder %v43, %v37
    %v46 = vsel %vm44, 1, 0
    %v47 = vsel %vm45, 1, 0
    %v48 = vcvt.s32.f32 %v46
    %v49 = vcvt.s32.f32 %v47
    %v50 = vld [vmem:[%s1] sm:$0xff]
    %v51 = vld [vmem:[%s1 + $0x8] sm:$0xff]
    %v52 = vld [vmem:[%s1 + $0x10] sm:$0xff]
    %v53 = vld [vmem:[%s1 + $0x18] sm:$0xff]
    %v54 = vld [vmem:[%s1 + $0x20] sm:$0xff]
    %v55 = vld [vmem:[%s1 + $0x28] sm:$0xff]
    %v56 = vld [vmem:[%s1 + $0x30] sm:$0xff]
    %v57 = vld [vmem:[%s1 + $0x38] sm:$0xff]
    %vm58 = vcmask 523264
    %v60 = vsel %vm58, %v48, 0
    %v63 = vsel %vm58, %v49, 0
    %65 = vmatpush.msra.mxu0 0.0
    %66 = vmatpush.msra.mxu0 0.0
    %67 = vmatpush.msra.mxu0 0.0
    %68 = vmatpush.msra.mxu0 0.0
    %69 = vmatpush.msra.mxu0 0.0
    %70 = vmatpush.msra.mxu0 0.0
    %71 = vmatpush.msra.mxu0 0.0
    %72 = vmatpush.msra.mxu0 0.0
    %73 = vmatpush.msra.mxu0 %v57
    %74 = vmatpush.msra.mxu0 %v56
    %75 = vmatpush.msra.mxu0 %v55
    %76 = vmatpush.msra.mxu0 %v54
    %77 = vmatpush.msra.mxu0 %v53
    %78 = vmatpush.msra.mxu0 %v52
    %79 = vmatpush.msra.mxu0 %v51
    %80 = vmatpush.msra.mxu0 %v50
    %81 = vmatmul.f32.gmra.mxu0 %v60
    %v82 = vpop.f32.mrf.mxu0
    %v83 = vadd.f32 0.0, %v82
    %84 = vmatmul.f32.gmra.mxu0 %v63
    %v85 = vpop.f32.mrf.mxu0
    %v86 = vadd.f32 0.0, %v85
    %87 = vdwg.mxu0
    %v88 = vmul.f32 %v83, 5.656854
    %v89 = vmul.f32 %v86, 5.656854
    %v90 = vld [vmem:[%s2] sm:$0xff]
    %v91 = vld [vmem:[%s2 + $0x8] sm:$0xff]
    %v92 = vadd.f32 %v88, %v90
    %v93 = vadd.f32 %v89, %v91
    %v94 = vld [vmem:[%s8] sm:$0x1]
    %v95 = vld [vmem:[%s8 + $0x1] sm:$0x1]
    %v96 = vld [vmem:[%s8 + $0x2] sm:$0x1]
    %v97 = vld [vmem:[%s8 + $0x3] sm:$0x1]
    %v98 = vld [vmem:[%s8 + $0x4] sm:$0x1]
    %v99 = vld [vmem:[%s8 + $0x5] sm:$0x1]
    %v100 = vld [vmem:[%s8 + $0x6] sm:$0x1]
    %v101 = vld [vmem:[%s3] sm:$0xf]
    %v102 = vld [vmem:[%s3 + $0x4] sm:$0xf]
    %v103 = vld [vmem:[%s3 + $0x8] sm:$0xf]
    %v104 = vld [vmem:[%s3 + $0xc] sm:$0xf]
    %v105 = vpack.c.bf16 %v93, %v92
    %v106 = vld [vmem:[%s4] sm:$0x1]
    %v108 = vperm.slane %v106, 0
    %v114 = vunpack.c.l.b16 %v101
    %v115 = vunpack.c.l.b16 %v102
    %v116 = vunpack.c.l.b16 %v103
    %v117 = vunpack.c.l.b16 %v104
    %v118 = vpack.c.b16 %v115, %v114
    %v119 = vpack.c.b16 %v117, %v116
    %vm122 = vcmask 261120
    %v124 = vsel %vm122, %v105, 0
    %126 = vmatpush.bf16.msra.mxu0 0
    %127 = vmatpush.bf16.msra.mxu0 0
    %128 = vmatpush.bf16.msra.mxu0 0
    %129 = vmatpush.bf16.msra.mxu0 0
    %130 = vmatpush.bf16.msra.mxu0 0
    %131 = vmatpush.bf16.msra.mxu0 0
    %132 = vmatpush.bf16.msra.mxu0 %v119
    %133 = vmatpush.bf16.msra.mxu0 %v118
    %134 = vmatmul.bf16.gmra.mxu0 %v124
    %v135 = vpop.f32.mrf.mxu0
    %v136 = vadd.f32 %v108, %v135
    %v137 = vpop.f32.mrf.mxu0
    %v138 = vadd.f32 %v108, %v137
    %139 = vdwg.mxu0
    %s140 = scalar_lea.vmem %s3, 64
    %v141 = vld [vmem:[%s140] sm:$0xf]
    %v142 = vld [vmem:[%s140 + $0x4] sm:$0xf]
    %v143 = vld [vmem:[%s140 + $0x8] sm:$0xf]
    %v144 = vld [vmem:[%s140 + $0xc] sm:$0xf]
    %s145 = scalar_lea.vmem %s4, 4
    %v146 = vld [vmem:[%s145] sm:$0x1]
    %v148 = vperm.slane %v146, 0
    %v154 = vunpack.c.l.b16 %v141
    %v155 = vunpack.c.l.b16 %v142
    %v156 = vunpack.c.l.b16 %v143
    %v157 = vunpack.c.l.b16 %v144
    %v158 = vpack.c.b16 %v155, %v154
    %v159 = vpack.c.b16 %v157, %v156
    %162 = vmatpush.bf16.msra.mxu0 0
    %163 = vmatpush.bf16.msra.mxu0 0
    %164 = vmatpush.bf16.msra.mxu0 0
    %165 = vmatpush.bf16.msra.mxu0 0
    %166 = vmatpush.bf16.msra.mxu0 0
    %167 = vmatpush.bf16.msra.mxu0 0
    %168 = vmatpush.bf16.msra.mxu0 %v159
    %169 = vmatpush.bf16.msra.mxu0 %v158
    %170 = vmatmul.bf16.gmra.mxu0 %v124
    %v171 = vpop.f32.mrf.mxu0
    %v172 = vadd.f32 %v148, %v171
    %v173 = vpop.f32.mrf.mxu0
    %v174 = vadd.f32 %v148, %v173
    %175 = vdwg.mxu0
    %s176 = scalar_lea.vmem %s3, 128
    %v177 = vld [vmem:[%s176] sm:$0xf]
    %v178 = vld [vmem:[%s176 + $0x4] sm:$0xf]
    %v179 = vld [vmem:[%s176 + $0x8] sm:$0xf]
    %v180 = vld [vmem:[%s176 + $0xc] sm:$0xf]
    %s181 = scalar_lea.vmem %s4, 8
    %v182 = vld [vmem:[%s181] sm:$0x1]
    %v184 = vperm.slane %v182, 0
    %v190 = vunpack.c.l.b16 %v177
    %v191 = vunpack.c.l.b16 %v178
    %v192 = vunpack.c.l.b16 %v179
    %v193 = vunpack.c.l.b16 %v180
    %v194 = vpack.c.b16 %v191, %v190
    %v195 = vpack.c.b16 %v193, %v192
    %198 = vmatpush.bf16.msra.mxu0 0
    %199 = vmatpush.bf16.msra.mxu0 0
    %200 = vmatpush.bf16.msra.mxu0 0
    %201 = vmatpush.bf16.msra.mxu0 0
    %202 = vmatpush.bf16.msra.mxu0 0
    %203 = vmatpush.bf16.msra.mxu0 0
    %204 = vmatpush.bf16.msra.mxu0 %v195
    %205 = vmatpush.bf16.msra.mxu0 %v194
    %206 = vmatmul.bf16.gmra.mxu0 %v124
    %v207 = vpop.f32.mrf.mxu0
    %v208 = vadd.f32 %v184, %v207
    %v209 = vpop.f32.mrf.mxu0
    %v210 = vadd.f32 %v184, %v209
    %211 = vdwg.mxu0
    %vm212 = vcmask 64512
    %v214 = vsel %vm212, %v136, 0
    %v217 = vsel %vm212, %v172, 0
    %219 = vmatpush.xpose.msra.mxu0 0.0
    %220 = vmatpush.xpose.msra.mxu0 0.0
    %221 = vmatpush.xpose.msra.mxu0 0.0
    %222 = vmatpush.xpose.msra.mxu0 0.0
    %223 = vmatpush.xpose.msra.mxu0 0.0
    %224 = vmatpush.xpose.msra.mxu0 0.0
    %225 = vmatpush.xpose.msra.mxu0 0.0
    %226 = vmatpush.xpose.msra.mxu0 0.0
    %227 = vmatpush.xpose.msra.mxu0 0.0
    %228 = vmatpush.xpose.msra.mxu0 0.0
    %229 = vmatpush.xpose.msra.mxu0 0.0
    %230 = vmatpush.xpose.msra.mxu0 0.0
    %231 = vmatpush.xpose.msra.mxu0 0.0
    %232 = vmatpush.xpose.msra.mxu0 0.0
    %233 = vmatpush.xpose.msra.mxu0 0.0
    %234 = vmatpush.xpose.msra.mxu0 %v217
    %235 = vmatmul.f32.gmra.mxu0 %v214
    %v236 = vpop.f32.mrf.mxu0
    %v237 = vadd.f32 0.0, %v236
    %238 = vdwg.mxu0
    %v240 = vsel %vm212, %v138, 0
    %v243 = vsel %vm212, %v174, 0
    %245 = vmatpush.xpose.msra.mxu0 0.0
    %246 = vmatpush.xpose.msra.mxu0 0.0
    %247 = vmatpush.xpose.msra.mxu0 0.0
    %248 = vmatpush.xpose.msra.mxu0 0.0
    %249 = vmatpush.xpose.msra.mxu0 0.0
    %250 = vmatpush.xpose.msra.mxu0 0.0
    %251 = vmatpush.xpose.msra.mxu0 0.0
    %252 = vmatpush.xpose.msra.mxu0 0.0
    %253 = vmatpush.xpose.msra.mxu0 0.0
    %254 = vmatpush.xpose.msra.mxu0 0.0
    %255 = vmatpush.xpose.msra.mxu0 0.0
    %256 = vmatpush.xpose.msra.mxu0 0.0
    %257 = vmatpush.xpose.msra.mxu0 0.0
    %258 = vmatpush.xpose.msra.mxu0 0.0
    %259 = vmatpush.xpose.msra.mxu0 0.0
    %260 = vmatpush.xpose.msra.mxu0 %v243
    %261 = vmatmul.f32.gmra.mxu0 %v240
    %v262 = vpop.f32.mrf.mxu0
    %v263 = vadd.f32 0.0, %v262
    %264 = vdwg.mxu0
    %v265 = vmul.f32 %v237, 0.35355338
    %v266 = vmul.f32 %v263, 0.35355338
    %v267 = vsel %vm212, %v265, -inf
    %268 = vmax.xlane.f32.xlu0 %v267
    %v269 = vpop.xlane.xlu0 %268
    %v270 = vsel %vm212, %v266, -inf
    %271 = vmax.xlane.f32.xlu0 %v270
    %v272 = vpop.xlane.xlu0 %271
    %v273 = vsub.f32 %v265, %v269
    %v274 = vsub.f32 %v266, %v272
    %v275 = vmul.f32 %v273, 1.442695
    %v276 = vpow.pop %v275
    %v277 = vmul.f32 %v274, 1.442695
    %v278 = vpow.pop %v277
    %v279 = vsel %vm212, %v276, 0.0
    %280 = vadd.xlane.f32.xlu0 %v279
    %v281 = vpop.xlane.xlu0 %280
    %v282 = vsel %vm212, %v278, 0.0
    %283 = vadd.xlane.f32.xlu0 %v282
    %v284 = vpop.xlane.xlu0 %283
    %v285 = vrcp.pop %v281
    %v286 = vrcp.pop %v284
    %v287 = vmul.f32 %v276, %v285
    %v288 = vmul.f32 %v278, %v286
    %v290 = vsel %vm212, %v287, 0
    %292 = vmatpush.msra.mxu0 0.0
    %293 = vmatpush.msra.mxu0 0.0
    %294 = vmatpush.msra.mxu0 0.0
    %295 = vmatpush.msra.mxu0 0.0
    %296 = vmatpush.msra.mxu0 0.0
    %297 = vmatpush.msra.mxu0 0.0
    %298 = vmatpush.msra.mxu0 0.0
    %299 = vmatpush.msra.mxu0 0.0
    %300 = vmatpush.msra.mxu0 0.0
    %301 = vmatpush.msra.mxu0 0.0
    %302 = vmatpush.msra.mxu0 0.0
    %303 = vmatpush.msra.mxu0 0.0
    %304 = vmatpush.msra.mxu0 0.0
    %305 = vmatpush.msra.mxu0 0.0
    %306 = vmatpush.msra.mxu0 0.0
    %307 = vmatpush.msra.mxu0 %v208
    %308 = vmatmul.f32.gmra.mxu0 %v290
    %v309 = vpop.f32.mrf.mxu0
    %v310 = vadd.f32 0.0, %v309
    %311 = vdwg.mxu0
    %v313 = vsel %vm212, %v288, 0
    %315 = vmatpush.msra.mxu0 0.0
    %316 = vmatpush.msra.mxu0 0.0
    %317 = vmatpush.msra.mxu0 0.0
    %318 = vmatpush.msra.mxu0 0.0
    %319 = vmatpush.msra.mxu0 0.0
    %320 = vmatpush.msra.mxu0 0.0
    %321 = vmatpush.msra.mxu0 0.0
    %322 = vmatpush.msra.mxu0 0.0
    %323 = vmatpush.msra.mxu0 0.0
    %324 = vmatpush.msra.mxu0 0.0
    %325 = vmatpush.msra.mxu0 0.0
    %326 = vmatpush.msra.mxu0 0.0
    %327 = vmatpush.msra.mxu0 0.0
    %328 = vmatpush.msra.mxu0 0.0
    %329 = vmatpush.msra.mxu0 0.0
    %330 = vmatpush.msra.mxu0 %v210
    %331 = vmatmul.f32.gmra.mxu0 %v313
    %v332 = vpop.f32.mrf.mxu0
    %v333 = vadd.f32 0.0, %v332
    %334 = vdwg.mxu0
    %v335 = vld [vmem:[%s5] sm:$0xf]
    %v336 = vpack.c.bf16 %v333, %v310
    %s337 = scalar_lea.vmem %s3, 16
    %v338 = vld [vmem:[%s337] sm:$0xf]
    %v339 = vld [vmem:[%s337 + $0x4] sm:$0xf]
    %v340 = vld [vmem:[%s337 + $0x8] sm:$0xf]
    %v341 = vld [vmem:[%s337 + $0xc] sm:$0xf]
    %s342 = scalar_lea.vmem %s4, 1
    %v343 = vld [vmem:[%s342] sm:$0x1]
    %v345 = vperm.slane %v343, 0
    %v351 = vunpack.c.l.b16 %v338
    %v352 = vunpack.c.l.b16 %v339
    %v353 = vunpack.c.l.b16 %v340
    %v354 = vunpack.c.l.b16 %v341
    %v355 = vpack.c.b16 %v352, %v351
    %v356 = vpack.c.b16 %v354, %v353
    %359 = vmatpush.bf16.msra.mxu0 0
    %360 = vmatpush.bf16.msra.mxu0 0
    %361 = vmatpush.bf16.msra.mxu0 0
    %362 = vmatpush.bf16.msra.mxu0 0
    %363 = vmatpush.bf16.msra.mxu0 0
    %364 = vmatpush.bf16.msra.mxu0 0
    %365 = vmatpush.bf16.msra.mxu0 %v356
    %366 = vmatpush.bf16.msra.mxu0 %v355
    %367 = vmatmul.bf16.gmra.mxu0 %v124
    %v368 = vpop.f32.mrf.mxu0
    %v369 = vadd.f32 %v345, %v368
    %v370 = vpop.f32.mrf.mxu0
    %v371 = vadd.f32 %v345, %v370
    %372 = vdwg.mxu0
    %s373 = scalar_lea.vmem %s3, 80
    %v374 = vld [vmem:[%s373] sm:$0xf]
    %v375 = vld [vmem:[%s373 + $0x4] sm:$0xf]
    %v376 = vld [vmem:[%s373 + $0x8] sm:$0xf]
    %v377 = vld [vmem:[%s373 + $0xc] sm:$0xf]
    %s378 = scalar_lea.vmem %s4, 5
    %v379 = vld [vmem:[%s378] sm:$0x1]
    %v381 = vperm.slane %v379, 0
    %v387 = vunpack.c.l.b16 %v374
    %v388 = vunpack.c.l.b16 %v375
    %v389 = vunpack.c.l.b16 %v376
    %v390 = vunpack.c.l.b16 %v377
    %v391 = vpack.c.b16 %v388, %v387
    %v392 = vpack.c.b16 %v390, %v389
    %395 = vmatpush.bf16.msra.mxu0 0
    %396 = vmatpush.bf16.msra.mxu0 0
    %397 = vmatpush.bf16.msra.mxu0 0
    %398 = vmatpush.bf16.msra.mxu0 0
    %399 = vmatpush.bf16.msra.mxu0 0
    %400 = vmatpush.bf16.msra.mxu0 0
    %401 = vmatpush.bf16.msra.mxu0 %v392
    %402 = vmatpush.bf16.msra.mxu0 %v391
    %403 = vmatmul.bf16.gmra.mxu0 %v124
    %v404 = vpop.f32.mrf.mxu0
    %v405 = vadd.f32 %v381, %v404
    %v406 = vpop.f32.mrf.mxu0
    %v407 = vadd.f32 %v381, %v406
    %408 = vdwg.mxu0
    %s409 = scalar_lea.vmem %s3, 144
    %v410 = vld [vmem:[%s409] sm:$0xf]
    %v411 = vld [vmem:[%s409 + $0x4] sm:$0xf]
    %v412 = vld [vmem:[%s409 + $0x8] sm:$0xf]
    %v413 = vld [vmem:[%s409 + $0xc] sm:$0xf]
    %s414 = scalar_lea.vmem %s4, 9
    %v415 = vld [vmem:[%s414] sm:$0x1]
    %v417 = vperm.slane %v415, 0
    %v423 = vunpack.c.l.b16 %v410
    %v424 = vunpack.c.l.b16 %v411
    %v425 = vunpack.c.l.b16 %v412
    %v426 = vunpack.c.l.b16 %v413
    %v427 = vpack.c.b16 %v424, %v423
    %v428 = vpack.c.b16 %v426, %v425
    %431 = vmatpush.bf16.msra.mxu0 0
    %432 = vmatpush.bf16.msra.mxu0 0
    %433 = vmatpush.bf16.msra.mxu0 0
    %434 = vmatpush.bf16.msra.mxu0 0
    %435 = vmatpush.bf16.msra.mxu0 0
    %436 = vmatpush.bf16.msra.mxu0 0
    %437 = vmatpush.bf16.msra.mxu0 %v428
    %438 = vmatpush.bf16.msra.mxu0 %v427
    %439 = vmatmul.bf16.gmra.mxu0 %v124
    %v440 = vpop.f32.mrf.mxu0
    %v441 = vadd.f32 %v417, %v440
    %v442 = vpop.f32.mrf.mxu0
    %v443 = vadd.f32 %v417, %v442
    %444 = vdwg.mxu0
    %v446 = vsel %vm212, %v369, 0
    %v449 = vsel %vm212, %v405, 0
    %451 = vmatpush.xpose.msra.mxu0 0.0
    %452 = vmatpush.xpose.msra.mxu0 0.0
    %453 = vmatpush.xpose.msra.mxu0 0.0
    %454 = vmatpush.xpose.msra.mxu0 0.0
    %455 = vmatpush.xpose.msra.mxu0 0.0
    %456 = vmatpush.xpose.msra.mxu0 0.0
    %457 = vmatpush.xpose.msra.mxu0 0.0
    %458 = vmatpush.xpose.msra.mxu0 0.0
    %459 = vmatpush.xpose.msra.mxu0 0.0
    %460 = vmatpush.xpose.msra.mxu0 0.0
    %461 = vmatpush.xpose.msra.mxu0 0.0
    %462 = vmatpush.xpose.msra.mxu0 0.0
    %463 = vmatpush.xpose.msra.mxu0 0.0
    %464 = vmatpush.xpose.msra.mxu0 0.0
    %465 = vmatpush.xpose.msra.mxu0 0.0
    %466 = vmatpush.xpose.msra.mxu0 %v449
    %467 = vmatmul.f32.gmra.mxu0 %v446
    %v468 = vpop.f32.mrf.mxu0
    %v469 = vadd.f32 0.0, %v468
    %470 = vdwg.mxu0
    %v472 = vsel %vm212, %v371, 0
    %v475 = vsel %vm212, %v407, 0
    %477 = vmatpush.xpose.msra.mxu0 0.0
    %478 = vmatpush.xpose.msra.mxu0 0.0
    %479 = vmatpush.xpose.msra.mxu0 0.0
    %480 = vmatpush.xpose.msra.mxu0 0.0
    %481 = vmatpush.xpose.msra.mxu0 0.0
    %482 = vmatpush.xpose.msra.mxu0 0.0
    %483 = vmatpush.xpose.msra.mxu0 0.0
    %484 = vmatpush.xpose.msra.mxu0 0.0
    %485 = vmatpush.xpose.msra.mxu0 0.0
    %486 = vmatpush.xpose.msra.mxu0 0.0
    %487 = vmatpush.xpose.msra.mxu0 0.0
    %488 = vmatpush.xpose.msra.mxu0 0.0
    %489 = vmatpush.xpose.msra.mxu0 0.0
    %490 = vmatpush.xpose.msra.mxu0 0.0
    %491 = vmatpush.xpose.msra.mxu0 0.0
    %492 = vmatpush.xpose.msra.mxu0 %v475
    %493 = vmatmul.f32.gmra.mxu0 %v472
    %v494 = vpop.f32.mrf.mxu0
    %v495 = vadd.f32 0.0, %v494
    %496 = vdwg.mxu0
    %v497 = vmul.f32 %v469, 0.35355338
    %v498 = vmul.f32 %v495, 0.35355338
    %v499 = vsel %vm212, %v497, -inf
    %500 = vmax.xlane.f32.xlu0 %v499
    %v501 = vpop.xlane.xlu0 %500
    %v502 = vsel %vm212, %v498, -inf
    %503 = vmax.xlane.f32.xlu0 %v502
    %v504 = vpop.xlane.xlu0 %503
    %v505 = vsub.f32 %v497, %v501
    %v506 = vsub.f32 %v498, %v504
    %v507 = vmul.f32 %v505, 1.442695
    %v508 = vpow.pop %v507
    %v509 = vmul.f32 %v506, 1.442695
    %v510 = vpow.pop %v509
    %v511 = vsel %vm212, %v508, 0.0
    %512 = vadd.xlane.f32.xlu0 %v511
    %v513 = vpop.xlane.xlu0 %512
    %v514 = vsel %vm212, %v510, 0.0
    %515 = vadd.xlane.f32.xlu0 %v514
    %v516 = vpop.xlane.xlu0 %515
    %v517 = vrcp.pop %v513
    %v518 = vrcp.pop %v516
    %v519 = vmul.f32 %v508, %v517
    %v520 = vmul.f32 %v510, %v518
    %v522 = vsel %vm212, %v519, 0
    %524 = vmatpush.msra.mxu0 0.0
    %525 = vmatpush.msra.mxu0 0.0
    %526 = vmatpush.msra.mxu0 0.0
    %527 = vmatpush.msra.mxu0 0.0
    %528 = vmatpush.msra.mxu0 0.0
    %529 = vmatpush.msra.mxu0 0.0
    %530 = vmatpush.msra.mxu0 0.0
    %531 = vmatpush.msra.mxu0 0.0
    %532 = vmatpush.msra.mxu0 0.0
    %533 = vmatpush.msra.mxu0 0.0
    %534 = vmatpush.msra.mxu0 0.0
    %535 = vmatpush.msra.mxu0 0.0
    %536 = vmatpush.msra.mxu0 0.0
    %537 = vmatpush.msra.mxu0 0.0
    %538 = vmatpush.msra.mxu0 0.0
    %539 = vmatpush.msra.mxu0 %v441
    %540 = vmatmul.f32.gmra.mxu0 %v522
    %v541 = vpop.f32.mrf.mxu0
    %v542 = vadd.f32 0.0, %v541
    %543 = vdwg.mxu0
    %v545 = vsel %vm212, %v520, 0
    %547 = vmatpush.msra.mxu0 0.0
    %548 = vmatpush.msra.mxu0 0.0
    %549 = vmatpush.msra.mxu0 0.0
    %550 = vmatpush.msra.mxu0 0.0
    %551 = vmatpush.msra.mxu0 0.0
    %552 = vmatpush.msra.mxu0 0.0
    %553 = vmatpush.msra.mxu0 0.0
    %554 = vmatpush.msra.mxu0 0.0
    %555 = vmatpush.msra.mxu0 0.0
    %556 = vmatpush.msra.mxu0 0.0
    %557 = vmatpush.msra.mxu0 0.0
    %558 = vmatpush.msra.mxu0 0.0
    %559 = vmatpush.msra.mxu0 0.0
    %560 = vmatpush.msra.mxu0 0.0
    %561 = vmatpush.msra.mxu0 0.0
    %562 = vmatpush.msra.mxu0 %v443
    %563 = vmatmul.f32.gmra.mxu0 %v545
    %v564 = vpop.f32.mrf.mxu0
    %v565 = vadd.f32 0.0, %v564
    %566 = vdwg.mxu0
    %s567 = scalar_lea.vmem %s5, 4
    %v568 = vld [vmem:[%s567] sm:$0xf]
    %v569 = vpack.c.bf16 %v565, %v542
    %v571 = vsel %vm212, %v569, 0
    %vm573 = vcmask 1043456
    %v575 = vsel %vm573, %v568, 0
    %577 = vmatpush.bf16.msra.mxu0 0
    %578 = vmatpush.bf16.msra.mxu0 0
    %579 = vmatpush.bf16.msra.mxu0 0
    %580 = vmatpush.bf16.msra.mxu0 0
    %581 = vmatpush.bf16.msra.mxu0 0
    %582 = vmatpush.bf16.msra.mxu0 0
    %583 = vmatpush.bf16.msra.mxu0 0
    %584 = vmatpush.bf16.msra.mxu0 %v575
    %585 = vmatmul.bf16.gmra.mxu0 %v571
    %v586 = vpop.f32.mrf.mxu0
    %v587 = vadd.f32 0.0, %v586
    %v588 = vpop.f32.mrf.mxu0
    %v589 = vadd.f32 0.0, %v588
    %590 = vdwg.mxu0
    %v592 = vsel %vm212, %v336, 0
    %v595 = vsel %vm573, %v335, 0
    %597 = vmatpush.bf16.msra.mxu0 0
    %598 = vmatpush.bf16.msra.mxu0 0
    %599 = vmatpush.bf16.msra.mxu0 0
    %600 = vmatpush.bf16.msra.mxu0 0
    %601 = vmatpush.bf16.msra.mxu0 0
    %602 = vmatpush.bf16.msra.mxu0 0
    %603 = vmatpush.bf16.msra.mxu0 0
    %604 = vmatpush.bf16.msra.mxu0 %v595
    %605 = vmatmul.bf16.gmra.mxu0 %v592
    %v606 = vpop.f32.mrf.mxu0
    %v607 = vadd.f32 %v587, %v606
    %v608 = vpop.f32.mrf.mxu0
    %v609 = vadd.f32 %v589, %v608
    %610 = vdwg.mxu0
    %s611 = scalar_lea.vmem %s3, 32
    %v612 = vld [vmem:[%s611] sm:$0xf]
    %v613 = vld [vmem:[%s611 + $0x4] sm:$0xf]
    %v614 = vld [vmem:[%s611 + $0x8] sm:$0xf]
    %v615 = vld [vmem:[%s611 + $0xc] sm:$0xf]
    %s616 = scalar_lea.vmem %s4, 2
    %v617 = vld [vmem:[%s616] sm:$0x1]
    %v619 = vperm.slane %v617, 0
    %v625 = vunpack.c.l.b16 %v612
    %v626 = vunpack.c.l.b16 %v613
    %v627 = vunpack.c.l.b16 %v614
    %v628 = vunpack.c.l.b16 %v615
    %v629 = vpack.c.b16 %v626, %v625
    %v630 = vpack.c.b16 %v628, %v627
    %633 = vmatpush.bf16.msra.mxu0 0
    %634 = vmatpush.bf16.msra.mxu0 0
    %635 = vmatpush.bf16.msra.mxu0 0
    %636 = vmatpush.bf16.msra.mxu0 0
    %637 = vmatpush.bf16.msra.mxu0 0
    %638 = vmatpush.bf16.msra.mxu0 0
    %639 = vmatpush.bf16.msra.mxu0 %v630
    %640 = vmatpush.bf16.msra.mxu0 %v629
    %641 = vmatmul.bf16.gmra.mxu0 %v124
    %v642 = vpop.f32.mrf.mxu0
    %v643 = vadd.f32 %v619, %v642
    %v644 = vpop.f32.mrf.mxu0
    %v645 = vadd.f32 %v619, %v644
    %646 = vdwg.mxu0
    %s647 = scalar_lea.vmem %s3, 96
    %v648 = vld [vmem:[%s647] sm:$0xf]
    %v649 = vld [vmem:[%s647 + $0x4] sm:$0xf]
    %v650 = vld [vmem:[%s647 + $0x8] sm:$0xf]
    %v651 = vld [vmem:[%s647 + $0xc] sm:$0xf]
    %s652 = scalar_lea.vmem %s4, 6
    %v653 = vld [vmem:[%s652] sm:$0x1]
    %v655 = vperm.slane %v653, 0
    %v661 = vunpack.c.l.b16 %v648
    %v662 = vunpack.c.l.b16 %v649
    %v663 = vunpack.c.l.b16 %v650
    %v664 = vunpack.c.l.b16 %v651
    %v665 = vpack.c.b16 %v662, %v661
    %v666 = vpack.c.b16 %v664, %v663
    %669 = vmatpush.bf16.msra.mxu0 0
    %670 = vmatpush.bf16.msra.mxu0 0
    %671 = vmatpush.bf16.msra.mxu0 0
    %672 = vmatpush.bf16.msra.mxu0 0
    %673 = vmatpush.bf16.msra.mxu0 0
    %674 = vmatpush.bf16.msra.mxu0 0
    %675 = vmatpush.bf16.msra.mxu0 %v666
    %676 = vmatpush.bf16.msra.mxu0 %v665
    %677 = vmatmul.bf16.gmra.mxu0 %v124
    %v678 = vpop.f32.mrf.mxu0
    %v679 = vadd.f32 %v655, %v678
    %v680 = vpop.f32.mrf.mxu0
    %v681 = vadd.f32 %v655, %v680
    %682 = vdwg.mxu0
    %s683 = scalar_lea.vmem %s3, 160
    %v684 = vld [vmem:[%s683] sm:$0xf]
    %v685 = vld [vmem:[%s683 + $0x4] sm:$0xf]
    %v686 = vld [vmem:[%s683 + $0x8] sm:$0xf]
    %v687 = vld [vmem:[%s683 + $0xc] sm:$0xf]
    %s688 = scalar_lea.vmem %s4, 10
    %v689 = vld [vmem:[%s688] sm:$0x1]
    %v691 = vperm.slane %v689, 0
    %v697 = vunpack.c.l.b16 %v684
    %v698 = vunpack.c.l.b16 %v685
    %v699 = vunpack.c.l.b16 %v686
    %v700 = vunpack.c.l.b16 %v687
    %v701 = vpack.c.b16 %v698, %v697
    %v702 = vpack.c.b16 %v700, %v699
    %705 = vmatpush.bf16.msra.mxu0 0
    %706 = vmatpush.bf16.msra.mxu0 0
    %707 = vmatpush.bf16.msra.mxu0 0
    %708 = vmatpush.bf16.msra.mxu0 0
    %709 = vmatpush.bf16.msra.mxu0 0
    %710 = vmatpush.bf16.msra.mxu0 0
    %711 = vmatpush.bf16.msra.mxu0 %v702
    %712 = vmatpush.bf16.msra.mxu0 %v701
    %713 = vmatmul.bf16.gmra.mxu0 %v124
    %v714 = vpop.f32.mrf.mxu0
    %v715 = vadd.f32 %v691, %v714
    %v716 = vpop.f32.mrf.mxu0
    %v717 = vadd.f32 %v691, %v716
    %718 = vdwg.mxu0
    %v720 = vsel %vm212, %v643, 0
    %v723 = vsel %vm212, %v679, 0
    %725 = vmatpush.xpose.msra.mxu0 0.0
    %726 = vmatpush.xpose.msra.mxu0 0.0
    %727 = vmatpush.xpose.msra.mxu0 0.0
    %728 = vmatpush.xpose.msra.mxu0 0.0
    %729 = vmatpush.xpose.msra.mxu0 0.0
    %730 = vmatpush.xpose.msra.mxu0 0.0
    %731 = vmatpush.xpose.msra.mxu0 0.0
    %732 = vmatpush.xpose.msra.mxu0 0.0
    %733 = vmatpush.xpose.msra.mxu0 0.0
    %734 = vmatpush.xpose.msra.mxu0 0.0
    %735 = vmatpush.xpose.msra.mxu0 0.0
    %736 = vmatpush.xpose.msra.mxu0 0.0
    %737 = vmatpush.xpose.msra.mxu0 0.0
    %738 = vmatpush.xpose.msra.mxu0 0.0
    %739 = vmatpush.xpose.msra.mxu0 0.0
    %740 = vmatpush.xpose.msra.mxu0 %v723
    %741 = vmatmul.f32.gmra.mxu0 %v720
    %v742 = vpop.f32.mrf.mxu0
    %v743 = vadd.f32 0.0, %v742
    %744 = vdwg.mxu0
    %v746 = vsel %vm212, %v645, 0
    %v749 = vsel %vm212, %v681, 0
    %751 = vmatpush.xpose.msra.mxu0 0.0
    %752 = vmatpush.xpose.msra.mxu0 0.0
    %753 = vmatpush.xpose.msra.mxu0 0.0
    %754 = vmatpush.xpose.msra.mxu0 0.0
    %755 = vmatpush.xpose.msra.mxu0 0.0
    %756 = vmatpush.xpose.msra.mxu0 0.0
    %757 = vmatpush.xpose.msra.mxu0 0.0
    %758 = vmatpush.xpose.msra.mxu0 0.0
    %759 = vmatpush.xpose.msra.mxu0 0.0
    %760 = vmatpush.xpose.msra.mxu0 0.0
    %761 = vmatpush.xpose.msra.mxu0 0.0
    %762 = vmatpush.xpose.msra.mxu0 0.0
    %763 = vmatpush.xpose.msra.mxu0 0.0
    %764 = vmatpush.xpose.msra.mxu0 0.0
    %765 = vmatpush.xpose.msra.mxu0 0.0
    %766 = vmatpush.xpose.msra.mxu0 %v749
    %767 = vmatmul.f32.gmra.mxu0 %v746
    %v768 = vpop.f32.mrf.mxu0
    %v769 = vadd.f32 0.0, %v768
    %770 = vdwg.mxu0
    %v771 = vmul.f32 %v743, 0.35355338
    %v772 = vmul.f32 %v769, 0.35355338
    %v773 = vsel %vm212, %v771, -inf
    %774 = vmax.xlane.f32.xlu0 %v773
    %v775 = vpop.xlane.xlu0 %774
    %v776 = vsel %vm212, %v772, -inf
    %777 = vmax.xlane.f32.xlu0 %v776
    %v778 = vpop.xlane.xlu0 %777
    %v779 = vsub.f32 %v771, %v775
    %v780 = vsub.f32 %v772, %v778
    %v781 = vmul.f32 %v779, 1.442695
    %v782 = vpow.pop %v781
    %v783 = vmul.f32 %v780, 1.442695
    %v784 = vpow.pop %v783
    %v785 = vsel %vm212, %v782, 0.0
    %786 = vadd.xlane.f32.xlu0 %v785
    %v787 = vpop.xlane.xlu0 %786
    %v788 = vsel %vm212, %v784, 0.0
    %789 = vadd.xlane.f32.xlu0 %v788
    %v790 = vpop.xlane.xlu0 %789
    %v791 = vrcp.pop %v787
    %v792 = vrcp.pop %v790
    %v793 = vmul.f32 %v782, %v791
    %v794 = vmul.f32 %v784, %v792
    %v796 = vsel %vm212, %v793, 0
    %798 = vmatpush.msra.mxu0 0.0
    %799 = vmatpush.msra.mxu0 0.0
    %800 = vmatpush.msra.mxu0 0.0
    %801 = vmatpush.msra.mxu0 0.0
    %802 = vmatpush.msra.mxu0 0.0
    %803 = vmatpush.msra.mxu0 0.0
    %804 = vmatpush.msra.mxu0 0.0
    %805 = vmatpush.msra.mxu0 0.0
    %806 = vmatpush.msra.mxu0 0.0
    %807 = vmatpush.msra.mxu0 0.0
    %808 = vmatpush.msra.mxu0 0.0
    %809 = vmatpush.msra.mxu0 0.0
    %810 = vmatpush.msra.mxu0 0.0
    %811 = vmatpush.msra.mxu0 0.0
    %812 = vmatpush.msra.mxu0 0.0
    %813 = vmatpush.msra.mxu0 %v715
    %814 = vmatmul.f32.gmra.mxu0 %v796
    %v815 = vpop.f32.mrf.mxu0
    %v816 = vadd.f32 0.0, %v815
    %817 = vdwg.mxu0
    %v819 = vsel %vm212, %v794, 0
    %821 = vmatpush.msra.mxu0 0.0
    %822 = vmatpush.msra.mxu0 0.0
    %823 = vmatpush.msra.mxu0 0.0
    %824 = vmatpush.msra.mxu0 0.0
    %825 = vmatpush.msra.mxu0 0.0
    %826 = vmatpush.msra.mxu0 0.0
    %827 = vmatpush.msra.mxu0 0.0
    %828 = vmatpush.msra.mxu0 0.0
    %829 = vmatpush.msra.mxu0 0.0
    %830 = vmatpush.msra.mxu0 0.0
    %831 = vmatpush.msra.mxu0 0.0
    %832 = vmatpush.msra.mxu0 0.0
    %833 = vmatpush.msra.mxu0 0.0
    %834 = vmatpush.msra.mxu0 0.0
    %835 = vmatpush.msra.mxu0 0.0
    %836 = vmatpush.msra.mxu0 %v717
    %837 = vmatmul.f32.gmra.mxu0 %v819
    %v838 = vpop.f32.mrf.mxu0
    %v839 = vadd.f32 0.0, %v838
    %840 = vdwg.mxu0
    %s841 = scalar_lea.vmem %s5, 8
    %v842 = vld [vmem:[%s841] sm:$0xf]
    %v843 = vpack.c.bf16 %v839, %v816
    %v845 = vsel %vm212, %v843, 0
    %v848 = vsel %vm573, %v842, 0
    %850 = vmatpush.bf16.msra.mxu0 0
    %851 = vmatpush.bf16.msra.mxu0 0
    %852 = vmatpush.bf16.msra.mxu0 0
    %853 = vmatpush.bf16.msra.mxu0 0
    %854 = vmatpush.bf16.msra.mxu0 0
    %855 = vmatpush.bf16.msra.mxu0 0
    %856 = vmatpush.bf16.msra.mxu0 0
    %857 = vmatpush.bf16.msra.mxu0 %v848
    %858 = vmatmul.bf16.gmra.mxu0 %v845
    %v859 = vpop.f32.mrf.mxu0
    %v860 = vadd.f32 0.0, %v859
    %v861 = vpop.f32.mrf.mxu0
    %v862 = vadd.f32 0.0, %v861
    %863 = vdwg.mxu0
    %v864 = vadd.f32 %v607, %v860
    %v865 = vadd.f32 %v609, %v862
    %s866 = scalar_lea.vmem %s3, 48
    %v867 = vld [vmem:[%s866] sm:$0xf]
    %v868 = vld [vmem:[%s866 + $0x4] sm:$0xf]
    %v869 = vld [vmem:[%s866 + $0x8] sm:$0xf]
    %v870 = vld [vmem:[%s866 + $0xc] sm:$0xf]
    %s871 = scalar_lea.vmem %s4, 3
    %v872 = vld [vmem:[%s871] sm:$0x1]
    %v874 = vperm.slane %v872, 0
    %v880 = vunpack.c.l.b16 %v867
    %v881 = vunpack.c.l.b16 %v868
    %v882 = vunpack.c.l.b16 %v869
    %v883 = vunpack.c.l.b16 %v870
    %v884 = vpack.c.b16 %v881, %v880
    %v885 = vpack.c.b16 %v883, %v882
    %888 = vmatpush.bf16.msra.mxu0 0
    %889 = vmatpush.bf16.msra.mxu0 0
    %890 = vmatpush.bf16.msra.mxu0 0
    %891 = vmatpush.bf16.msra.mxu0 0
    %892 = vmatpush.bf16.msra.mxu0 0
    %893 = vmatpush.bf16.msra.mxu0 0
    %894 = vmatpush.bf16.msra.mxu0 %v885
    %895 = vmatpush.bf16.msra.mxu0 %v884
    %896 = vmatmul.bf16.gmra.mxu0 %v124
    %v897 = vpop.f32.mrf.mxu0
    %v898 = vadd.f32 %v874, %v897
    %v899 = vpop.f32.mrf.mxu0
    %v900 = vadd.f32 %v874, %v899
    %901 = vdwg.mxu0
    %s902 = scalar_lea.vmem %s3, 112
    %v903 = vld [vmem:[%s902] sm:$0xf]
    %v904 = vld [vmem:[%s902 + $0x4] sm:$0xf]
    %v905 = vld [vmem:[%s902 + $0x8] sm:$0xf]
    %v906 = vld [vmem:[%s902 + $0xc] sm:$0xf]
    %s907 = scalar_lea.vmem %s4, 7
    %v908 = vld [vmem:[%s907] sm:$0x1]
    %v910 = vperm.slane %v908, 0
    %v916 = vunpack.c.l.b16 %v903
    %v917 = vunpack.c.l.b16 %v904
    %v918 = vunpack.c.l.b16 %v905
    %v919 = vunpack.c.l.b16 %v906
    %v920 = vpack.c.b16 %v917, %v916
    %v921 = vpack.c.b16 %v919, %v918
    %924 = vmatpush.bf16.msra.mxu0 0
    %925 = vmatpush.bf16.msra.mxu0 0
    %926 = vmatpush.bf16.msra.mxu0 0
    %927 = vmatpush.bf16.msra.mxu0 0
    %928 = vmatpush.bf16.msra.mxu0 0
    %929 = vmatpush.bf16.msra.mxu0 0
    %930 = vmatpush.bf16.msra.mxu0 %v921
    %931 = vmatpush.bf16.msra.mxu0 %v920
    %932 = vmatmul.bf16.gmra.mxu0 %v124
    %v933 = vpop.f32.mrf.mxu0
    %v934 = vadd.f32 %v910, %v933
    %v935 = vpop.f32.mrf.mxu0
    %v936 = vadd.f32 %v910, %v935
    %937 = vdwg.mxu0
    %s938 = scalar_lea.vmem %s3, 176
    %v939 = vld [vmem:[%s938] sm:$0xf]
    %v940 = vld [vmem:[%s938 + $0x4] sm:$0xf]
    %v941 = vld [vmem:[%s938 + $0x8] sm:$0xf]
    %v942 = vld [vmem:[%s938 + $0xc] sm:$0xf]
    %s943 = scalar_lea.vmem %s4, 11
    %v944 = vld [vmem:[%s943] sm:$0x1]
    %v946 = vperm.slane %v944, 0
    %v952 = vunpack.c.l.b16 %v939
    %v953 = vunpack.c.l.b16 %v940
    %v954 = vunpack.c.l.b16 %v941
    %v955 = vunpack.c.l.b16 %v942
    %v956 = vpack.c.b16 %v953, %v952
    %v957 = vpack.c.b16 %v955, %v954
    %960 = vmatpush.bf16.msra.mxu0 0
    %961 = vmatpush.bf16.msra.mxu0 0
    %962 = vmatpush.bf16.msra.mxu0 0
    %963 = vmatpush.bf16.msra.mxu0 0
    %964 = vmatpush.bf16.msra.mxu0 0
    %965 = vmatpush.bf16.msra.mxu0 0
    %966 = vmatpush.bf16.msra.mxu0 %v957
    %967 = vmatpush.bf16.msra.mxu0 %v956
    %968 = vmatmul.bf16.gmra.mxu0 %v124
    %v969 = vpop.f32.mrf.mxu0
    %v970 = vadd.f32 %v946, %v969
    %v971 = vpop.f32.mrf.mxu0
    %v972 = vadd.f32 %v946, %v971
    %973 = vdwg.mxu0
    %v975 = vsel %vm212, %v898, 0
    %v978 = vsel %vm212, %v934, 0
    %980 = vmatpush.xpose.msra.mxu0 0.0
    %981 = vmatpush.xpose.msra.mxu0 0.0
    %982 = vmatpush.xpose.msra.mxu0 0.0
    %983 = vmatpush.xpose.msra.mxu0 0.0
    %984 = vmatpush.xpose.msra.mxu0 0.0
    %985 = vmatpush.xpose.msra.mxu0 0.0
    %986 = vmatpush.xpose.msra.mxu0 0.0
    %987 = vmatpush.xpose.msra.mxu0 0.0
    %988 = vmatpush.xpose.msra.mxu0 0.0
    %989 = vmatpush.xpose.msra.mxu0 0.0
    %990 = vmatpush.xpose.msra.mxu0 0.0
    %991 = vmatpush.xpose.msra.mxu0 0.0
    %992 = vmatpush.xpose.msra.mxu0 0.0
    %993 = vmatpush.xpose.msra.mxu0 0.0
    %994 = vmatpush.xpose.msra.mxu0 0.0
    %995 = vmatpush.xpose.msra.mxu0 %v978
    %996 = vmatmul.f32.gmra.mxu0 %v975
    %v997 = vpop.f32.mrf.mxu0
    %v998 = vadd.f32 0.0, %v997
    %999 = vdwg.mxu0
    %v1001 = vsel %vm212, %v900, 0
    %v1004 = vsel %vm212, %v936, 0
    %1006 = vmatpush.xpose.msra.mxu0 0.0
    %1007 = vmatpush.xpose.msra.mxu0 0.0
    %1008 = vmatpush.xpose.msra.mxu0 0.0
    %1009 = vmatpush.xpose.msra.mxu0 0.0
    %1010 = vmatpush.xpose.msra.mxu0 0.0
    %1011 = vmatpush.xpose.msra.mxu0 0.0
    %1012 = vmatpush.xpose.msra.mxu0 0.0
    %1013 = vmatpush.xpose.msra.mxu0 0.0
    %1014 = vmatpush.xpose.msra.mxu0 0.0
    %1015 = vmatpush.xpose.msra.mxu0 0.0
    %1016 = vmatpush.xpose.msra.mxu0 0.0
    %1017 = vmatpush.xpose.msra.mxu0 0.0
    %1018 = vmatpush.xpose.msra.mxu0 0.0
    %1019 = vmatpush.xpose.msra.mxu0 0.0
    %1020 = vmatpush.xpose.msra.mxu0 0.0
    %1021 = vmatpush.xpose.msra.mxu0 %v1004
    %1022 = vmatmul.f32.gmra.mxu0 %v1001
    %v1023 = vpop.f32.mrf.mxu0
    %v1024 = vadd.f32 0.0, %v1023
    %1025 = vdwg.mxu0
    %v1026 = vmul.f32 %v998, 0.35355338
    %v1027 = vmul.f32 %v1024, 0.35355338
    %v1028 = vsel %vm212, %v1026, -inf
    %1029 = vmax.xlane.f32.xlu0 %v1028
    %v1030 = vpop.xlane.xlu0 %1029
    %v1031 = vsel %vm212, %v1027, -inf
    %1032 = vmax.xlane.f32.xlu0 %v1031
    %v1033 = vpop.xlane.xlu0 %1032
    %v1034 = vsub.f32 %v1026, %v1030
    %v1035 = vsub.f32 %v1027, %v1033
    %v1036 = vmul.f32 %v1034, 1.442695
    %v1037 = vpow.pop %v1036
    %v1038 = vmul.f32 %v1035, 1.442695
    %v1039 = vpow.pop %v1038
    %v1040 = vsel %vm212, %v1037, 0.0
    %1041 = vadd.xlane.f32.xlu0 %v1040
    %v1042 = vpop.xlane.xlu0 %1041
    %v1043 = vsel %vm212, %v1039, 0.0
    %1044 = vadd.xlane.f32.xlu0 %v1043
    %v1045 = vpop.xlane.xlu0 %1044
    %v1046 = vrcp.pop %v1042
    %v1047 = vrcp.pop %v1045
    %v1048 = vmul.f32 %v1037, %v1046
    %v1049 = vmul.f32 %v1039, %v1047
    %v1051 = vsel %vm212, %v1048, 0
    %1053 = vmatpush.msra.mxu0 0.0
    %1054 = vmatpush.msra.mxu0 0.0
    %1055 = vmatpush.msra.mxu0 0.0
    %1056 = vmatpush.msra.mxu0 0.0
    %1057 = vmatpush.msra.mxu0 0.0
    %1058 = vmatpush.msra.mxu0 0.0
    %1059 = vmatpush.msra.mxu0 0.0
    %1060 = vmatpush.msra.mxu0 0.0
    %1061 = vmatpush.msra.mxu0 0.0
    %1062 = vmatpush.msra.mxu0 0.0
    %1063 = vmatpush.msra.mxu0 0.0
    %1064 = vmatpush.msra.mxu0 0.0
    %1065 = vmatpush.msra.mxu0 0.0
    %1066 = vmatpush.msra.mxu0 0.0
    %1067 = vmatpush.msra.mxu0 0.0
    %1068 = vmatpush.msra.mxu0 %v970
    %1069 = vmatmul.f32.gmra.mxu0 %v1051
    %v1070 = vpop.f32.mrf.mxu0
    %v1071 = vadd.f32 0.0, %v1070
    %1072 = vdwg.mxu0
    %v1074 = vsel %vm212, %v1049, 0
    %1076 = vmatpush.msra.mxu0 0.0
    %1077 = vmatpush.msra.mxu0 0.0
    %1078 = vmatpush.msra.mxu0 0.0
    %1079 = vmatpush.msra.mxu0 0.0
    %1080 = vmatpush.msra.mxu0 0.0
    %1081 = vmatpush.msra.mxu0 0.0
    %1082 = vmatpush.msra.mxu0 0.0
    %1083 = vmatpush.msra.mxu0 0.0
    %1084 = vmatpush.msra.mxu0 0.0
    %1085 = vmatpush.msra.mxu0 0.0
    %1086 = vmatpush.msra.mxu0 0.0
    %1087 = vmatpush.msra.mxu0 0.0
    %1088 = vmatpush.msra.mxu0 0.0
    %1089 = vmatpush.msra.mxu0 0.0
    %1090 = vmatpush.msra.mxu0 0.0
    %1091 = vmatpush.msra.mxu0 %v972
    %1092 = vmatmul.f32.gmra.mxu0 %v1074
    %v1093 = vpop.f32.mrf.mxu0
    %v1094 = vadd.f32 0.0, %v1093
    %1095 = vdwg.mxu0
    %s1096 = scalar_lea.vmem %s5, 12
    %v1097 = vld [vmem:[%s1096] sm:$0xf]
    %v1098 = vpack.c.bf16 %v1094, %v1071
    %v1100 = vsel %vm212, %v1098, 0
    %v1103 = vsel %vm573, %v1097, 0
    %1105 = vmatpush.bf16.msra.mxu0 0
    %1106 = vmatpush.bf16.msra.mxu0 0
    %1107 = vmatpush.bf16.msra.mxu0 0
    %1108 = vmatpush.bf16.msra.mxu0 0
    %1109 = vmatpush.bf16.msra.mxu0 0
    %1110 = vmatpush.bf16.msra.mxu0 0
    %1111 = vmatpush.bf16.msra.mxu0 0
    %1112 = vmatpush.bf16.msra.mxu0 %v1103
    %1113 = vmatmul.bf16.gmra.mxu0 %v1100
    %v1114 = vpop.f32.mrf.mxu0
    %v1115 = vadd.f32 0.0, %v1114
    %v1116 = vpop.f32.mrf.mxu0
    %v1117 = vadd.f32 0.0, %v1116
    %1118 = vdwg.mxu0
    %v1119 = vadd.f32 %v864, %v1115
    %v1120 = vadd.f32 %v865, %v1117
    %v1121 = vadd.f32 %v92, %v1119
    %v1122 = vadd.f32 %v93, %v1120
    %v1123 = vperm.slane %v94, 0
    %v1124 = vadd.f32 %v1121, %v1123
    %v1125 = vadd.f32 %v1122, %v1123
    %v1126 = vsel %vm122, %v1124, 0.0
    %1127 = vadd.xlane.f32.xlu0 %v1126
    %v1128 = vpop.xlane.xlu0 %1127
    %v1129 = vsel %vm122, %v1125, 0.0
    %1130 = vadd.xlane.f32.xlu0 %v1129
    %v1131 = vpop.xlane.xlu0 %1130
    %v1132 = vrcp.pop 32.0
    %v1133 = vmul.f32 32.0, %v1132
    %v1134 = vsub.f32 1.0, %v1133
    %v1135 = vmul.f32 %v1132, %v1134
    %v1136 = vadd.f32 %v1132, %v1135
    %vm1137 = vweird.f32 %v1132
    %v1138 = vsel %vm1137, %v1132, %v1136
    %v1139 = vmul.f32 %v1128, %v1138
    %v1140 = vmul.f32 %v1131, %v1138
    %v1141 = vsub.f32 %v1124, %v1139
    %v1142 = vsub.f32 %v1125, %v1140
    %v1143 = vmul.f32 %v1141, %v1141
    %v1144 = vmul.f32 %v1142, %v1142
    %v1145 = vsel %vm122, %v1143, 0.0
    %1146 = vadd.xlane.f32.xlu0 %v1145
    %v1147 = vpop.xlane.xlu0 %1146
    %v1148 = vsel %vm122, %v1144, 0.0
    %1149 = vadd.xlane.f32.xlu0 %v1148
    %v1150 = vpop.xlane.xlu0 %1149
    %v1151 = vmul.f32 %v1147, %v1138
    %v1152 = vmul.f32 %v1150, %v1138
    %v1153 = vadd.f32 %v1151, 1e-05
    %v1154 = vadd.f32 %v1152, 1e-05
    %v1155 = vrsqrt.pop %v1153
    %v1156 = vmul.f32 %v1155, %v1153
    %v1157 = vmul.f32 %v1156, %v1155
    %v1158 = vmul.f32 0.5, %v1157
    %v1159 = vsub.f32 1.5, %v1158
    %v1160 = vmul.f32 %v1155, %v1159
    %vm1161 = vweird.f32 %v1153
    %vm1162 = vweird.f32 %v1155
    %vm1163 = vmor %vm1161, %vm1162
    %v1164 = vsel %vm1163, %v1155, %v1160
    %v1165 = vrsqrt.pop %v1154
    %v1166 = vmul.f32 %v1165, %v1154
    %v1167 = vmul.f32 %v1166, %v1165
    %v1168 = vmul.f32 0.5, %v1167
    %v1169 = vsub.f32 1.5, %v1168
    %v1170 = vmul.f32 %v1165, %v1169
    %vm1171 = vweird.f32 %v1154
    %vm1172 = vweird.f32 %v1165
    %vm1173 = vmor %vm1171, %vm1172
    %v1174 = vsel %vm1173, %v1165, %v1170
    %v1175 = vmul.f32 %v1141, %v1164
    %v1176 = vmul.f32 %v1142, %v1174
    %v1177 = vperm.slane %v95, 0
    %v1178 = vmul.f32 %v1175, %v1177
    %v1179 = vmul.f32 %v1176, %v1177
    %v1180 = vperm.slane %v96, 0
    %v1181 = vadd.f32 %v1178, %v1180
    %v1182 = vadd.f32 %v1179, %v1180
    %v1183 = vld [vmem:[%s6] sm:$0xf]
    %v1184 = vld [vmem:[%s6 + $0x4] sm:$0xf]
    %v1185 = vld [vmem:[%s6 + $0x8] sm:$0xf]
    %v1186 = vld [vmem:[%s6 + $0xc] sm:$0xf]
    %v1187 = vpack.c.bf16 %v1182, %v1181
    %v1188 = vperm.slane %v97, 0
    %v1193 = vunpack.c.l.b16 %v1183
    %v1194 = vunpack.c.l.b16 %v1184
    %v1195 = vunpack.c.l.b16 %v1185
    %v1196 = vunpack.c.l.b16 %v1186
    %v1197 = vpack.c.b16 %v1194, %v1193
    %v1198 = vpack.c.b16 %v1196, %v1195
    %v1202 = vsel %vm122, %v1187, 0
    %1204 = vmatpush.bf16.msra.mxu0 0
    %1205 = vmatpush.bf16.msra.mxu0 0
    %1206 = vmatpush.bf16.msra.mxu0 0
    %1207 = vmatpush.bf16.msra.mxu0 0
    %1208 = vmatpush.bf16.msra.mxu0 0
    %1209 = vmatpush.bf16.msra.mxu0 0
    %1210 = vmatpush.bf16.msra.mxu0 %v1198
    %1211 = vmatpush.bf16.msra.mxu0 %v1197
    %1212 = vmatmul.bf16.gmra.mxu0 %v1202
    %v1213 = vpop.f32.mrf.mxu0
    %v1214 = vadd.f32 %v1188, %v1213
    %v1215 = vpop.f32.mrf.mxu0
    %v1216 = vadd.f32 %v1188, %v1215
    %1217 = vdwg.mxu0
    %v1218 = vmax.f32 %v1214, 0.0
    %v1219 = vmax.f32 %v1216, 0.0
    %v1220 = vld [vmem:[%s7] sm:$0xf]
    %v1221 = vld [vmem:[%s7 + $0x4] sm:$0xf]
    %v1222 = vld [vmem:[%s7 + $0x8] sm:$0xf]
    %v1223 = vld [vmem:[%s7 + $0xc] sm:$0xf]
    %v1224 = vld [vmem:[%s7 + $0x10] sm:$0xf]
    %v1225 = vld [vmem:[%s7 + $0x14] sm:$0xf]
    %v1226 = vld [vmem:[%s7 + $0x18] sm:$0xf]
    %v1227 = vld [vmem:[%s7 + $0x1c] sm:$0xf]
    %v1228 = vpack.c.bf16 %v1219, %v1218
    %v1237 = vunpack.c.l.b16 %v1220
    %v1238 = vunpack.c.l.b16 %v1221
    %v1239 = vunpack.c.l.b16 %v1222
    %v1240 = vunpack.c.l.b16 %v1223
    %v1241 = vunpack.c.l.b16 %v1224
    %v1242 = vunpack.c.l.b16 %v1225
    %v1243 = vunpack.c.l.b16 %v1226
    %v1244 = vunpack.c.l.b16 %v1227
    %v1245 = vpack.c.b16 %v1238, %v1237
    %v1246 = vpack.c.b16 %v1240, %v1239
    %v1247 = vpack.c.b16 %v1242, %v1241
    %v1248 = vpack.c.b16 %v1244, %v1243
    %v1254 = vsel %vm58, %v1228, 0
    %1256 = vmatpush.bf16.msra.mxu0 0
    %1257 = vmatpush.bf16.msra.mxu0 0
    %1258 = vmatpush.bf16.msra.mxu0 0
    %1259 = vmatpush.bf16.msra.mxu0 0
    %1260 = vmatpush.bf16.msra.mxu0 %v1248
    %1261 = vmatpush.bf16.msra.mxu0 %v1247
    %1262 = vmatpush.bf16.msra.mxu0 %v1246
    %1263 = vmatpush.bf16.msra.mxu0 %v1245
    %1264 = vmatmul.bf16.gmra.mxu0 %v1254
    %v1265 = vpop.f32.mrf.mxu0
    %v1266 = vadd.f32 0.0, %v1265
    %v1267 = vpop.f32.mrf.mxu0
    %v1268 = vadd.f32 0.0, %v1267
    %1269 = vdwg.mxu0
    %v1270 = vadd.f32 %v1181, %v1266
    %v1271 = vadd.f32 %v1182, %v1268
    %v1272 = vperm.slane %v98, 0
    %v1273 = vadd.f32 %v1270, %v1272
    %v1274 = vadd.f32 %v1271, %v1272
    %v1275 = vsel %vm122, %v1273, 0.0
    %1276 = vadd.xlane.f32.xlu0 %v1275
    %v1277 = vpop.xlane.xlu0 %1276
    %v1278 = vsel %vm122, %v1274, 0.0
    %1279 = vadd.xlane.f32.xlu0 %v1278
    %v1280 = vpop.xlane.xlu0 %1279
    %v1281 = vmul.f32 %v1277, %v1138
    %v1282 = vmul.f32 %v1280, %v1138
    %v1283 = vsub.f32 %v1273, %v1281
    %v1284 = vsub.f32 %v1274, %v1282
    %v1285 = vmul.f32 %v1283, %v1283
    %v1286 = vmul.f32 %v1284, %v1284
    %v1287 = vsel %vm122, %v1285, 0.0
    %1288 = vadd.xlane.f32.xlu0 %v1287
    %v1289 = vpop.xlane.xlu0 %1288
    %v1290 = vsel %vm122, %v1286, 0.0
    %1291 = vadd.xlane.f32.xlu0 %v1290
    %v1292 = vpop.xlane.xlu0 %1291
    %v1293 = vmul.f32 %v1289, %v1138
    %v1294 = vmul.f32 %v1292, %v1138
    %v1295 = vadd.f32 %v1293, 1e-05
    %v1296 = vadd.f32 %v1294, 1e-05
    %v1297 = vrsqrt.pop %v1295
    %v1298 = vmul.f32 %v1297, %v1295
    %v1299 = vmul.f32 %v1298, %v1297
    %v1300 = vmul.f32 0.5, %v1299
    %v1301 = vsub.f32 1.5, %v1300
    %v1302 = vmul.f32 %v1297, %v1301
    %vm1303 = vweird.f32 %v1295
    %vm1304 = vweird.f32 %v1297
    %vm1305 = vmor %vm1303, %vm1304
    %v1306 = vsel %vm1305, %v1297, %v1302
    %v1307 = vrsqrt.pop %v1296
    %v1308 = vmul.f32 %v1307, %v1296
    %v1309 = vmul.f32 %v1308, %v1307
    %v1310 = vmul.f32 0.5, %v1309
    %v1311 = vsub.f32 1.5, %v1310
    %v1312 = vmul.f32 %v1307, %v1311
    %vm1313 = vweird.f32 %v1296
    %vm1314 = vweird.f32 %v1307
    %vm1315 = vmor %vm1313, %vm1314
    %v1316 = vsel %vm1315, %v1307, %v1312
    %v1317 = vmul.f32 %v1283, %v1306
    %v1318 = vmul.f32 %v1284, %v1316
    %v1319 = vperm.slane %v99, 0
    %v1320 = vmul.f32 %v1317, %v1319
    %v1321 = vmul.f32 %v1318, %v1319
    %v1322 = vperm.slane %v100, 0
    %v1323 = vadd.f32 %v1320, %v1322
    %v1324 = vadd.f32 %v1321, %v1322
    %s1325 = scalar_lea.vmem %s8, 8
    %v1326 = vld [vmem:[%s1325] sm:$0x1]
    %v1327 = vld [vmem:[%s1325 + $0x1] sm:$0x1]
    %v1328 = vld [vmem:[%s1325 + $0x2] sm:$0x1]
    %v1329 = vld [vmem:[%s1325 + $0x3] sm:$0x1]
    %v1330 = vld [vmem:[%s1325 + $0x4] sm:$0x1]
    %v1331 = vld [vmem:[%s1325 + $0x5] sm:$0x1]
    %v1332 = vld [vmem:[%s1325 + $0x6] sm:$0x1]
    %s1333 = scalar_lea.vmem %s3, 192
    %v1334 = vld [vmem:[%s1333] sm:$0xf]
    %v1335 = vld [vmem:[%s1333 + $0x4] sm:$0xf]
    %v1336 = vld [vmem:[%s1333 + $0x8] sm:$0xf]
    %v1337 = vld [vmem:[%s1333 + $0xc] sm:$0xf]
    %v1338 = vpack.c.bf16 %v1324, %v1323
    %s1339 = scalar_lea.vmem %s4, 12
    %v1340 = vld [vmem:[%s1339] sm:$0x1]
    %v1342 = vperm.slane %v1340, 0
    %v1348 = vunpack.c.l.b16 %v1334
    %v1349 = vunpack.c.l.b16 %v1335
    %v1350 = vunpack.c.l.b16 %v1336
    %v1351 = vunpack.c.l.b16 %v1337
    %v1352 = vpack.c.b16 %v1349, %v1348
    %v1353 = vpack.c.b16 %v1351, %v1350
    %v1357 = vsel %vm122, %v1338, 0
    %1359 = vmatpush.bf16.msra.mxu0 0
    %1360 = vmatpush.bf16.msra.mxu0 0
    %1361 = vmatpush.bf16.msra.mxu0 0
    %1362 = vmatpush.bf16.msra.mxu0 0
    %1363 = vmatpush.bf16.msra.mxu0 0
    %1364 = vmatpush.bf16.msra.mxu0 0
    %1365 = vmatpush.bf16.msra.mxu0 %v1353
    %1366 = vmatpush.bf16.msra.mxu0 %v1352
    %1367 = vmatmul.bf16.gmra.mxu0 %v1357
    %v1368 = vpop.f32.mrf.mxu0
    %v1369 = vadd.f32 %v1342, %v1368
    %v1370 = vpop.f32.mrf.mxu0
    %v1371 = vadd.f32 %v1342, %v1370
    %1372 = vdwg.mxu0
    %s1373 = scalar_lea.vmem %s3, 256
    %v1374 = vld [vmem:[%s1373] sm:$0xf]
    %v1375 = vld [vmem:[%s1373 + $0x4] sm:$0xf]
    %v1376 = vld [vmem:[%s1373 + $0x8] sm:$0xf]
    %v1377 = vld [vmem:[%s1373 + $0xc] sm:$0xf]
    %s1378 = scalar_lea.vmem %s4, 16
    %v1379 = vld [vmem:[%s1378] sm:$0x1]
    %v1381 = vperm.slane %v1379, 0
    %v1387 = vunpack.c.l.b16 %v1374
    %v1388 = vunpack.c.l.b16 %v1375
    %v1389 = vunpack.c.l.b16 %v1376
    %v1390 = vunpack.c.l.b16 %v1377
    %v1391 = vpack.c.b16 %v1388, %v1387
    %v1392 = vpack.c.b16 %v1390, %v1389
    %1395 = vmatpush.bf16.msra.mxu0 0
    %1396 = vmatpush.bf16.msra.mxu0 0
    %1397 = vmatpush.bf16.msra.mxu0 0
    %1398 = vmatpush.bf16.msra.mxu0 0
    %1399 = vmatpush.bf16.msra.mxu0 0
    %1400 = vmatpush.bf16.msra.mxu0 0
    %1401 = vmatpush.bf16.msra.mxu0 %v1392
    %1402 = vmatpush.bf16.msra.mxu0 %v1391
    %1403 = vmatmul.bf16.gmra.mxu0 %v1357
    %v1404 = vpop.f32.mrf.mxu0
    %v1405 = vadd.f32 %v1381, %v1404
    %v1406 = vpop.f32.mrf.mxu0
    %v1407 = vadd.f32 %v1381, %v1406
    %1408 = vdwg.mxu0
    %s1409 = scalar_lea.vmem %s3, 320
    %v1410 = vld [vmem:[%s1409] sm:$0xf]
    %v1411 = vld [vmem:[%s1409 + $0x4] sm:$0xf]
    %v1412 = vld [vmem:[%s1409 + $0x8] sm:$0xf]
    %v1413 = vld [vmem:[%s1409 + $0xc] sm:$0xf]
    %s1414 = scalar_lea.vmem %s4, 20
    %v1415 = vld [vmem:[%s1414] sm:$0x1]
    %v1417 = vperm.slane %v1415, 0
    %v1423 = vunpack.c.l.b16 %v1410
    %v1424 = vunpack.c.l.b16 %v1411
    %v1425 = vunpack.c.l.b16 %v1412
    %v1426 = vunpack.c.l.b16 %v1413
    %v1427 = vpack.c.b16 %v1424, %v1423
    %v1428 = vpack.c.b16 %v1426, %v1425
    %1431 = vmatpush.bf16.msra.mxu0 0
    %1432 = vmatpush.bf16.msra.mxu0 0
    %1433 = vmatpush.bf16.msra.mxu0 0
    %1434 = vmatpush.bf16.msra.mxu0 0
    %1435 = vmatpush.bf16.msra.mxu0 0
    %1436 = vmatpush.bf16.msra.mxu0 0
    %1437 = vmatpush.bf16.msra.mxu0 %v1428
    %1438 = vmatpush.bf16.msra.mxu0 %v1427
    %1439 = vmatmul.bf16.gmra.mxu0 %v1357
    %v1440 = vpop.f32.mrf.mxu0
    %v1441 = vadd.f32 %v1417, %v1440
    %v1442 = vpop.f32.mrf.mxu0
    %v1443 = vadd.f32 %v1417, %v1442
    %1444 = vdwg.mxu0
    %v1446 = vsel %vm212, %v1369, 0
    %v1449 = vsel %vm212, %v1405, 0
    %1451 = vmatpush.xpose.msra.mxu0 0.0
    %1452 = vmatpush.xpose.msra.mxu0 0.0
    %1453 = vmatpush.xpose.msra.mxu0 0.0
    %1454 = vmatpush.xpose.msra.mxu0 0.0
    %1455 = vmatpush.xpose.msra.mxu0 0.0
    %1456 = vmatpush.xpose.msra.mxu0 0.0
    %1457 = vmatpush.xpose.msra.mxu0 0.0
    %1458 = vmatpush.xpose.msra.mxu0 0.0
    %1459 = vmatpush.xpose.msra.mxu0 0.0
    %1460 = vmatpush.xpose.msra.mxu0 0.0
    %1461 = vmatpush.xpose.msra.mxu0 0.0
    %1462 = vmatpush.xpose.msra.mxu0 0.0
    %1463 = vmatpush.xpose.msra.mxu0 0.0
    %1464 = vmatpush.xpose.msra.mxu0 0.0
    %1465 = vmatpush.xpose.msra.mxu0 0.0
    %1466 = vmatpush.xpose.msra.mxu0 %v1449
    %1467 = vmatmul.f32.gmra.mxu0 %v1446
    %v1468 = vpop.f32.mrf.mxu0
    %v1469 = vadd.f32 0.0, %v1468
    %1470 = vdwg.mxu0
    %v1472 = vsel %vm212, %v1371, 0
    %v1475 = vsel %vm212, %v1407, 0
    %1477 = vmatpush.xpose.msra.mxu0 0.0
    %1478 = vmatpush.xpose.msra.mxu0 0.0
    %1479 = vmatpush.xpose.msra.mxu0 0.0
    %1480 = vmatpush.xpose.msra.mxu0 0.0
    %1481 = vmatpush.xpose.msra.mxu0 0.0
    %1482 = vmatpush.xpose.msra.mxu0 0.0
    %1483 = vmatpush.xpose.msra.mxu0 0.0
    %1484 = vmatpush.xpose.msra.mxu0 0.0
    %1485 = vmatpush.xpose.msra.mxu0 0.0
    %1486 = vmatpush.xpose.msra.mxu0 0.0
    %1487 = vmatpush.xpose.msra.mxu0 0.0
    %1488 = vmatpush.xpose.msra.mxu0 0.0
    %1489 = vmatpush.xpose.msra.mxu0 0.0
    %1490 = vmatpush.xpose.msra.mxu0 0.0
    %1491 = vmatpush.xpose.msra.mxu0 0.0
    %1492 = vmatpush.xpose.msra.mxu0 %v1475
    %1493 = vmatmul.f32.gmra.mxu0 %v1472
    %v1494 = vpop.f32.mrf.mxu0
    %v1495 = vadd.f32 0.0, %v1494
    %1496 = vdwg.mxu0
    %v1497 = vmul.f32 %v1469, 0.35355338
    %v1498 = vmul.f32 %v1495, 0.35355338
    %v1499 = vsel %vm212, %v1497, -inf
    %1500 = vmax.xlane.f32.xlu0 %v1499
    %v1501 = vpop.xlane.xlu0 %1500
    %v1502 = vsel %vm212, %v1498, -inf
    %1503 = vmax.xlane.f32.xlu0 %v1502
    %v1504 = vpop.xlane.xlu0 %1503
    %v1505 = vsub.f32 %v1497, %v1501
    %v1506 = vsub.f32 %v1498, %v1504
    %v1507 = vmul.f32 %v1505, 1.442695
    %v1508 = vpow.pop %v1507
    %v1509 = vmul.f32 %v1506, 1.442695
    %v1510 = vpow.pop %v1509
    %v1511 = vsel %vm212, %v1508, 0.0
    %1512 = vadd.xlane.f32.xlu0 %v1511
    %v1513 = vpop.xlane.xlu0 %1512
    %v1514 = vsel %vm212, %v1510, 0.0
    %1515 = vadd.xlane.f32.xlu0 %v1514
    %v1516 = vpop.xlane.xlu0 %1515
    %v1517 = vrcp.pop %v1513
    %v1518 = vrcp.pop %v1516
    %v1519 = vmul.f32 %v1508, %v1517
    %v1520 = vmul.f32 %v1510, %v1518
    %v1522 = vsel %vm212, %v1519, 0
    %1524 = vmatpush.msra.mxu0 0.0
    %1525 = vmatpush.msra.mxu0 0.0
    %1526 = vmatpush.msra.mxu0 0.0
    %1527 = vmatpush.msra.mxu0 0.0
    %1528 = vmatpush.msra.mxu0 0.0
    %1529 = vmatpush.msra.mxu0 0.0
    %1530 = vmatpush.msra.mxu0 0.0
    %1531 = vmatpush.msra.mxu0 0.0
    %1532 = vmatpush.msra.mxu0 0.0
    %1533 = vmatpush.msra.mxu0 0.0
    %1534 = vmatpush.msra.mxu0 0.0
    %1535 = vmatpush.msra.mxu0 0.0
    %1536 = vmatpush.msra.mxu0 0.0
    %1537 = vmatpush.msra.mxu0 0.0
    %1538 = vmatpush.msra.mxu0 0.0
    %1539 = vmatpush.msra.mxu0 %v1441
    %1540 = vmatmul.f32.gmra.mxu0 %v1522
    %v1541 = vpop.f32.mrf.mxu0
    %v1542 = vadd.f32 0.0, %v1541
    %1543 = vdwg.mxu0
    %v1545 = vsel %vm212, %v1520, 0
    %1547 = vmatpush.msra.mxu0 0.0
    %1548 = vmatpush.msra.mxu0 0.0
    %1549 = vmatpush.msra.mxu0 0.0
    %1550 = vmatpush.msra.mxu0 0.0
    %1551 = vmatpush.msra.mxu0 0.0
    %1552 = vmatpush.msra.mxu0 0.0
    %1553 = vmatpush.msra.mxu0 0.0
    %1554 = vmatpush.msra.mxu0 0.0
    %1555 = vmatpush.msra.mxu0 0.0
    %1556 = vmatpush.msra.mxu0 0.0
    %1557 = vmatpush.msra.mxu0 0.0
    %1558 = vmatpush.msra.mxu0 0.0
    %1559 = vmatpush.msra.mxu0 0.0
    %1560 = vmatpush.msra.mxu0 0.0
    %1561 = vmatpush.msra.mxu0 0.0
    %1562 = vmatpush.msra.mxu0 %v1443
    %1563 = vmatmul.f32.gmra.mxu0 %v1545
    %v1564 = vpop.f32.mrf.mxu0
    %v1565 = vadd.f32 0.0, %v1564
    %1566 = vdwg.mxu0
    %s1567 = scalar_lea.vmem %s5, 16
    %v1568 = vld [vmem:[%s1567] sm:$0xf]
    %v1569 = vpack.c.bf16 %v1565, %v1542
    %s1570 = scalar_lea.vmem %s3, 208
    %v1571 = vld [vmem:[%s1570] sm:$0xf]
    %v1572 = vld [vmem:[%s1570 + $0x4] sm:$0xf]
    %v1573 = vld [vmem:[%s1570 + $0x8] sm:$0xf]
    %v1574 = vld [vmem:[%s1570 + $0xc] sm:$0xf]
    %s1575 = scalar_lea.vmem %s4, 13
    %v1576 = vld [vmem:[%s1575] sm:$0x1]
    %v1578 = vperm.slane %v1576, 0
    %v1584 = vunpack.c.l.b16 %v1571
    %v1585 = vunpack.c.l.b16 %v1572
    %v1586 = vunpack.c.l.b16 %v1573
    %v1587 = vunpack.c.l.b16 %v1574
    %v1588 = vpack.c.b16 %v1585, %v1584
    %v1589 = vpack.c.b16 %v1587, %v1586
    %1592 = vmatpush.bf16.msra.mxu0 0
    %1593 = vmatpush.bf16.msra.mxu0 0
    %1594 = vmatpush.bf16.msra.mxu0 0
    %1595 = vmatpush.bf16.msra.mxu0 0
    %1596 = vmatpush.bf16.msra.mxu0 0
    %1597 = vmatpush.bf16.msra.mxu0 0
    %1598 = vmatpush.bf16.msra.mxu0 %v1589
    %1599 = vmatpush.bf16.msra.mxu0 %v1588
    %1600 = vmatmul.bf16.gmra.mxu0 %v1357
    %v1601 = vpop.f32.mrf.mxu0
    %v1602 = vadd.f32 %v1578, %v1601
    %v1603 = vpop.f32.mrf.mxu0
    %v1604 = vadd.f32 %v1578, %v1603
    %1605 = vdwg.mxu0
    %s1606 = scalar_lea.vmem %s3, 272
    %v1607 = vld [vmem:[%s1606] sm:$0xf]
    %v1608 = vld [vmem:[%s1606 + $0x4] sm:$0xf]
    %v1609 = vld [vmem:[%s1606 + $0x8] sm:$0xf]
    %v1610 = vld [vmem:[%s1606 + $0xc] sm:$0xf]
    %s1611 = scalar_lea.vmem %s4, 17
    %v1612 = vld [vmem:[%s1611] sm:$0x1]
    %v1614 = vperm.slane %v1612, 0
    %v1620 = vunpack.c.l.b16 %v1607
    %v1621 = vunpack.c.l.b16 %v1608
    %v1622 = vunpack.c.l.b16 %v1609
    %v1623 = vunpack.c.l.b16 %v1610
    %v1624 = vpack.c.b16 %v1621, %v1620
    %v1625 = vpack.c.b16 %v1623, %v1622
    %1628 = vmatpush.bf16.msra.mxu0 0
    %1629 = vmatpush.bf16.msra.mxu0 0
    %1630 = vmatpush.bf16.msra.mxu0 0
    %1631 = vmatpush.bf16.msra.mxu0 0
    %1632 = vmatpush.bf16.msra.mxu0 0
    %1633 = vmatpush.bf16.msra.mxu0 0
    %1634 = vmatpush.bf16.msra.mxu0 %v1625
    %1635 = vmatpush.bf16.msra.mxu0 %v1624
    %1636 = vmatmul.bf16.gmra.mxu0 %v1357
    %v1637 = vpop.f32.mrf.mxu0
    %v1638 = vadd.f32 %v1614, %v1637
    %v1639 = vpop.f32.mrf.mxu0
    %v1640 = vadd.f32 %v1614, %v1639
    %1641 = vdwg.mxu0
    %s1642 = scalar_lea.vmem %s3, 336
    %v1643 = vld [vmem:[%s1642] sm:$0xf]
    %v1644 = vld [vmem:[%s1642 + $0x4] sm:$0xf]
    %v1645 = vld [vmem:[%s1642 + $0x8] sm:$0xf]
    %v1646 = vld [vmem:[%s1642 + $0xc] sm:$0xf]
    %s1647 = scalar_lea.vmem %s4, 21
    %v1648 = vld [vmem:[%s1647] sm:$0x1]
    %v1650 = vperm.slane %v1648, 0
    %v1656 = vunpack.c.l.b16 %v1643
    %v1657 = vunpack.c.l.b16 %v1644
    %v1658 = vunpack.c.l.b16 %v1645
    %v1659 = vunpack.c.l.b16 %v1646
    %v1660 = vpack.c.b16 %v1657, %v1656
    %v1661 = vpack.c.b16 %v1659, %v1658
    %1664 = vmatpush.bf16.msra.mxu0 0
    %1665 = vmatpush.bf16.msra.mxu0 0
    %1666 = vmatpush.bf16.msra.mxu0 0
    %1667 = vmatpush.bf16.msra.mxu0 0
    %1668 = vmatpush.bf16.msra.mxu0 0
    %1669 = vmatpush.bf16.msra.mxu0 0
    %1670 = vmatpush.bf16.msra.mxu0 %v1661
    %1671 = vmatpush.bf16.msra.mxu0 %v1660
    %1672 = vmatmul.bf16.gmra.mxu0 %v1357
    %v1673 = vpop.f32.mrf.mxu0
    %v1674 = vadd.f32 %v1650, %v1673
    %v1675 = vpop.f32.mrf.mxu0
    %v1676 = vadd.f32 %v1650, %v1675
    %1677 = vdwg.mxu0
    %v1679 = vsel %vm212, %v1602, 0
    %v1682 = vsel %vm212, %v1638, 0
    %1684 = vmatpush.xpose.msra.mxu0 0.0
    %1685 = vmatpush.xpose.msra.mxu0 0.0
    %1686 = vmatpush.xpose.msra.mxu0 0.0
    %1687 = vmatpush.xpose.msra.mxu0 0.0
    %1688 = vmatpush.xpose.msra.mxu0 0.0
    %1689 = vmatpush.xpose.msra.mxu0 0.0
    %1690 = vmatpush.xpose.msra.mxu0 0.0
    %1691 = vmatpush.xpose.msra.mxu0 0.0
    %1692 = vmatpush.xpose.msra.mxu0 0.0
    %1693 = vmatpush.xpose.msra.mxu0 0.0
    %1694 = vmatpush.xpose.msra.mxu0 0.0
    %1695 = vmatpush.xpose.msra.mxu0 0.0
    %1696 = vmatpush.xpose.msra.mxu0 0.0
    %1697 = vmatpush.xpose.msra.mxu0 0.0
    %1698 = vmatpush.xpose.msra.mxu0 0.0
    %1699 = vmatpush.xpose.msra.mxu0 %v1682
    %1700 = vmatmul.f32.gmra.mxu0 %v1679
    %v1701 = vpop.f32.mrf.mxu0
    %v1702 = vadd.f32 0.0, %v1701
    %1703 = vdwg.mxu0
    %v1705 = vsel %vm212, %v1604, 0
    %v1708 = vsel %vm212, %v1640, 0
    %1710 = vmatpush.xpose.msra.mxu0 0.0
    %1711 = vmatpush.xpose.msra.mxu0 0.0
    %1712 = vmatpush.xpose.msra.mxu0 0.0
    %1713 = vmatpush.xpose.msra.mxu0 0.0
    %1714 = vmatpush.xpose.msra.mxu0 0.0
    %1715 = vmatpush.xpose.msra.mxu0 0.0
    %1716 = vmatpush.xpose.msra.mxu0 0.0
    %1717 = vmatpush.xpose.msra.mxu0 0.0
    %1718 = vmatpush.xpose.msra.mxu0 0.0
    %1719 = vmatpush.xpose.msra.mxu0 0.0
    %1720 = vmatpush.xpose.msra.mxu0 0.0
    %1721 = vmatpush.xpose.msra.mxu0 0.0
    %1722 = vmatpush.xpose.msra.mxu0 0.0
    %1723 = vmatpush.xpose.msra.mxu0 0.0
    %1724 = vmatpush.xpose.msra.mxu0 0.0
    %1725 = vmatpush.xpose.msra.mxu0 %v1708
    %1726 = vmatmul.f32.gmra.mxu0 %v1705
    %v1727 = vpop.f32.mrf.mxu0
    %v1728 = vadd.f32 0.0, %v1727
    %1729 = vdwg.mxu0
    %v1730 = vmul.f32 %v1702, 0.35355338
    %v1731 = vmul.f32 %v1728, 0.35355338
    %v1732 = vsel %vm212, %v1730, -inf
    %1733 = vmax.xlane.f32.xlu0 %v1732
    %v1734 = vpop.xlane.xlu0 %1733
    %v1735 = vsel %vm212, %v1731, -inf
    %1736 = vmax.xlane.f32.xlu0 %v1735
    %v1737 = vpop.xlane.xlu0 %1736
    %v1738 = vsub.f32 %v1730, %v1734
    %v1739 = vsub.f32 %v1731, %v1737
    %v1740 = vmul.f32 %v1738, 1.442695
    %v1741 = vpow.pop %v1740
    %v1742 = vmul.f32 %v1739, 1.442695
    %v1743 = vpow.pop %v1742
    %v1744 = vsel %vm212, %v1741, 0.0
    %1745 = vadd.xlane.f32.xlu0 %v1744
    %v1746 = vpop.xlane.xlu0 %1745
    %v1747 = vsel %vm212, %v1743, 0.0
    %1748 = vadd.xlane.f32.xlu0 %v1747
    %v1749 = vpop.xlane.xlu0 %1748
    %v1750 = vrcp.pop %v1746
    %v1751 = vrcp.pop %v1749
    %v1752 = vmul.f32 %v1741, %v1750
    %v1753 = vmul.f32 %v1743, %v1751
    %v1755 = vsel %vm212, %v1752, 0
    %1757 = vmatpush.msra.mxu0 0.0
    %1758 = vmatpush.msra.mxu0 0.0
    %1759 = vmatpush.msra.mxu0 0.0
    %1760 = vmatpush.msra.mxu0 0.0
    %1761 = vmatpush.msra.mxu0 0.0
    %1762 = vmatpush.msra.mxu0 0.0
    %1763 = vmatpush.msra.mxu0 0.0
    %1764 = vmatpush.msra.mxu0 0.0
    %1765 = vmatpush.msra.mxu0 0.0
    %1766 = vmatpush.msra.mxu0 0.0
    %1767 = vmatpush.msra.mxu0 0.0
    %1768 = vmatpush.msra.mxu0 0.0
    %1769 = vmatpush.msra.mxu0 0.0
    %1770 = vmatpush.msra.mxu0 0.0
    %1771 = vmatpush.msra.mxu0 0.0
    %1772 = vmatpush.msra.mxu0 %v1674
    %1773 = vmatmul.f32.gmra.mxu0 %v1755
    %v1774 = vpop.f32.mrf.mxu0
    %v1775 = vadd.f32 0.0, %v1774
    %1776 = vdwg.mxu0
    %v1778 = vsel %vm212, %v1753, 0
    %1780 = vmatpush.msra.mxu0 0.0
    %1781 = vmatpush.msra.mxu0 0.0
    %1782 = vmatpush.msra.mxu0 0.0
    %1783 = vmatpush.msra.mxu0 0.0
    %1784 = vmatpush.msra.mxu0 0.0
    %1785 = vmatpush.msra.mxu0 0.0
    %1786 = vmatpush.msra.mxu0 0.0
    %1787 = vmatpush.msra.mxu0 0.0
    %1788 = vmatpush.msra.mxu0 0.0
    %1789 = vmatpush.msra.mxu0 0.0
    %1790 = vmatpush.msra.mxu0 0.0
    %1791 = vmatpush.msra.mxu0 0.0
    %1792 = vmatpush.msra.mxu0 0.0
    %1793 = vmatpush.msra.mxu0 0.0
    %1794 = vmatpush.msra.mxu0 0.0
    %1795 = vmatpush.msra.mxu0 %v1676
    %1796 = vmatmul.f32.gmra.mxu0 %v1778
    %v1797 = vpop.f32.mrf.mxu0
    %v1798 = vadd.f32 0.0, %v1797
    %1799 = vdwg.mxu0
    %s1800 = scalar_lea.vmem %s5, 20
    %v1801 = vld [vmem:[%s1800] sm:$0xf]
    %v1802 = vpack.c.bf16 %v1798, %v1775
    %v1804 = vsel %vm212, %v1802, 0
    %v1807 = vsel %vm573, %v1801, 0
    %1809 = vmatpush.bf16.msra.mxu0 0
    %1810 = vmatpush.bf16.msra.mxu0 0
    %1811 = vmatpush.bf16.msra.mxu0 0
    %1812 = vmatpush.bf16.msra.mxu0 0
    %1813 = vmatpush.bf16.msra.mxu0 0
    %1814 = vmatpush.bf16.msra.mxu0 0
    %1815 = vmatpush.bf16.msra.mxu0 0
    %1816 = vmatpush.bf16.msra.mxu0 %v1807
    %1817 = vmatmul.bf16.gmra.mxu0 %v1804
    %v1818 = vpop.f32.mrf.mxu0
    %v1819 = vadd.f32 0.0, %v1818
    %v1820 = vpop.f32.mrf.mxu0
    %v1821 = vadd.f32 0.0, %v1820
    %1822 = vdwg.mxu0
    %v1824 = vsel %vm212, %v1569, 0
    %v1827 = vsel %vm573, %v1568, 0
    %1829 = vmatpush.bf16.msra.mxu0 0
    %1830 = vmatpush.bf16.msra.mxu0 0
    %1831 = vmatpush.bf16.msra.mxu0 0
    %1832 = vmatpush.bf16.msra.mxu0 0
    %1833 = vmatpush.bf16.msra.mxu0 0
    %1834 = vmatpush.bf16.msra.mxu0 0
    %1835 = vmatpush.bf16.msra.mxu0 0
    %1836 = vmatpush.bf16.msra.mxu0 %v1827
    %1837 = vmatmul.bf16.gmra.mxu0 %v1824
    %v1838 = vpop.f32.mrf.mxu0
    %v1839 = vadd.f32 %v1819, %v1838
    %v1840 = vpop.f32.mrf.mxu0
    %v1841 = vadd.f32 %v1821, %v1840
    %1842 = vdwg.mxu0
    %s1843 = scalar_lea.vmem %s3, 224
    %v1844 = vld [vmem:[%s1843] sm:$0xf]
    %v1845 = vld [vmem:[%s1843 + $0x4] sm:$0xf]
    %v1846 = vld [vmem:[%s1843 + $0x8] sm:$0xf]
    %v1847 = vld [vmem:[%s1843 + $0xc] sm:$0xf]
    %s1848 = scalar_lea.vmem %s4, 14
    %v1849 = vld [vmem:[%s1848] sm:$0x1]
    %v1851 = vperm.slane %v1849, 0
    %v1857 = vunpack.c.l.b16 %v1844
    %v1858 = vunpack.c.l.b16 %v1845
    %v1859 = vunpack.c.l.b16 %v1846
    %v1860 = vunpack.c.l.b16 %v1847
    %v1861 = vpack.c.b16 %v1858, %v1857
    %v1862 = vpack.c.b16 %v1860, %v1859
    %1865 = vmatpush.bf16.msra.mxu0 0
    %1866 = vmatpush.bf16.msra.mxu0 0
    %1867 = vmatpush.bf16.msra.mxu0 0
    %1868 = vmatpush.bf16.msra.mxu0 0
    %1869 = vmatpush.bf16.msra.mxu0 0
    %1870 = vmatpush.bf16.msra.mxu0 0
    %1871 = vmatpush.bf16.msra.mxu0 %v1862
    %1872 = vmatpush.bf16.msra.mxu0 %v1861
    %1873 = vmatmul.bf16.gmra.mxu0 %v1357
    %v1874 = vpop.f32.mrf.mxu0
    %v1875 = vadd.f32 %v1851, %v1874
    %v1876 = vpop.f32.mrf.mxu0
    %v1877 = vadd.f32 %v1851, %v1876
    %1878 = vdwg.mxu0
    %s1879 = scalar_lea.vmem %s3, 288
    %v1880 = vld [vmem:[%s1879] sm:$0xf]
    %v1881 = vld [vmem:[%s1879 + $0x4] sm:$0xf]
    %v1882 = vld [vmem:[%s1879 + $0x8] sm:$0xf]
    %v1883 = vld [vmem:[%s1879 + $0xc] sm:$0xf]
    %s1884 = scalar_lea.vmem %s4, 18
    %v1885 = vld [vmem:[%s1884] sm:$0x1]
    %v1887 = vperm.slane %v1885, 0
    %v1893 = vunpack.c.l.b16 %v1880
    %v1894 = vunpack.c.l.b16 %v1881
    %v1895 = vunpack.c.l.b16 %v1882
    %v1896 = vunpack.c.l.b16 %v1883
    %v1897 = vpack.c.b16 %v1894, %v1893
    %v1898 = vpack.c.b16 %v1896, %v1895
    %1901 = vmatpush.bf16.msra.mxu0 0
    %1902 = vmatpush.bf16.msra.mxu0 0
    %1903 = vmatpush.bf16.msra.mxu0 0
    %1904 = vmatpush.bf16.msra.mxu0 0
    %1905 = vmatpush.bf16.msra.mxu0 0
    %1906 = vmatpush.bf16.msra.mxu0 0
    %1907 = vmatpush.bf16.msra.mxu0 %v1898
    %1908 = vmatpush.bf16.msra.mxu0 %v1897
    %1909 = vmatmul.bf16.gmra.mxu0 %v1357
    %v1910 = vpop.f32.mrf.mxu0
    %v1911 = vadd.f32 %v1887, %v1910
    %v1912 = vpop.f32.mrf.mxu0
    %v1913 = vadd.f32 %v1887, %v1912
    %1914 = vdwg.mxu0
    %s1915 = scalar_lea.vmem %s3, 352
    %v1916 = vld [vmem:[%s1915] sm:$0xf]
    %v1917 = vld [vmem:[%s1915 + $0x4] sm:$0xf]
    %v1918 = vld [vmem:[%s1915 + $0x8] sm:$0xf]
    %v1919 = vld [vmem:[%s1915 + $0xc] sm:$0xf]
    %s1920 = scalar_lea.vmem %s4, 22
    %v1921 = vld [vmem:[%s1920] sm:$0x1]
    %v1923 = vperm.slane %v1921, 0
    %v1929 = vunpack.c.l.b16 %v1916
    %v1930 = vunpack.c.l.b16 %v1917
    %v1931 = vunpack.c.l.b16 %v1918
    %v1932 = vunpack.c.l.b16 %v1919
    %v1933 = vpack.c.b16 %v1930, %v1929
    %v1934 = vpack.c.b16 %v1932, %v1931
    %1937 = vmatpush.bf16.msra.mxu0 0
    %1938 = vmatpush.bf16.msra.mxu0 0
    %1939 = vmatpush.bf16.msra.mxu0 0
    %1940 = vmatpush.bf16.msra.mxu0 0
    %1941 = vmatpush.bf16.msra.mxu0 0
    %1942 = vmatpush.bf16.msra.mxu0 0
    %1943 = vmatpush.bf16.msra.mxu0 %v1934
    %1944 = vmatpush.bf16.msra.mxu0 %v1933
    %1945 = vmatmul.bf16.gmra.mxu0 %v1357
    %v1946 = vpop.f32.mrf.mxu0
    %v1947 = vadd.f32 %v1923, %v1946
    %v1948 = vpop.f32.mrf.mxu0
    %v1949 = vadd.f32 %v1923, %v1948
    %1950 = vdwg.mxu0
    %v1952 = vsel %vm212, %v1875, 0
    %v1955 = vsel %vm212, %v1911, 0
    %1957 = vmatpush.xpose.msra.mxu0 0.0
    %1958 = vmatpush.xpose.msra.mxu0 0.0
    %1959 = vmatpush.xpose.msra.mxu0 0.0
    %1960 = vmatpush.xpose.msra.mxu0 0.0
    %1961 = vmatpush.xpose.msra.mxu0 0.0
    %1962 = vmatpush.xpose.msra.mxu0 0.0
    %1963 = vmatpush.xpose.msra.mxu0 0.0
    %1964 = vmatpush.xpose.msra.mxu0 0.0
    %1965 = vmatpush.xpose.msra.mxu0 0.0
    %1966 = vmatpush.xpose.msra.mxu0 0.0
    %1967 = vmatpush.xpose.msra.mxu0 0.0
    %1968 = vmatpush.xpose.msra.mxu0 0.0
    %1969 = vmatpush.xpose.msra.mxu0 0.0
    %1970 = vmatpush.xpose.msra.mxu0 0.0
    %1971 = vmatpush.xpose.msra.mxu0 0.0
    %1972 = vmatpush.xpose.msra.mxu0 %v1955
    %1973 = vmatmul.f32.gmra.mxu0 %v1952
    %v1974 = vpop.f32.mrf.mxu0
    %v1975 = vadd.f32 0.0, %v1974
    %1976 = vdwg.mxu0
    %v1978 = vsel %vm212, %v1877, 0
    %v1981 = vsel %vm212, %v1913, 0
    %1983 = vmatpush.xpose.msra.mxu0 0.0
    %1984 = vmatpush.xpose.msra.mxu0 0.0
    %1985 = vmatpush.xpose.msra.mxu0 0.0
    %1986 = vmatpush.xpose.msra.mxu0 0.0
    %1987 = vmatpush.xpose.msra.mxu0 0.0
    %1988 = vmatpush.xpose.msra.mxu0 0.0
    %1989 = vmatpush.xpose.msra.mxu0 0.0
    %1990 = vmatpush.xpose.msra.mxu0 0.0
    %1991 = vmatpush.xpose.msra.mxu0 0.0
    %1992 = vmatpush.xpose.msra.mxu0 0.0
    %1993 = vmatpush.xpose.msra.mxu0 0.0
    %1994 = vmatpush.xpose.msra.mxu0 0.0
    %1995 = vmatpush.xpose.msra.mxu0 0.0
    %1996 = vmatpush.xpose.msra.mxu0 0.0
    %1997 = vmatpush.xpose.msra.mxu0 0.0
    %1998 = vmatpush.xpose.msra.mxu0 %v1981
    %1999 = vmatmul.f32.gmra.mxu0 %v1978
    %v2000 = vpop.f32.mrf.mxu0
    %v2001 = vadd.f32 0.0, %v2000
    %2002 = vdwg.mxu0
    %v2003 = vmul.f32 %v1975, 0.35355338
    %v2004 = vmul.f32 %v2001, 0.35355338
    %v2005 = vsel %vm212, %v2003, -inf
    %2006 = vmax.xlane.f32.xlu0 %v2005
    %v2007 = vpop.xlane.xlu0 %2006
    %v2008 = vsel %vm212, %v2004, -inf
    %2009 = vmax.xlane.f32.xlu0 %v2008
    %v2010 = vpop.xlane.xlu0 %2009
    %v2011 = vsub.f32 %v2003, %v2007
    %v2012 = vsub.f32 %v2004, %v2010
    %v2013 = vmul.f32 %v2011, 1.442695
    %v2014 = vpow.pop %v2013
    %v2015 = vmul.f32 %v2012, 1.442695
    %v2016 = vpow.pop %v2015
    %v2017 = vsel %vm212, %v2014, 0.0
    %2018 = vadd.xlane.f32.xlu0 %v2017
    %v2019 = vpop.xlane.xlu0 %2018
    %v2020 = vsel %vm212, %v2016, 0.0
    %2021 = vadd.xlane.f32.xlu0 %v2020
    %v2022 = vpop.xlane.xlu0 %2021
    %v2023 = vrcp.pop %v2019
    %v2024 = vrcp.pop %v2022
    %v2025 = vmul.f32 %v2014, %v2023
    %v2026 = vmul.f32 %v2016, %v2024
    %v2028 = vsel %vm212, %v2025, 0
    %2030 = vmatpush.msra.mxu0 0.0
    %2031 = vmatpush.msra.mxu0 0.0
    %2032 = vmatpush.msra.mxu0 0.0
    %2033 = vmatpush.msra.mxu0 0.0
    %2034 = vmatpush.msra.mxu0 0.0
    %2035 = vmatpush.msra.mxu0 0.0
    %2036 = vmatpush.msra.mxu0 0.0
    %2037 = vmatpush.msra.mxu0 0.0
    %2038 = vmatpush.msra.mxu0 0.0
    %2039 = vmatpush.msra.mxu0 0.0
    %2040 = vmatpush.msra.mxu0 0.0
    %2041 = vmatpush.msra.mxu0 0.0
    %2042 = vmatpush.msra.mxu0 0.0
    %2043 = vmatpush.msra.mxu0 0.0
    %2044 = vmatpush.msra.mxu0 0.0
    %2045 = vmatpush.msra.mxu0 %v1947
    %2046 = vmatmul.f32.gmra.mxu0 %v2028
    %v2047 = vpop.f32.mrf.mxu0
    %v2048 = vadd.f32 0.0, %v2047
    %2049 = vdwg.mxu0
    %v2051 = vsel %vm212, %v2026, 0
    %2053 = vmatpush.msra.mxu0 0.0
    %2054 = vmatpush.msra.mxu0 0.0
    %2055 = vmatpush.msra.mxu0 0.0
    %2056 = vmatpush.msra.mxu0 0.0
    %2057 = vmatpush.msra.mxu0 0.0
    %2058 = vmatpush.msra.mxu0 0.0
    %2059 = vmatpush.msra.mxu0 0.0
    %2060 = vmatpush.msra.mxu0 0.0
    %2061 = vmatpush.msra.mxu0 0.0
    %2062 = vmatpush.msra.mxu0 0.0
    %2063 = vmatpush.msra.mxu0 0.0
    %2064 = vmatpush.msra.mxu0 0.0
    %2065 = vmatpush.msra.mxu0 0.0
    %2066 = vmatpush.msra.mxu0 0.0
    %2067 = vmatpush.msra.mxu0 0.0
    %2068 = vmatpush.msra.mxu0 %v1949
    %2069 = vmatmul.f32.gmra.mxu0 %v2051
    %v2070 = vpop.f32.mrf.mxu0
    %v2071 = vadd.f32 0.0, %v2070
    %2072 = vdwg.mxu0
    %s2073 = scalar_lea.vmem %s5, 24
    %v2074 = vld [vmem:[%s2073] sm:$0xf]
    %v2075 = vpack.c.bf16 %v2071, %v2048
    %v2077 = vsel %vm212, %v2075, 0
    %v2080 = vsel %vm573, %v2074, 0
    %2082 = vmatpush.bf16.msra.mxu0 0
    %2083 = vmatpush.bf16.msra.mxu0 0
    %2084 = vmatpush.bf16.msra.mxu0 0
    %2085 = vmatpush.bf16.msra.mxu0 0
    %2086 = vmatpush.bf16.msra.mxu0 0
    %2087 = vmatpush.bf16.msra.mxu0 0
    %2088 = vmatpush.bf16.msra.mxu0 0
    %2089 = vmatpush.bf16.msra.mxu0 %v2080
    %2090 = vmatmul.bf16.gmra.mxu0 %v2077
    %v2091 = vpop.f32.mrf.mxu0
    %v2092 = vadd.f32 0.0, %v2091
    %v2093 = vpop.f32.mrf.mxu0
    %v2094 = vadd.f32 0.0, %v2093
    %2095 = vdwg.mxu0
    %v2096 = vadd.f32 %v1839, %v2092
    %v2097 = vadd.f32 %v1841, %v2094
    %s2098 = scalar_lea.vmem %s3, 240
    %v2099 = vld [vmem:[%s2098] sm:$0xf]
    %v2100 = vld [vmem:[%s2098 + $0x4] sm:$0xf]
    %v2101 = vld [vmem:[%s2098 + $0x8] sm:$0xf]
    %v2102 = vld [vmem:[%s2098 + $0xc] sm:$0xf]
    %s2103 = scalar_lea.vmem %s4, 15
    %v2104 = vld [vmem:[%s2103] sm:$0x1]
    %v2106 = vperm.slane %v2104, 0
    %v2112 = vunpack.c.l.b16 %v2099
    %v2113 = vunpack.c.l.b16 %v2100
    %v2114 = vunpack.c.l.b16 %v2101
    %v2115 = vunpack.c.l.b16 %v2102
    %v2116 = vpack.c.b16 %v2113, %v2112
    %v2117 = vpack.c.b16 %v2115, %v2114
    %2120 = vmatpush.bf16.msra.mxu0 0
    %2121 = vmatpush.bf16.msra.mxu0 0
    %2122 = vmatpush.bf16.msra.mxu0 0
    %2123 = vmatpush.bf16.msra.mxu0 0
    %2124 = vmatpush.bf16.msra.mxu0 0
    %2125 = vmatpush.bf16.msra.mxu0 0
    %2126 = vmatpush.bf16.msra.mxu0 %v2117
    %2127 = vmatpush.bf16.msra.mxu0 %v2116
    %2128 = vmatmul.bf16.gmra.mxu0 %v1357
    %v2129 = vpop.f32.mrf.mxu0
    %v2130 = vadd.f32 %v2106, %v2129
    %v2131 = vpop.f32.mrf.mxu0
    %v2132 = vadd.f32 %v2106, %v2131
    %2133 = vdwg.mxu0
    %s2134 = scalar_lea.vmem %s3, 304
    %v2135 = vld [vmem:[%s2134] sm:$0xf]
    %v2136 = vld [vmem:[%s2134 + $0x4] sm:$0xf]
    %v2137 = vld [vmem:[%s2134 + $0x8] sm:$0xf]
    %v2138 = vld [vmem:[%s2134 + $0xc] sm:$0xf]
    %s2139 = scalar_lea.vmem %s4, 19
    %v2140 = vld [vmem:[%s2139] sm:$0x1]
    %v2142 = vperm.slane %v2140, 0
    %v2148 = vunpack.c.l.b16 %v2135
    %v2149 = vunpack.c.l.b16 %v2136
    %v2150 = vunpack.c.l.b16 %v2137
    %v2151 = vunpack.c.l.b16 %v2138
    %v2152 = vpack.c.b16 %v2149, %v2148
    %v2153 = vpack.c.b16 %v2151, %v2150
    %2156 = vmatpush.bf16.msra.mxu0 0
    %2157 = vmatpush.bf16.msra.mxu0 0
    %2158 = vmatpush.bf16.msra.mxu0 0
    %2159 = vmatpush.bf16.msra.mxu0 0
    %2160 = vmatpush.bf16.msra.mxu0 0
    %2161 = vmatpush.bf16.msra.mxu0 0
    %2162 = vmatpush.bf16.msra.mxu0 %v2153
    %2163 = vmatpush.bf16.msra.mxu0 %v2152
    %2164 = vmatmul.bf16.gmra.mxu0 %v1357
    %v2165 = vpop.f32.mrf.mxu0
    %v2166 = vadd.f32 %v2142, %v2165
    %v2167 = vpop.f32.mrf.mxu0
    %v2168 = vadd.f32 %v2142, %v2167
    %2169 = vdwg.mxu0
    %s2170 = scalar_lea.vmem %s3, 368
    %v2171 = vld [vmem:[%s2170] sm:$0xf]
    %v2172 = vld [vmem:[%s2170 + $0x4] sm:$0xf]
    %v2173 = vld [vmem:[%s2170 + $0x8] sm:$0xf]
    %v2174 = vld [vmem:[%s2170 + $0xc] sm:$0xf]
    %s2175 = scalar_lea.vmem %s4, 23
    %v2176 = vld [vmem:[%s2175] sm:$0x1]
    %v2178 = vperm.slane %v2176, 0
    %v2184 = vunpack.c.l.b16 %v2171
    %v2185 = vunpack.c.l.b16 %v2172
    %v2186 = vunpack.c.l.b16 %v2173
    %v2187 = vunpack.c.l.b16 %v2174
    %v2188 = vpack.c.b16 %v2185, %v2184
    %v2189 = vpack.c.b16 %v2187, %v2186
    %2192 = vmatpush.bf16.msra.mxu0 0
    %2193 = vmatpush.bf16.msra.mxu0 0
    %2194 = vmatpush.bf16.msra.mxu0 0
    %2195 = vmatpush.bf16.msra.mxu0 0
    %2196 = vmatpush.bf16.msra.mxu0 0
    %2197 = vmatpush.bf16.msra.mxu0 0
    %2198 = vmatpush.bf16.msra.mxu0 %v2189
    %2199 = vmatpush.bf16.msra.mxu0 %v2188
    %2200 = vmatmul.bf16.gmra.mxu0 %v1357
    %v2201 = vpop.f32.mrf.mxu0
    %v2202 = vadd.f32 %v2178, %v2201
    %v2203 = vpop.f32.mrf.mxu0
    %v2204 = vadd.f32 %v2178, %v2203
    %2205 = vdwg.mxu0
    %v2207 = vsel %vm212, %v2130, 0
    %v2210 = vsel %vm212, %v2166, 0
    %2212 = vmatpush.xpose.msra.mxu0 0.0
    %2213 = vmatpush.xpose.msra.mxu0 0.0
    %2214 = vmatpush.xpose.msra.mxu0 0.0
    %2215 = vmatpush.xpose.msra.mxu0 0.0
    %2216 = vmatpush.xpose.msra.mxu0 0.0
    %2217 = vmatpush.xpose.msra.mxu0 0.0
    %2218 = vmatpush.xpose.msra.mxu0 0.0
    %2219 = vmatpush.xpose.msra.mxu0 0.0
    %2220 = vmatpush.xpose.msra.mxu0 0.0
    %2221 = vmatpush.xpose.msra.mxu0 0.0
    %2222 = vmatpush.xpose.msra.mxu0 0.0
    %2223 = vmatpush.xpose.msra.mxu0 0.0
    %2224 = vmatpush.xpose.msra.mxu0 0.0
    %2225 = vmatpush.xpose.msra.mxu0 0.0
    %2226 = vmatpush.xpose.msra.mxu0 0.0
    %2227 = vmatpush.xpose.msra.mxu0 %v2210
    %2228 = vmatmul.f32.gmra.mxu0 %v2207
    %v2229 = vpop.f32.mrf.mxu0
    %v2230 = vadd.f32 0.0, %v2229
    %2231 = vdwg.mxu0
    %v2233 = vsel %vm212, %v2132, 0
    %v2236 = vsel %vm212, %v2168, 0
    %2238 = vmatpush.xpose.msra.mxu0 0.0
    %2239 = vmatpush.xpose.msra.mxu0 0.0
    %2240 = vmatpush.xpose.msra.mxu0 0.0
    %2241 = vmatpush.xpose.msra.mxu0 0.0
    %2242 = vmatpush.xpose.msra.mxu0 0.0
    %2243 = vmatpush.xpose.msra.mxu0 0.0
    %2244 = vmatpush.xpose.msra.mxu0 0.0
    %2245 = vmatpush.xpose.msra.mxu0 0.0
    %2246 = vmatpush.xpose.msra.mxu0 0.0
    %2247 = vmatpush.xpose.msra.mxu0 0.0
    %2248 = vmatpush.xpose.msra.mxu0 0.0
    %2249 = vmatpush.xpose.msra.mxu0 0.0
    %2250 = vmatpush.xpose.msra.mxu0 0.0
    %2251 = vmatpush.xpose.msra.mxu0 0.0
    %2252 = vmatpush.xpose.msra.mxu0 0.0
    %2253 = vmatpush.xpose.msra.mxu0 %v2236
    %2254 = vmatmul.f32.gmra.mxu0 %v2233
    %v2255 = vpop.f32.mrf.mxu0
    %v2256 = vadd.f32 0.0, %v2255
    %2257 = vdwg.mxu0
    %v2258 = vmul.f32 %v2230, 0.35355338
    %v2259 = vmul.f32 %v2256, 0.35355338
    %v2260 = vsel %vm212, %v2258, -inf
    %2261 = vmax.xlane.f32.xlu0 %v2260
    %v2262 = vpop.xlane.xlu0 %2261
    %v2263 = vsel %vm212, %v2259, -inf
    %2264 = vmax.xlane.f32.xlu0 %v2263
    %v2265 = vpop.xlane.xlu0 %2264
    %v2266 = vsub.f32 %v2258, %v2262
    %v2267 = vsub.f32 %v2259, %v2265
    %v2268 = vmul.f32 %v2266, 1.442695
    %v2269 = vpow.pop %v2268
    %v2270 = vmul.f32 %v2267, 1.442695
    %v2271 = vpow.pop %v2270
    %v2272 = vsel %vm212, %v2269, 0.0
    %2273 = vadd.xlane.f32.xlu0 %v2272
    %v2274 = vpop.xlane.xlu0 %2273
    %v2275 = vsel %vm212, %v2271, 0.0
    %2276 = vadd.xlane.f32.xlu0 %v2275
    %v2277 = vpop.xlane.xlu0 %2276
    %v2278 = vrcp.pop %v2274
    %v2279 = vrcp.pop %v2277
    %v2280 = vmul.f32 %v2269, %v2278
    %v2281 = vmul.f32 %v2271, %v2279
    %v2283 = vsel %vm212, %v2280, 0
    %2285 = vmatpush.msra.mxu0 0.0
    %2286 = vmatpush.msra.mxu0 0.0
    %2287 = vmatpush.msra.mxu0 0.0
    %2288 = vmatpush.msra.mxu0 0.0
    %2289 = vmatpush.msra.mxu0 0.0
    %2290 = vmatpush.msra.mxu0 0.0
    %2291 = vmatpush.msra.mxu0 0.0
    %2292 = vmatpush.msra.mxu0 0.0
    %2293 = vmatpush.msra.mxu0 0.0
    %2294 = vmatpush.msra.mxu0 0.0
    %2295 = vmatpush.msra.mxu0 0.0
    %2296 = vmatpush.msra.mxu0 0.0
    %2297 = vmatpush.msra.mxu0 0.0
    %2298 = vmatpush.msra.mxu0 0.0
    %2299 = vmatpush.msra.mxu0 0.0
    %2300 = vmatpush.msra.mxu0 %v2202
    %2301 = vmatmul.f32.gmra.mxu0 %v2283
    %v2302 = vpop.f32.mrf.mxu0
    %v2303 = vadd.f32 0.0, %v2302
    %2304 = vdwg.mxu0
    %v2306 = vsel %vm212, %v2281, 0
    %2308 = vmatpush.msra.mxu0 0.0
    %2309 = vmatpush.msra.mxu0 0.0
    %2310 = vmatpush.msra.mxu0 0.0
    %2311 = vmatpush.msra.mxu0 0.0
    %2312 = vmatpush.msra.mxu0 0.0
    %2313 = vmatpush.msra.mxu0 0.0
    %2314 = vmatpush.msra.mxu0 0.0
    %2315 = vmatpush.msra.mxu0 0.0
    %2316 = vmatpush.msra.mxu0 0.0
    %2317 = vmatpush.msra.mxu0 0.0
    %2318 = vmatpush.msra.mxu0 0.0
    %2319 = vmatpush.msra.mxu0 0.0
    %2320 = vmatpush.msra.mxu0 0.0
    %2321 = vmatpush.msra.mxu0 0.0
    %2322 = vmatpush.msra.mxu0 0.0
    %2323 = vmatpush.msra.mxu0 %v2204
    %2324 = vmatmul.f32.gmra.mxu0 %v2306
    %v2325 = vpop.f32.mrf.mxu0
    %v2326 = vadd.f32 0.0, %v2325
    %2327 = vdwg.mxu0
    %s2328 = scalar_lea.vmem %s5, 28
    %v2329 = vld [vmem:[%s2328] sm:$0xf]
    %v2330 = vpack.c.bf16 %v2326, %v2303
    %v2332 = vsel %vm212, %v2330, 0
    %v2335 = vsel %vm573, %v2329, 0
    %2337 = vmatpush.bf16.msra.mxu0 0
    %2338 = vmatpush.bf16.msra.mxu0 0
    %2339 = vmatpush.bf16.msra.mxu0 0
    %2340 = vmatpush.bf16.msra.mxu0 0
    %2341 = vmatpush.bf16.msra.mxu0 0
    %2342 = vmatpush.bf16.msra.mxu0 0
    %2343 = vmatpush.bf16.msra.mxu0 0
    %2344 = vmatpush.bf16.msra.mxu0 %v2335
    %2345 = vmatmul.bf16.gmra.mxu0 %v2332
    %v2346 = vpop.f32.mrf.mxu0
    %v2347 = vadd.f32 0.0, %v2346
    %v2348 = vpop.f32.mrf.mxu0
    %v2349 = vadd.f32 0.0, %v2348
    %2350 = vdwg.mxu0
    %v2351 = vadd.f32 %v2096, %v2347
    %v2352 = vadd.f32 %v2097, %v2349
    %v2353 = vadd.f32 %v1323, %v2351
    %v2354 = vadd.f32 %v1324, %v2352
    %v2355 = vperm.slane %v1326, 0
    %v2356 = vadd.f32 %v2353, %v2355
    %v2357 = vadd.f32 %v2354, %v2355
    %v2358 = vsel %vm122, %v2356, 0.0
    %2359 = vadd.xlane.f32.xlu0 %v2358
    %v2360 = vpop.xlane.xlu0 %2359
    %v2361 = vsel %vm122, %v2357, 0.0
    %2362 = vadd.xlane.f32.xlu0 %v2361
    %v2363 = vpop.xlane.xlu0 %2362
    %v2364 = vmul.f32 %v2360, %v1138
    %v2365 = vmul.f32 %v2363, %v1138
    %v2366 = vsub.f32 %v2356, %v2364
    %v2367 = vsub.f32 %v2357, %v2365
    %v2368 = vmul.f32 %v2366, %v2366
    %v2369 = vmul.f32 %v2367, %v2367
    %v2370 = vsel %vm122, %v2368, 0.0
    %2371 = vadd.xlane.f32.xlu0 %v2370
    %v2372 = vpop.xlane.xlu0 %2371
    %v2373 = vsel %vm122, %v2369, 0.0
    %2374 = vadd.xlane.f32.xlu0 %v2373
    %v2375 = vpop.xlane.xlu0 %2374
    %v2376 = vmul.f32 %v2372, %v1138
    %v2377 = vmul.f32 %v2375, %v1138
    %v2378 = vadd.f32 %v2376, 1e-05
    %v2379 = vadd.f32 %v2377, 1e-05
    %v2380 = vrsqrt.pop %v2378
    %v2381 = vmul.f32 %v2380, %v2378
    %v2382 = vmul.f32 %v2381, %v2380
    %v2383 = vmul.f32 0.5, %v2382
    %v2384 = vsub.f32 1.5, %v2383
    %v2385 = vmul.f32 %v2380, %v2384
    %vm2386 = vweird.f32 %v2378
    %vm2387 = vweird.f32 %v2380
    %vm2388 = vmor %vm2386, %vm2387
    %v2389 = vsel %vm2388, %v2380, %v2385
    %v2390 = vrsqrt.pop %v2379
    %v2391 = vmul.f32 %v2390, %v2379
    %v2392 = vmul.f32 %v2391, %v2390
    %v2393 = vmul.f32 0.5, %v2392
    %v2394 = vsub.f32 1.5, %v2393
    %v2395 = vmul.f32 %v2390, %v2394
    %vm2396 = vweird.f32 %v2379
    %vm2397 = vweird.f32 %v2390
    %vm2398 = vmor %vm2396, %vm2397
    %v2399 = vsel %vm2398, %v2390, %v2395
    %v2400 = vmul.f32 %v2366, %v2389
    %v2401 = vmul.f32 %v2367, %v2399
    %v2402 = vperm.slane %v1327, 0
    %v2403 = vmul.f32 %v2400, %v2402
    %v2404 = vmul.f32 %v2401, %v2402
    %v2405 = vperm.slane %v1328, 0
    %v2406 = vadd.f32 %v2403, %v2405
    %v2407 = vadd.f32 %v2404, %v2405
    %s2408 = scalar_lea.vmem %s6, 16
    %v2409 = vld [vmem:[%s2408] sm:$0xf]
    %v2410 = vld [vmem:[%s2408 + $0x4] sm:$0xf]
    %v2411 = vld [vmem:[%s2408 + $0x8] sm:$0xf]
    %v2412 = vld [vmem:[%s2408 + $0xc] sm:$0xf]
    %v2413 = vpack.c.bf16 %v2407, %v2406
    %v2414 = vperm.slane %v1329, 0
    %v2419 = vunpack.c.l.b16 %v2409
    %v2420 = vunpack.c.l.b16 %v2410
    %v2421 = vunpack.c.l.b16 %v2411
    %v2422 = vunpack.c.l.b16 %v2412
    %v2423 = vpack.c.b16 %v2420, %v2419
    %v2424 = vpack.c.b16 %v2422, %v2421
    %v2428 = vsel %vm122, %v2413, 0
    %2430 = vmatpush.bf16.msra.mxu0 0
    %2431 = vmatpush.bf16.msra.mxu0 0
    %2432 = vmatpush.bf16.msra.mxu0 0
    %2433 = vmatpush.bf16.msra.mxu0 0
    %2434 = vmatpush.bf16.msra.mxu0 0
    %2435 = vmatpush.bf16.msra.mxu0 0
    %2436 = vmatpush.bf16.msra.mxu0 %v2424
    %2437 = vmatpush.bf16.msra.mxu0 %v2423
    %2438 = vmatmul.bf16.gmra.mxu0 %v2428
    %v2439 = vpop.f32.mrf.mxu0
    %v2440 = vadd.f32 %v2414, %v2439
    %v2441 = vpop.f32.mrf.mxu0
    %v2442 = vadd.f32 %v2414, %v2441
    %2443 = vdwg.mxu0
    %v2444 = vmax.f32 %v2440, 0.0
    %v2445 = vmax.f32 %v2442, 0.0
    %s2446 = scalar_lea.vmem %s7, 32
    %v2447 = vld [vmem:[%s2446] sm:$0xf]
    %v2448 = vld [vmem:[%s2446 + $0x4] sm:$0xf]
    %v2449 = vld [vmem:[%s2446 + $0x8] sm:$0xf]
    %v2450 = vld [vmem:[%s2446 + $0xc] sm:$0xf]
    %v2451 = vld [vmem:[%s2446 + $0x10] sm:$0xf]
    %v2452 = vld [vmem:[%s2446 + $0x14] sm:$0xf]
    %v2453 = vld [vmem:[%s2446 + $0x18] sm:$0xf]
    %v2454 = vld [vmem:[%s2446 + $0x1c] sm:$0xf]
    %v2455 = vpack.c.bf16 %v2445, %v2444
    %v2464 = vunpack.c.l.b16 %v2447
    %v2465 = vunpack.c.l.b16 %v2448
    %v2466 = vunpack.c.l.b16 %v2449
    %v2467 = vunpack.c.l.b16 %v2450
    %v2468 = vunpack.c.l.b16 %v2451
    %v2469 = vunpack.c.l.b16 %v2452
    %v2470 = vunpack.c.l.b16 %v2453
    %v2471 = vunpack.c.l.b16 %v2454
    %v2472 = vpack.c.b16 %v2465, %v2464
    %v2473 = vpack.c.b16 %v2467, %v2466
    %v2474 = vpack.c.b16 %v2469, %v2468
    %v2475 = vpack.c.b16 %v2471, %v2470
    %v2481 = vsel %vm58, %v2455, 0
    %2483 = vmatpush.bf16.msra.mxu0 0
    %2484 = vmatpush.bf16.msra.mxu0 0
    %2485 = vmatpush.bf16.msra.mxu0 0
    %2486 = vmatpush.bf16.msra.mxu0 0
    %2487 = vmatpush.bf16.msra.mxu0 %v2475
    %2488 = vmatpush.bf16.msra.mxu0 %v2474
    %2489 = vmatpush.bf16.msra.mxu0 %v2473
    %2490 = vmatpush.bf16.msra.mxu0 %v2472
    %2491 = vmatmul.bf16.gmra.mxu0 %v2481
    %v2492 = vpop.f32.mrf.mxu0
    %v2493 = vadd.f32 0.0, %v2492
    %v2494 = vpop.f32.mrf.mxu0
    %v2495 = vadd.f32 0.0, %v2494
    %2496 = vdwg.mxu0
    %v2497 = vadd.f32 %v2406, %v2493
    %v2498 = vadd.f32 %v2407, %v2495
    %v2499 = vperm.slane %v1330, 0
    %v2500 = vadd.f32 %v2497, %v2499
    %v2501 = vadd.f32 %v2498, %v2499
    %v2502 = vsel %vm122, %v2500, 0.0
    %2503 = vadd.xlane.f32.xlu0 %v2502
    %v2504 = vpop.xlane.xlu0 %2503
    %v2505 = vsel %vm122, %v2501, 0.0
    %2506 = vadd.xlane.f32.xlu0 %v2505
    %v2507 = vpop.xlane.xlu0 %2506
    %v2508 = vmul.f32 %v2504, %v1138
    %v2509 = vmul.f32 %v2507, %v1138
    %v2510 = vsub.f32 %v2500, %v2508
    %v2511 = vsub.f32 %v2501, %v2509
    %v2512 = vmul.f32 %v2510, %v2510
    %v2513 = vmul.f32 %v2511, %v2511
    %v2514 = vsel %vm122, %v2512, 0.0
    %2515 = vadd.xlane.f32.xlu0 %v2514
    %v2516 = vpop.xlane.xlu0 %2515
    %v2517 = vsel %vm122, %v2513, 0.0
    %2518 = vadd.xlane.f32.xlu0 %v2517
    %v2519 = vpop.xlane.xlu0 %2518
    %v2520 = vmul.f32 %v2516, %v1138
    %v2521 = vmul.f32 %v2519, %v1138
    %v2522 = vadd.f32 %v2520, 1e-05
    %v2523 = vadd.f32 %v2521, 1e-05
    %v2524 = vrsqrt.pop %v2522
    %v2525 = vmul.f32 %v2524, %v2522
    %v2526 = vmul.f32 %v2525, %v2524
    %v2527 = vmul.f32 0.5, %v2526
    %v2528 = vsub.f32 1.5, %v2527
    %v2529 = vmul.f32 %v2524, %v2528
    %vm2530 = vweird.f32 %v2522
    %vm2531 = vweird.f32 %v2524
    %vm2532 = vmor %vm2530, %vm2531
    %v2533 = vsel %vm2532, %v2524, %v2529
    %v2534 = vrsqrt.pop %v2523
    %v2535 = vmul.f32 %v2534, %v2523
    %v2536 = vmul.f32 %v2535, %v2534
    %v2537 = vmul.f32 0.5, %v2536
    %v2538 = vsub.f32 1.5, %v2537
    %v2539 = vmul.f32 %v2534, %v2538
    %vm2540 = vweird.f32 %v2523
    %vm2541 = vweird.f32 %v2534
    %vm2542 = vmor %vm2540, %vm2541
    %v2543 = vsel %vm2542, %v2534, %v2539
    %v2544 = vmul.f32 %v2510, %v2533
    %v2545 = vmul.f32 %v2511, %v2543
    %v2546 = vperm.slane %v1331, 0
    %v2547 = vmul.f32 %v2544, %v2546
    %v2548 = vmul.f32 %v2545, %v2546
    %v2549 = vperm.slane %v1332, 0
    %v2550 = vadd.f32 %v2547, %v2549
    %v2551 = vadd.f32 %v2548, %v2549
    %2552 = vst.msk [vmem:[#allocation2] sm:$0xff] %vm122, %v2550
    %2553 = vst.msk [vmem:[#allocation2 + $0x8] sm:$0xff] %vm122, %v2551
    // Predicated region
    $region38: #{tpu_custom_call.1} parent=1 // pred_check
      _
    $region39: #{tpu_custom_call.1} parent=1 // pred_check_branch
      %2555 = sbr.rel (0) target = $region41
    $region40: #{tpu_custom_call.1} parent=1 // pred_region
      %2557 = vsyncadd [#allocation3], 0
      %s2558 = sshll.u32 [#allocation2], 4
      %s2559 = int_to_ptr.vmem [resolvable:$true] %s2558
      %s2560 = sshll.u32 %s9, 4
      %s2561 = int_to_ptr.hbm [resolvable:$true] %s2560
      %2566 = dma.vmem_to_hbm [thread:$0]  %s2559, 256, %s2561, [#allocation3], 128, 128, 8
    $region41: #{tpu_custom_call.1} parent=1 // pred_fallthru
      _
    // Predicated region
    $region42: #{tpu_custom_call.1} parent=1 // pred_check
      _
    $region43: #{tpu_custom_call.1} parent=1 // pred_check_branch
      %2568 = sbr.rel (0) target = $region45
    $region44: #{tpu_custom_call.1} parent=1 // pred_region
      %2570 = dma.done [#allocation3], 256
    $region45: #{tpu_custom_call.1} parent=1 // pred_fallthru
      _
    %2571 = vsyncpa [#allocation3], 1

</llo_original>
